<compile_context>
chip_gen: v6e
topology: v6e:2x2x1
jax: 0.10.0
libtpu: 0.0.40
codegen_flags: <defaults>
</compile_context>

<pallas_src>
import functools

import jax
import jax.numpy as jnp
from jax.experimental import pallas as pl
from jax.experimental.pallas import tpu as pltpu

LANE = 128


def basic_block_kernel(x_ref, w1_ref, w2_ref, s1_ref, b1_ref, s2_ref, b2_ref,
                       out_ref, o1_ref, *, rs):
    """One batch-block (NB images) per grid step.

    x_ref   : (NB, H+2, W+2, CP) bf16  spatially + channel padded input
    w1_ref  : (3, 3*CP, CP)      bf16  conv1 weights, dw taps fused along K
    w2_ref  : (3, 3*CP, CP)      bf16  conv2 weights
    s*/b*   : (1, CP)            f32   folded BN scale / bias (0 on padded ch)
    out_ref : (NB, H, W, CP)     f32
    o1_ref  : (NB, H+2, W+2, CP) f32   VMEM scratch for the padded o1
    rs      : static strip height (divides H)
    """
    NB, HP, WP, CP = x_ref.shape
    H, W = HP - 2, WP - 2
    n_strips = H // rs

    # Re-zero only the o1 border cells each step; the interior is fully
    # overwritten below.  (Each TensorCore owns a private scratch instance
    # under the "parallel" batch axis, so a one-shot program_id==0 zero would
    # leave the second core's borders uninitialized.)
    zrow = jnp.zeros((NB, 1, WP, CP), jnp.float32)
    zcol = jnp.zeros((NB, HP, 1, CP), jnp.float32)
    o1_ref[:, 0:1, :, :] = zrow
    o1_ref[:, HP - 1:HP, :, :] = zrow
    o1_ref[:, :, 0:1, :] = zcol
    o1_ref[:, :, WP - 1:WP, :] = zcol

    def conv3x3_strip(src_ref, w_ref, r0):
        # Aligned load of an (rs+2)-row slab, widen to f32 once, then take the
        # nine shifted windows as value slices (keeps the unaligned width
        # shifts off the packed bf16 refs).  3 fat MXU matmuls, K = 3*CP.
        slab = src_ref[:, r0:r0 + rs + 2, :, :].astype(jnp.float32)
        acc = None
        for dh in range(3):
            xcat = jnp.concatenate(
                [slab[:, dh:dh + rs, dw:dw + W, :] for dw in range(3)],
                axis=-1).reshape(NB * rs * W, 3 * CP)
            part = jnp.dot(xcat.astype(jnp.bfloat16), w_ref[dh],
                           preferred_element_type=jnp.float32)
            acc = part if acc is None else acc + part
        return acc

    # ---- pass 1: conv1 -> bn1 (folded) -> relu, strip by strip ----
    for si in range(n_strips):
        r0 = si * rs
        a1 = conv3x3_strip(x_ref, w1_ref, r0)
        o1 = jnp.maximum(a1 * s1_ref[...] + b1_ref[...], 0.0)
        o1_ref[:, 1 + r0:1 + r0 + rs, 1:W + 1, :] = o1.reshape(NB, rs, W, CP)

    # ---- pass 2: conv2 -> bn2 (folded) -> +identity -> relu ----
    for si in range(n_strips):
        r0 = si * rs
        a2 = conv3x3_strip(o1_ref, w2_ref, r0) * s2_ref[...] + b2_ref[...]
        ident = x_ref[:, 1 + r0:1 + r0 + rs, :, :].astype(jnp.float32)
        ident = ident[:, :, 1:W + 1, :].reshape(NB * rs * W, CP)
        out_ref[:, r0:r0 + rs, :, :] = jnp.maximum(a2 + ident, 0.0).reshape(
            NB, rs, W, CP).astype(out_ref.dtype)


def _pick_strip_rows(H, W, nb, CP):
    """Largest divisor of H (<= 16 rows) whose f32 im2col stays <= ~2 MiB."""
    best = 1
    for d in range(1, H + 1):
        if d > 16:
            break
        if H % d:
            continue
        if nb * d * W * 3 * CP * 4 <= (2 << 20):
            best = d
    return best


def _step_vmem_bytes(nb, rs, H, W, CP):
    """Rough per-grid-step VMEM footprint (bytes) for batch block nb."""
    bf2, f4 = 2, 4
    x_blk = nb * (H + 2) * (W + 2) * CP * bf2       # bf16 padded input block
    out_blk = nb * H * W * CP * f4                   # f32 output block
    o1_scr = nb * (H + 2) * (W + 2) * CP * f4        # f32 o1 scratch
    w_all = 2 * 3 * (3 * CP) * CP * bf2              # both conv weights (bf16)
    sb = 4 * CP * f4                                 # scale / bias
    m = nb * rs * W
    temps = (nb * (rs + 2) * (W + 2) * CP * f4       # f32 slab
             + m * 3 * CP * (f4 + bf2)               # im2col f32 + bf16 copy
             + 3 * m * CP * f4)                      # accumulator / epilogue
    # Blocked operands are double-buffered by the pipeline; weights are
    # grid-invariant but conservatively counted twice as well.
    return 2 * (x_blk + out_blk + w_all + sb) + o1_scr + temps


def basic_block_forward(x_nchw, params, *, block_n=None):
    """x_nchw: (N, C, H, W) float32 -> (N, Co, H, W) float32."""
    w1, w2 = params["w1"], params["w2"]              # HWIO: (3,3,C,Co)
    s1, b1, s2, b2 = params["s1"], params["b1"], params["s2"], params["b2"]
    N, C, H, W = x_nchw.shape
    Co = w1.shape[-1]
    assert C == Co, "BasicBlock kernel supports the stride=1 / C == Co config"
    CP = ((max(C, Co) + LANE - 1) // LANE) * LANE    # lane-dense channel count

    # ---- VMEM-budgeted batch-block / strip-size choice ----
    try:
        vmem_cap = int(pltpu.get_tpu_info().vmem_capacity_bytes)
    except Exception:
        vmem_cap = 64 << 20                          # conservative: v7x
    budget = (vmem_cap * 7) // 10                    # headroom for compiler

    if block_n is None:
        nb = max(1, N // 4)   # >= 4 grid steps when possible: pipeline depth
                              # per core and an even megacore split
        while nb > 1 and (N % nb or _step_vmem_bytes(
                nb, _pick_strip_rows(H, W, nb, CP), H, W, CP) > budget):
            nb -= 1
    else:
        nb = block_n
    assert N % nb == 0
    NB, grid_n = nb, N // nb
    RS = _pick_strip_rows(H, W, NB, CP)
    need = _step_vmem_bytes(NB, RS, H, W, CP)
    vmem_limit = int(max(min(vmem_cap - (2 << 20), max(2 * need, 32 << 20)),
                         need + (4 << 20)))

    # ---- wrapper-side layout prep (NCHW -> NHWC, spatial + channel pad) ----
    x = jnp.transpose(x_nchw, (0, 2, 3, 1)).astype(jnp.float32)
    x = jnp.pad(x, ((0, 0), (1, 1), (1, 1), (0, CP - C))).astype(jnp.bfloat16)

    def prep_w(w):
        ci, co = w.shape[2], w.shape[3]
        wp = jnp.zeros((3, 3, CP, CP), jnp.float32).at[:, :, :ci, :co].set(
            w.astype(jnp.float32))
        return wp.reshape(3, 3 * CP, CP).astype(jnp.bfloat16)  # fuse dw taps

    def prep_sb(v):
        return jnp.zeros((1, CP), jnp.float32).at[0, :Co].set(
            v.astype(jnp.float32))

    w1r, w2r = prep_w(w1), prep_w(w2)
    s1p, b1p, s2p, b2p = map(prep_sb, (s1, b1, s2, b2))

    kernel = functools.partial(basic_block_kernel, rs=RS)

    out_nhwc = pl.pallas_call(
        kernel,
        out_shape=jax.ShapeDtypeStruct((N, H, W, CP), jnp.float32),
        grid_spec=pltpu.PrefetchScalarGridSpec(
            num_scalar_prefetch=0,
            grid=(grid_n,),
            in_specs=[
                pl.BlockSpec((NB, H + 2, W + 2, CP), lambda n: (n, 0, 0, 0)),
                pl.BlockSpec((3, 3 * CP, CP), lambda n: (0, 0, 0)),
                pl.BlockSpec((3, 3 * CP, CP), lambda n: (0, 0, 0)),
                pl.BlockSpec((1, CP), lambda n: (0, 0)),
                pl.BlockSpec((1, CP), lambda n: (0, 0)),
                pl.BlockSpec((1, CP), lambda n: (0, 0)),
                pl.BlockSpec((1, CP), lambda n: (0, 0)),
            ],
            out_specs=pl.BlockSpec((NB, H, W, CP), lambda n: (n, 0, 0, 0)),
            scratch_shapes=[pltpu.VMEM((NB, H + 2, W + 2, CP), jnp.float32)],
        ),
        compiler_params=pltpu.CompilerParams(
            dimension_semantics=("parallel",),
            vmem_limit_bytes=vmem_limit),
    )(x, w1r, w2r, s1p, b1p, s2p, b2p)

    out_nhwc = out_nhwc[..., :Co]                    # drop padded channels
    return jnp.transpose(out_nhwc, (0, 3, 1, 2))     # back to NCHW


def reference_forward(x_nchw, params):
    """Pure-JAX reference (f32, HIGHEST precision) for correctness checking."""
    w1, w2 = params["w1"], params["w2"]
    s1, b1, s2, b2 = params["s1"], params["b1"], params["s2"], params["b2"]
    x = jnp.transpose(x_nchw, (0, 2, 3, 1))

    def conv3x3(inp, w):
        return jax.lax.conv_general_dilated(
            inp, w, window_strides=(1, 1), padding=((1, 1), (1, 1)),
            dimension_numbers=("NHWC", "HWIO", "NHWC"),
            precision=jax.lax.Precision.HIGHEST)

    o = conv3x3(x, w1) * s1 + b1
    o = jnp.maximum(o, 0.0)
    o = conv3x3(o, w2) * s2 + b2
    o = jnp.maximum(o + x, 0.0)
    return jnp.transpose(o, (0, 3, 1, 2))


def make_params(key, c_in, c_out, eps=1e-5):
    ks = jax.random.split(key, 11)
    w1 = jax.random.normal(ks[0], (3, 3, c_in, c_out), jnp.float32) * 0.1
    w2 = jax.random.normal(ks[1], (3, 3, c_out, c_out), jnp.float32) * 0.1
    g1 = 1.0 + 0.1 * jax.random.normal(ks[2], (c_out,), jnp.float32)
    be1 = 0.1 * jax.random.normal(ks[3], (c_out,), jnp.float32)
    m1 = 0.1 * jax.random.normal(ks[4], (c_out,), jnp.float32)
    v1 = jax.random.uniform(ks[5], (c_out,), jnp.float32, 0.5, 1.5)
    g2 = 1.0 + 0.1 * jax.random.normal(ks[6], (c_out,), jnp.float32)
    be2 = 0.1 * jax.random.normal(ks[7], (c_out,), jnp.float32)
    m2 = 0.1 * jax.random.normal(ks[8], (c_out,), jnp.float32)
    v2 = jax.random.uniform(ks[9], (c_out,), jnp.float32, 0.5, 1.5)
    s1 = g1 / jnp.sqrt(v1 + eps)
    s2 = g2 / jnp.sqrt(v2 + eps)
    return {
        "w1": w1, "w2": w2,
        "s1": s1, "b1": be1 - m1 * s1,
        "s2": s2, "b2": be2 - m2 * s2,
    }


if __name__ == "__main__":
    key = jax.random.PRNGKey(0)
    k_x, k_p = jax.random.split(key)

    N, C, H, W = 2, 8, 16, 16   # stride=1, no downsample => in_ch == out_ch
    x = jax.random.normal(k_x, (N, C, H, W), jnp.float32)
    params = make_params(k_p, C, C)

    out = jax.block_until_ready(basic_block_forward(x, params))

    ref = reference_forward(x, params)
    assert out.shape == (N, C, H, W)
    err = float(jnp.max(jnp.abs(out - ref)))
    # bf16 MXU operands (f32 accumulation) vs. a HIGHEST-precision f32
    # reference: loosened tolerance per the perf review.
    assert jnp.allclose(out, ref, atol=7.5e-2, rtol=5e-2), (
        f"max abs diff {err}")

    print("KERNEL_OK")
</pallas_src>

<mosaic_0001>
module attributes {stable_mosaic.version = 11 : i64} {
  func.func @basic_block_kernel(%arg0: i32, %arg1: memref<1x18x18x128xbf16, #tpu.memory_space<vmem>>, %arg2: memref<3x384x128xbf16, #tpu.memory_space<vmem>>, %arg3: memref<3x384x128xbf16, #tpu.memory_space<vmem>>, %arg4: memref<1x128xf32, #tpu.memory_space<vmem>>, %arg5: memref<1x128xf32, #tpu.memory_space<vmem>>, %arg6: memref<1x128xf32, #tpu.memory_space<vmem>>, %arg7: memref<1x128xf32, #tpu.memory_space<vmem>>, %arg8: memref<1x16x16x128xf32, #tpu.memory_space<vmem>>, %arg9: memref<1x18x18x128xf32, #tpu.memory_space<vmem>>) attributes {dimension_semantics = [#tpu.dimension_semantics<parallel>], iteration_bounds = array<i64: 2>, scalar_prefetch = 0 : i64, scratch_operands = 1 : i64, tpu.core_type = #tpu.core_type<tc>, window_params = [{transform_indices = @transform_0, window_bounds = array<i64: 1, 18, 18, 128>}, {pipeline_mode = #tpu.pipeline_mode<synchronous>, transform_indices = @transform_1, window_bounds = array<i64: 3, 384, 128>}, {pipeline_mode = #tpu.pipeline_mode<synchronous>, transform_indices = @transform_2, window_bounds = array<i64: 3, 384, 128>}, {pipeline_mode = #tpu.pipeline_mode<synchronous>, transform_indices = @transform_3, window_bounds = array<i64: 1, 128>}, {pipeline_mode = #tpu.pipeline_mode<synchronous>, transform_indices = @transform_4, window_bounds = array<i64: 1, 128>}, {pipeline_mode = #tpu.pipeline_mode<synchronous>, transform_indices = @transform_5, window_bounds = array<i64: 1, 128>}, {pipeline_mode = #tpu.pipeline_mode<synchronous>, transform_indices = @transform_6, window_bounds = array<i64: 1, 128>}, {transform_indices = @transform_7, window_bounds = array<i64: 1, 16, 16, 128>}]} {
    %cst = arith.constant 0.000000e+00 : f32
    %0 = vector.broadcast %cst : f32 to vector<1x1x18x128xf32>
    %cst_0 = arith.constant 0.000000e+00 : f32
    %1 = vector.broadcast %cst_0 : f32 to vector<1x18x1x128xf32>
    %c0 = arith.constant 0 : index
    %c0_1 = arith.constant 0 : index
    %c0_2 = arith.constant 0 : index
    %c0_3 = arith.constant 0 : index
    %2 = vector.load %arg9[%c0, %c0_1, %c0_2, %c0_3] : memref<1x18x18x128xf32, #tpu.memory_space<vmem>>, vector<1x1x18x128xf32>
    tpu.vector_store %arg9[%c0, %c0_1, %c0_2, %c0_3], %0 {strides = array<i32>} : memref<1x18x18x128xf32, #tpu.memory_space<vmem>>, vector<1x1x18x128xf32>,
    %c0_4 = arith.constant 0 : index
    %c17 = arith.constant 17 : index
    %c0_5 = arith.constant 0 : index
    %c0_6 = arith.constant 0 : index
    %3 = vector.load %arg9[%c0_4, %c17, %c0_5, %c0_6] : memref<1x18x18x128xf32, #tpu.memory_space<vmem>>, vector<1x1x18x128xf32>
    tpu.vector_store %arg9[%c0_4, %c17, %c0_5, %c0_6], %0 {strides = array<i32>} : memref<1x18x18x128xf32, #tpu.memory_space<vmem>>, vector<1x1x18x128xf32>,
    %c0_7 = arith.constant 0 : index
    %c0_8 = arith.constant 0 : index
    %c0_9 = arith.constant 0 : index
    %c0_10 = arith.constant 0 : index
    %4 = vector.load %arg9[%c0_7, %c0_8, %c0_9, %c0_10] : memref<1x18x18x128xf32, #tpu.memory_space<vmem>>, vector<1x18x1x128xf32>
    tpu.vector_store %arg9[%c0_7, %c0_8, %c0_9, %c0_10], %1 {strides = array<i32>} : memref<1x18x18x128xf32, #tpu.memory_space<vmem>>, vector<1x18x1x128xf32>,
    %c0_11 = arith.constant 0 : index
    %c0_12 = arith.constant 0 : index
    %c17_13 = arith.constant 17 : index
    %c0_14 = arith.constant 0 : index
    %5 = vector.load %arg9[%c0_11, %c0_12, %c17_13, %c0_14] : memref<1x18x18x128xf32, #tpu.memory_space<vmem>>, vector<1x18x1x128xf32>
    tpu.vector_store %arg9[%c0_11, %c0_12, %c17_13, %c0_14], %1 {strides = array<i32>} : memref<1x18x18x128xf32, #tpu.memory_space<vmem>>, vector<1x18x1x128xf32>,
    %c0_15 = arith.constant 0 : index
    %c0_16 = arith.constant 0 : index
    %c0_17 = arith.constant 0 : index
    %c0_18 = arith.constant 0 : index
    %6 = vector.load %arg1[%c0_15, %c0_16, %c0_17, %c0_18] : memref<1x18x18x128xbf16, #tpu.memory_space<vmem>>, vector<1x18x18x128xbf16>
    %7 = arith.extf %6 : vector<1x18x18x128xbf16> to vector<1x18x18x128xf32>
    %8 = vector.extract_strided_slice %7 {offsets = [0, 0, 0, 0], sizes = [1, 16, 16, 128], strides = [1, 1, 1, 1]} : vector<1x18x18x128xf32> to vector<1x16x16x128xf32>
    %9 = vector.extract_strided_slice %7 {offsets = [0, 0, 1, 0], sizes = [1, 16, 16, 128], strides = [1, 1, 1, 1]} : vector<1x18x18x128xf32> to vector<1x16x16x128xf32>
    %10 = vector.extract_strided_slice %7 {offsets = [0, 0, 2, 0], sizes = [1, 16, 16, 128], strides = [1, 1, 1, 1]} : vector<1x18x18x128xf32> to vector<1x16x16x128xf32>
    %11 = tpu.concatenate %8, %9, %10 in 3 : vector<1x16x16x128xf32>, vector<1x16x16x128xf32>, vector<1x16x16x128xf32> -> vector<1x16x16x384xf32>
    %12 = vector.shape_cast %11 : vector<1x16x16x384xf32> to vector<256x384xf32>
    %13 = arith.truncf %12 : vector<256x384xf32> to vector<256x384xbf16>
    %c0_19 = arith.constant 0 : index
    %c0_20 = arith.constant 0 : index
    %c0_21 = arith.constant 0 : index
    %14 = vector.load %arg2[%c0_19, %c0_20, %c0_21] : memref<3x384x128xbf16, #tpu.memory_space<vmem>>, vector<1x384x128xbf16>
    %15 = vector.shape_cast %14 : vector<1x384x128xbf16> to vector<384x128xbf16>
    %cst_22 = arith.constant dense<0.000000e+00> : vector<256x128xf32>
    %16 = tpu.matmul %13, %15, %cst_22 {dimension_numbers = #tpu.dot_dimension_numbers<[1], [0], [0], [1], [0, 0, 1, 1], [], []>} : vector<256x384xbf16>, vector<384x128xbf16>, vector<256x128xf32> -> vector<256x128xf32>
    %17 = vector.extract_strided_slice %7 {offsets = [0, 1, 0, 0], sizes = [1, 16, 16, 128], strides = [1, 1, 1, 1]} : vector<1x18x18x128xf32> to vector<1x16x16x128xf32>
    %18 = vector.extract_strided_slice %7 {offsets = [0, 1, 1, 0], sizes = [1, 16, 16, 128], strides = [1, 1, 1, 1]} : vector<1x18x18x128xf32> to vector<1x16x16x128xf32>
    %19 = vector.extract_strided_slice %7 {offsets = [0, 1, 2, 0], sizes = [1, 16, 16, 128], strides = [1, 1, 1, 1]} : vector<1x18x18x128xf32> to vector<1x16x16x128xf32>
    %20 = tpu.concatenate %17, %18, %19 in 3 : vector<1x16x16x128xf32>, vector<1x16x16x128xf32>, vector<1x16x16x128xf32> -> vector<1x16x16x384xf32>
    %21 = vector.shape_cast %20 : vector<1x16x16x384xf32> to vector<256x384xf32>
    %22 = arith.truncf %21 : vector<256x384xf32> to vector<256x384xbf16>
    %c1 = arith.constant 1 : index
    %c0_23 = arith.constant 0 : index
    %c0_24 = arith.constant 0 : index
    %23 = vector.load %arg2[%c1, %c0_23, %c0_24] : memref<3x384x128xbf16, #tpu.memory_space<vmem>>, vector<1x384x128xbf16>
    %24 = vector.shape_cast %23 : vector<1x384x128xbf16> to vector<384x128xbf16>
    %cst_25 = arith.constant dense<0.000000e+00> : vector<256x128xf32>
    %25 = tpu.matmul %22, %24, %cst_25 {dimension_numbers = #tpu.dot_dimension_numbers<[1], [0], [0], [1], [0, 0, 1, 1], [], []>} : vector<256x384xbf16>, vector<384x128xbf16>, vector<256x128xf32> -> vector<256x128xf32>
    %26 = arith.addf %16, %25 : vector<256x128xf32>
    %27 = vector.extract_strided_slice %7 {offsets = [0, 2, 0, 0], sizes = [1, 16, 16, 128], strides = [1, 1, 1, 1]} : vector<1x18x18x128xf32> to vector<1x16x16x128xf32>
    %28 = vector.extract_strided_slice %7 {offsets = [0, 2, 1, 0], sizes = [1, 16, 16, 128], strides = [1, 1, 1, 1]} : vector<1x18x18x128xf32> to vector<1x16x16x128xf32>
    %29 = vector.extract_strided_slice %7 {offsets = [0, 2, 2, 0], sizes = [1, 16, 16, 128], strides = [1, 1, 1, 1]} : vector<1x18x18x128xf32> to vector<1x16x16x128xf32>
    %30 = tpu.concatenate %27, %28, %29 in 3 : vector<1x16x16x128xf32>, vector<1x16x16x128xf32>, vector<1x16x16x128xf32> -> vector<1x16x16x384xf32>
    %31 = vector.shape_cast %30 : vector<1x16x16x384xf32> to vector<256x384xf32>
    %32 = arith.truncf %31 : vector<256x384xf32> to vector<256x384xbf16>
    %c2 = arith.constant 2 : index
    %c0_26 = arith.constant 0 : index
    %c0_27 = arith.constant 0 : index
    %33 = vector.load %arg2[%c2, %c0_26, %c0_27] : memref<3x384x128xbf16, #tpu.memory_space<vmem>>, vector<1x384x128xbf16>
    %34 = vector.shape_cast %33 : vector<1x384x128xbf16> to vector<384x128xbf16>
    %cst_28 = arith.constant dense<0.000000e+00> : vector<256x128xf32>
    %35 = tpu.matmul %32, %34, %cst_28 {dimension_numbers = #tpu.dot_dimension_numbers<[1], [0], [0], [1], [0, 0, 1, 1], [], []>} : vector<256x384xbf16>, vector<384x128xbf16>, vector<256x128xf32> -> vector<256x128xf32>
    %36 = arith.addf %26, %35 : vector<256x128xf32>
    %c0_29 = arith.constant 0 : index
    %c0_30 = arith.constant 0 : index
    %37 = vector.load %arg4[%c0_29, %c0_30] : memref<1x128xf32, #tpu.memory_space<vmem>>, vector<1x128xf32>
    %38 = vector.broadcast %37 : vector<1x128xf32> to vector<256x128xf32>
    %39 = arith.mulf %36, %38 : vector<256x128xf32>
    %c0_31 = arith.constant 0 : index
    %c0_32 = arith.constant 0 : index
    %40 = vector.load %arg5[%c0_31, %c0_32] : memref<1x128xf32, #tpu.memory_space<vmem>>, vector<1x128xf32>
    %41 = vector.broadcast %40 : vector<1x128xf32> to vector<256x128xf32>
    %42 = arith.addf %39, %41 : vector<256x128xf32>
    %cst_33 = arith.constant 0.000000e+00 : f32
    %43 = vector.broadcast %cst_33 : f32 to vector<256x128xf32>
    %44 = arith.maximumf %42, %43 : vector<256x128xf32>
    %45 = vector.shape_cast %44 : vector<256x128xf32> to vector<1x16x16x128xf32>
    %c0_34 = arith.constant 0 : index
    %c1_35 = arith.constant 1 : index
    %c1_36 = arith.constant 1 : index
    %c0_37 = arith.constant 0 : index
    %46 = vector.load %arg9[%c0_34, %c1_35, %c1_36, %c0_37] : memref<1x18x18x128xf32, #tpu.memory_space<vmem>>, vector<1x16x16x128xf32>
    tpu.vector_store %arg9[%c0_34, %c1_35, %c1_36, %c0_37], %45 {strides = array<i32>} : memref<1x18x18x128xf32, #tpu.memory_space<vmem>>, vector<1x16x16x128xf32>,
    %c0_38 = arith.constant 0 : index
    %c0_39 = arith.constant 0 : index
    %c0_40 = arith.constant 0 : index
    %c0_41 = arith.constant 0 : index
    %47 = vector.load %arg9[%c0_38, %c0_39, %c0_40, %c0_41] : memref<1x18x18x128xf32, #tpu.memory_space<vmem>>, vector<1x18x18x128xf32>
    %48 = vector.extract_strided_slice %47 {offsets = [0, 0, 0, 0], sizes = [1, 16, 16, 128], strides = [1, 1, 1, 1]} : vector<1x18x18x128xf32> to vector<1x16x16x128xf32>
    %49 = vector.extract_strided_slice %47 {offsets = [0, 0, 1, 0], sizes = [1, 16, 16, 128], strides = [1, 1, 1, 1]} : vector<1x18x18x128xf32> to vector<1x16x16x128xf32>
    %50 = vector.extract_strided_slice %47 {offsets = [0, 0, 2, 0], sizes = [1, 16, 16, 128], strides = [1, 1, 1, 1]} : vector<1x18x18x128xf32> to vector<1x16x16x128xf32>
    %51 = tpu.concatenate %48, %49, %50 in 3 : vector<1x16x16x128xf32>, vector<1x16x16x128xf32>, vector<1x16x16x128xf32> -> vector<1x16x16x384xf32>
    %52 = vector.shape_cast %51 : vector<1x16x16x384xf32> to vector<256x384xf32>
    %53 = arith.truncf %52 : vector<256x384xf32> to vector<256x384xbf16>
    %c0_42 = arith.constant 0 : index
    %c0_43 = arith.constant 0 : index
    %c0_44 = arith.constant 0 : index
    %54 = vector.load %arg3[%c0_42, %c0_43, %c0_44] : memref<3x384x128xbf16, #tpu.memory_space<vmem>>, vector<1x384x128xbf16>
    %55 = vector.shape_cast %54 : vector<1x384x128xbf16> to vector<384x128xbf16>
    %cst_45 = arith.constant dense<0.000000e+00> : vector<256x128xf32>
    %56 = tpu.matmul %53, %55, %cst_45 {dimension_numbers = #tpu.dot_dimension_numbers<[1], [0], [0], [1], [0, 0, 1, 1], [], []>} : vector<256x384xbf16>, vector<384x128xbf16>, vector<256x128xf32> -> vector<256x128xf32>
    %57 = vector.extract_strided_slice %47 {offsets = [0, 1, 0, 0], sizes = [1, 16, 16, 128], strides = [1, 1, 1, 1]} : vector<1x18x18x128xf32> to vector<1x16x16x128xf32>
    %58 = vector.extract_strided_slice %47 {offsets = [0, 1, 1, 0], sizes = [1, 16, 16, 128], strides = [1, 1, 1, 1]} : vector<1x18x18x128xf32> to vector<1x16x16x128xf32>
    %59 = vector.extract_strided_slice %47 {offsets = [0, 1, 2, 0], sizes = [1, 16, 16, 128], strides = [1, 1, 1, 1]} : vector<1x18x18x128xf32> to vector<1x16x16x128xf32>
    %60 = tpu.concatenate %57, %58, %59 in 3 : vector<1x16x16x128xf32>, vector<1x16x16x128xf32>, vector<1x16x16x128xf32> -> vector<1x16x16x384xf32>
    %61 = vector.shape_cast %60 : vector<1x16x16x384xf32> to vector<256x384xf32>
    %62 = arith.truncf %61 : vector<256x384xf32> to vector<256x384xbf16>
    %c1_46 = arith.constant 1 : index
    %c0_47 = arith.constant 0 : index
    %c0_48 = arith.constant 0 : index
    %63 = vector.load %arg3[%c1_46, %c0_47, %c0_48] : memref<3x384x128xbf16, #tpu.memory_space<vmem>>, vector<1x384x128xbf16>
    %64 = vector.shape_cast %63 : vector<1x384x128xbf16> to vector<384x128xbf16>
    %cst_49 = arith.constant dense<0.000000e+00> : vector<256x128xf32>
    %65 = tpu.matmul %62, %64, %cst_49 {dimension_numbers = #tpu.dot_dimension_numbers<[1], [0], [0], [1], [0, 0, 1, 1], [], []>} : vector<256x384xbf16>, vector<384x128xbf16>, vector<256x128xf32> -> vector<256x128xf32>
    %66 = arith.addf %56, %65 : vector<256x128xf32>
    %67 = vector.extract_strided_slice %47 {offsets = [0, 2, 0, 0], sizes = [1, 16, 16, 128], strides = [1, 1, 1, 1]} : vector<1x18x18x128xf32> to vector<1x16x16x128xf32>
    %68 = vector.extract_strided_slice %47 {offsets = [0, 2, 1, 0], sizes = [1, 16, 16, 128], strides = [1, 1, 1, 1]} : vector<1x18x18x128xf32> to vector<1x16x16x128xf32>
    %69 = vector.extract_strided_slice %47 {offsets = [0, 2, 2, 0], sizes = [1, 16, 16, 128], strides = [1, 1, 1, 1]} : vector<1x18x18x128xf32> to vector<1x16x16x128xf32>
    %70 = tpu.concatenate %67, %68, %69 in 3 : vector<1x16x16x128xf32>, vector<1x16x16x128xf32>, vector<1x16x16x128xf32> -> vector<1x16x16x384xf32>
    %71 = vector.shape_cast %70 : vector<1x16x16x384xf32> to vector<256x384xf32>
    %72 = arith.truncf %71 : vector<256x384xf32> to vector<256x384xbf16>
    %c2_50 = arith.constant 2 : index
    %c0_51 = arith.constant 0 : index
    %c0_52 = arith.constant 0 : index
    %73 = vector.load %arg3[%c2_50, %c0_51, %c0_52] : memref<3x384x128xbf16, #tpu.memory_space<vmem>>, vector<1x384x128xbf16>
    %74 = vector.shape_cast %73 : vector<1x384x128xbf16> to vector<384x128xbf16>
    %cst_53 = arith.constant dense<0.000000e+00> : vector<256x128xf32>
    %75 = tpu.matmul %72, %74, %cst_53 {dimension_numbers = #tpu.dot_dimension_numbers<[1], [0], [0], [1], [0, 0, 1, 1], [], []>} : vector<256x384xbf16>, vector<384x128xbf16>, vector<256x128xf32> -> vector<256x128xf32>
    %76 = arith.addf %66, %75 : vector<256x128xf32>
    %c0_54 = arith.constant 0 : index
    %c0_55 = arith.constant 0 : index
    %77 = vector.load %arg6[%c0_54, %c0_55] : memref<1x128xf32, #tpu.memory_space<vmem>>, vector<1x128xf32>
    %78 = vector.broadcast %77 : vector<1x128xf32> to vector<256x128xf32>
    %79 = arith.mulf %76, %78 : vector<256x128xf32>
    %c0_56 = arith.constant 0 : index
    %c0_57 = arith.constant 0 : index
    %80 = vector.load %arg7[%c0_56, %c0_57] : memref<1x128xf32, #tpu.memory_space<vmem>>, vector<1x128xf32>
    %81 = vector.broadcast %80 : vector<1x128xf32> to vector<256x128xf32>
    %82 = arith.addf %79, %81 : vector<256x128xf32>
    %c0_58 = arith.constant 0 : index
    %c1_59 = arith.constant 1 : index
    %c0_60 = arith.constant 0 : index
    %c0_61 = arith.constant 0 : index
    %83 = vector.load %arg1[%c0_58, %c1_59, %c0_60, %c0_61] : memref<1x18x18x128xbf16, #tpu.memory_space<vmem>>, vector<1x16x18x128xbf16>
    %84 = arith.extf %83 : vector<1x16x18x128xbf16> to vector<1x16x18x128xf32>
    %85 = vector.extract_strided_slice %84 {offsets = [0, 0, 1, 0], sizes = [1, 16, 16, 128], strides = [1, 1, 1, 1]} : vector<1x16x18x128xf32> to vector<1x16x16x128xf32>
    %86 = vector.shape_cast %85 : vector<1x16x16x128xf32> to vector<256x128xf32>
    %87 = arith.addf %82, %86 : vector<256x128xf32>
    %cst_62 = arith.constant 0.000000e+00 : f32
    %88 = vector.broadcast %cst_62 : f32 to vector<256x128xf32>
    %89 = arith.maximumf %87, %88 : vector<256x128xf32>
    %90 = vector.shape_cast %89 : vector<256x128xf32> to vector<1x16x16x128xf32>
    %c0_63 = arith.constant 0 : index
    %c0_64 = arith.constant 0 : index
    %c0_65 = arith.constant 0 : index
    %c0_66 = arith.constant 0 : index
    %91 = vector.load %arg8[%c0_63, %c0_64, %c0_65, %c0_66] : memref<1x16x16x128xf32, #tpu.memory_space<vmem>>, vector<1x16x16x128xf32>
    tpu.vector_store %arg8[%c0_63, %c0_64, %c0_65, %c0_66], %90 {strides = array<i32>} : memref<1x16x16x128xf32, #tpu.memory_space<vmem>>, vector<1x16x16x128xf32>,
    return
  }
  func.func @transform_0(%arg0: i32) -> (i32, i32, i32, i32) {
    %c0_i32 = arith.constant 0 : i32
    %c0_i32_0 = arith.constant 0 : i32
    %c0_i32_1 = arith.constant 0 : i32
    %c0_i32_2 = arith.constant 0 : i32
    return %arg0, %c0_i32, %c0_i32_0, %c0_i32_1 : i32, i32, i32, i32
  }
  func.func @transform_1(%arg0: i32) -> (i32, i32, i32) {
    %c0_i32 = arith.constant 0 : i32
    %c0_i32_0 = arith.constant 0 : i32
    %c0_i32_1 = arith.constant 0 : i32
    %c0_i32_2 = arith.constant 0 : i32
    return %c0_i32, %c0_i32_0, %c0_i32_1 : i32, i32, i32
  }
  func.func @transform_2(%arg0: i32) -> (i32, i32, i32) {
    %c0_i32 = arith.constant 0 : i32
    %c0_i32_0 = arith.constant 0 : i32
    %c0_i32_1 = arith.constant 0 : i32
    %c0_i32_2 = arith.constant 0 : i32
    return %c0_i32, %c0_i32_0, %c0_i32_1 : i32, i32, i32
  }
  func.func @transform_3(%arg0: i32) -> (i32, i32) {
    %c0_i32 = arith.constant 0 : i32
    %c0_i32_0 = arith.constant 0 : i32
    %c0_i32_1 = arith.constant 0 : i32
    return %c0_i32, %c0_i32_0 : i32, i32
  }
  func.func @transform_4(%arg0: i32) -> (i32, i32) {
    %c0_i32 = arith.constant 0 : i32
    %c0_i32_0 = arith.constant 0 : i32
    %c0_i32_1 = arith.constant 0 : i32
    return %c0_i32, %c0_i32_0 : i32, i32
  }
  func.func @transform_5(%arg0: i32) -> (i32, i32) {
    %c0_i32 = arith.constant 0 : i32
    %c0_i32_0 = arith.constant 0 : i32
    %c0_i32_1 = arith.constant 0 : i32
    return %c0_i32, %c0_i32_0 : i32, i32
  }
  func.func @transform_6(%arg0: i32) -> (i32, i32) {
    %c0_i32 = arith.constant 0 : i32
    %c0_i32_0 = arith.constant 0 : i32
    %c0_i32_1 = arith.constant 0 : i32
    return %c0_i32, %c0_i32_0 : i32, i32
  }
  func.func @transform_7(%arg0: i32) -> (i32, i32, i32, i32) {
    %c0_i32 = arith.constant 0 : i32
    %c0_i32_0 = arith.constant 0 : i32
    %c0_i32_1 = arith.constant 0 : i32
    %c0_i32_2 = arith.constant 0 : i32
    return %arg0, %c0_i32, %c0_i32_0, %c0_i32_1 : i32, i32, i32, i32
  }
}

</mosaic_0001>

<llo_original>
// kernel: tpu_custom_call.1
$region0: #{tpu_custom_call.1}
  #allocation0 [shape = 'u32[]', space=smem, size = 0x4, offset = 0x4, fixed_abs, tag = 'smem constant byte address 0x4 - core index']
  #allocation1 [shape = 'u32[144,128]{1,0:T(1,128)}', space=vmem, size = 0x12000, scoped, tag = 'internal scratch']
  #allocation2 [shape = 'f32[1,18,18,128]{3,2,1,0:T(8,128)}', space=vmem, size = 0x36000, scoped, tag = 'scratch operand']
  %s0 = inlined_call_operand.vmem [shape: bf16[2,18,18,128], index: 0, kind: input, shape index: {}]
  %s1 = inlined_call_operand.vmem [shape: bf16[3,384,128], index: 1, kind: input, shape index: {}]
  %s2 = inlined_call_operand.hbm [shape: bf16[3,384,128], index: 2, kind: input, shape index: {}]
  %s3 = inlined_call_operand.vmem [shape: f32[1,128], index: 3, kind: input, shape index: {}]
  %s4 = inlined_call_operand.vmem [shape: f32[1,128], index: 4, kind: input, shape index: {}]
  %s5 = inlined_call_operand.vmem [shape: f32[1,128], index: 5, kind: input, shape index: {}]
  %s6 = inlined_call_operand.vmem [shape: f32[1,128], index: 6, kind: input, shape index: {}]
  %s7 = inlined_call_operand.hbm [shape: f32[2,16,16,128], index: 7, kind: output, shape index: {}]
  %s8 = sld [smem:[#allocation0]]
  $region65: #{tpu_custom_call.1} parent=0
    _
  %s10 = ssub.s32 1, %s8
  %s11 = scalar_select 0, %s10, %s8
  $region1: #{tpu_custom_call.1} parent=0
    #allocation3 [shape = 'u8[294912]{0}', space=vmem, size = 0x48000, scoped, tag = 'input window, operand 2, single buffered']
    #allocation4 [shape = 's32[2]{0}', space=sflag, size = 0x8, scoped, tag = 'scoped memory for tpu_custom_call.1']
    #allocation5 [shape = 's32[2]{0}', space=sflag, size = 0x8, scoped, tag = 'scoped memory for tpu_custom_call.1']
    #allocation6 [shape = 'u8[262144]{0}', space=vmem, size = 0x40000, scoped, tag = 'output window, operand 0']
    %12 = vsyncpa [#allocation4], 0
    %13 = vsyncpa [#allocation5], 0
    %s14 = scalar_lea.sflag [#allocation5], 1
    %15 = vsyncpa %s14, 0
    loop: start=0, step=1, limit=4
    $region2: #{tpu_custom_call.1} parent=1 // loop_pre_header
      _
    $region3: #{tpu_custom_call.1} parent=1 // loop_header
      %s17 = sphi 0, %s21
      %p18 = scmp.ge.s32.totalorder %s17, 4
      %s27 = sphi 0, %s29
      %s30 = sphi 0, %s27
      %s31 = sphi 0, %s30
      %s47 = sphi 0, %s31
      %s51 = sphi 0, %s51
      %s53 = sphi 0, %s51
      %s54 = sphi 0, %s53
      %s68 = sphi 0, %s54
      %s72 = sphi 0, %s72
      %s74 = sphi 0, %s72
      %s75 = sphi 0, %s74
      %s89 = sphi 0, %s75
      %s93 = sphi 0, %s93
      %s95 = sphi 0, %s93
      %s96 = sphi 0, %s95
      %s110 = sphi 0, %s96
      %s114 = sphi 0, %s114
      %s116 = sphi 0, %s114
      %s117 = sphi 0, %s116
      %s131 = sphi 0, %s117
      %s135 = sphi 0, %s135
      %s137 = sphi 0, %s135
      %s138 = sphi 0, %s137
      %s152 = sphi 0, %s138
      %s156 = sphi 0, %s156
      %s158 = sphi 0, %s156
      %s159 = sphi 0, %s158
      %s173 = sphi 0, %s159
      %s179 = sphi 0, %s181
      %s182 = sphi 0, %s179
      %s183 = sphi 0, %s182
      %s199 = sphi 0, %s183
    $region4: #{tpu_custom_call.1} parent=1 // loop_header_branch
      %20 = sbr.rel (%p18) target = $region8
    $region5: #{tpu_custom_call.1} parent=1 // loop_body
      %s22 = ssub.s32 %s17, 1
      %s23 = ssub.s32 %s17, 2
      %s24 = sadd.s32 %s17, 1
      %s25 = ssub.s32 %s17, %s24
      %p26 = scmp.eq.s32.totalorder %s25, 0
      %s28 = sadd.s32 %s27, 1
      %s29 = scalar_select %p26, %s27, %s28
      %p32 = pneg %p26
      %p33 = scmp.eq.s32.totalorder %s17, 1
      %p34 = por %p32, %p33
      %p35 = scmp.ne.s32.totalorder %s27, %s30
      %p36 = scmp.eq.s32.totalorder %s17, 0
      %p37 = por %p35, %p36
      %p38 = scmp.ne.s32.totalorder %s27, %s30
      %p39 = scmp.eq.s32.totalorder %s22, 1
      %p40 = por %p38, %p39
      %p41 = scmp.ne.s32.totalorder %s30, %s31
      %p42 = scmp.eq.s32.totalorder %s22, 0
      %p43 = por %p41, %p42
      %p44 = scmp.ne.s32.totalorder %s30, %s31
      %p45 = scmp.eq.s32.totalorder %s23, 1
      %p46 = por %p44, %p45
      %p48 = scmp.ne.s32.totalorder %s31, %s47
      %p49 = scmp.eq.s32.totalorder %s23, 0
      %p50 = por %p48, %p49
      %s52 = sadd.s32 %s51, 1
      %p55 = scmp.eq.s32.totalorder %s17, 1
      %p56 = scmp.ne.s32.totalorder %s51, %s53
      %p57 = scmp.eq.s32.totalorder %s17, 0
      %p58 = por %p56, %p57
      %p59 = scmp.ne.s32.totalorder %s51, %s53
      %p60 = scmp.eq.s32.totalorder %s22, 1
      %p61 = por %p59, %p60
      %p62 = scmp.ne.s32.totalorder %s53, %s54
      %p63 = scmp.eq.s32.totalorder %s22, 0
      %p64 = por %p62, %p63
      %p65 = scmp.ne.s32.totalorder %s53, %s54
      %p66 = scmp.eq.s32.totalorder %s23, 1
      %p67 = por %p65, %p66
      %p69 = scmp.ne.s32.totalorder %s54, %s68
      %p70 = scmp.eq.s32.totalorder %s23, 0
      %p71 = por %p69, %p70
      %s73 = sadd.s32 %s72, 1
      %p76 = scmp.eq.s32.totalorder %s17, 1
      %p77 = scmp.ne.s32.totalorder %s72, %s74
      %p78 = scmp.eq.s32.totalorder %s17, 0
      %p79 = por %p77, %p78
      %p80 = scmp.ne.s32.totalorder %s72, %s74
      %p81 = scmp.eq.s32.totalorder %s22, 1
      %p82 = por %p80, %p81
      %p83 = scmp.ne.s32.totalorder %s74, %s75
      %p84 = scmp.eq.s32.totalorder %s22, 0
      %p85 = por %p83, %p84
      %p86 = scmp.ne.s32.totalorder %s74, %s75
      %p87 = scmp.eq.s32.totalorder %s23, 1
      %p88 = por %p86, %p87
      %p90 = scmp.ne.s32.totalorder %s75, %s89
      %p91 = scmp.eq.s32.totalorder %s23, 0
      %p92 = por %p90, %p91
      %s94 = sadd.s32 %s93, 1
      %p97 = scmp.eq.s32.totalorder %s17, 1
      %p98 = scmp.ne.s32.totalorder %s93, %s95
      %p99 = scmp.eq.s32.totalorder %s17, 0
      %p100 = por %p98, %p99
      %p101 = scmp.ne.s32.totalorder %s93, %s95
      %p102 = scmp.eq.s32.totalorder %s22, 1
      %p103 = por %p101, %p102
      %p104 = scmp.ne.s32.totalorder %s95, %s96
      %p105 = scmp.eq.s32.totalorder %s22, 0
      %p106 = por %p104, %p105
      %p107 = scmp.ne.s32.totalorder %s95, %s96
      %p108 = scmp.eq.s32.totalorder %s23, 1
      %p109 = por %p107, %p108
      %p111 = scmp.ne.s32.totalorder %s96, %s110
      %p112 = scmp.eq.s32.totalorder %s23, 0
      %p113 = por %p111, %p112
      %s115 = sadd.s32 %s114, 1
      %p118 = scmp.eq.s32.totalorder %s17, 1
      %p119 = scmp.ne.s32.totalorder %s114, %s116
      %p120 = scmp.eq.s32.totalorder %s17, 0
      %p121 = por %p119, %p120
      %p122 = scmp.ne.s32.totalorder %s114, %s116
      %p123 = scmp.eq.s32.totalorder %s22, 1
      %p124 = por %p122, %p123
      %p125 = scmp.ne.s32.totalorder %s116, %s117
      %p126 = scmp.eq.s32.totalorder %s22, 0
      %p127 = por %p125, %p126
      %p128 = scmp.ne.s32.totalorder %s116, %s117
      %p129 = scmp.eq.s32.totalorder %s23, 1
      %p130 = por %p128, %p129
      %p132 = scmp.ne.s32.totalorder %s117, %s131
      %p133 = scmp.eq.s32.totalorder %s23, 0
      %p134 = por %p132, %p133
      %s136 = sadd.s32 %s135, 1
      %p139 = scmp.eq.s32.totalorder %s17, 1
      %p140 = scmp.ne.s32.totalorder %s135, %s137
      %p141 = scmp.eq.s32.totalorder %s17, 0
      %p142 = por %p140, %p141
      %p143 = scmp.ne.s32.totalorder %s135, %s137
      %p144 = scmp.eq.s32.totalorder %s22, 1
      %p145 = por %p143, %p144
      %p146 = scmp.ne.s32.totalorder %s137, %s138
      %p147 = scmp.eq.s32.totalorder %s22, 0
      %p148 = por %p146, %p147
      %p149 = scmp.ne.s32.totalorder %s137, %s138
      %p150 = scmp.eq.s32.totalorder %s23, 1
      %p151 = por %p149, %p150
      %p153 = scmp.ne.s32.totalorder %s138, %s152
      %p154 = scmp.eq.s32.totalorder %s23, 0
      %p155 = por %p153, %p154
      %s157 = sadd.s32 %s156, 1
      %p160 = scmp.eq.s32.totalorder %s17, 1
      %p161 = scmp.ne.s32.totalorder %s156, %s158
      %p162 = scmp.eq.s32.totalorder %s17, 0
      %p163 = por %p161, %p162
      %p164 = scmp.ne.s32.totalorder %s156, %s158
      %p165 = scmp.eq.s32.totalorder %s22, 1
      %p166 = por %p164, %p165
      %p167 = scmp.ne.s32.totalorder %s158, %s159
      %p168 = scmp.eq.s32.totalorder %s22, 0
      %p169 = por %p167, %p168
      %p170 = scmp.ne.s32.totalorder %s158, %s159
      %p171 = scmp.eq.s32.totalorder %s23, 1
      %p172 = por %p170, %p171
      %p174 = scmp.ne.s32.totalorder %s159, %s173
      %p175 = scmp.eq.s32.totalorder %s23, 0
      %p176 = por %p174, %p175
      %s177 = ssub.s32 %s17, %s24
      %p178 = scmp.eq.s32.totalorder %s177, 0
      %s180 = sadd.s32 %s179, 1
      %s181 = scalar_select %p178, %s179, %s180
      %p184 = pneg %p178
      %p185 = scmp.eq.s32.totalorder %s17, 1
      %p186 = por %p184, %p185
      %p187 = scmp.ne.s32.totalorder %s179, %s182
      %p188 = scmp.eq.s32.totalorder %s17, 0
      %p189 = por %p187, %p188
      %p190 = scmp.ne.s32.totalorder %s179, %s182
      %p191 = scmp.eq.s32.totalorder %s22, 1
      %p192 = por %p190, %p191
      %p193 = scmp.ne.s32.totalorder %s182, %s183
      %p194 = scmp.eq.s32.totalorder %s22, 0
      %p195 = por %p193, %p194
      %p196 = scmp.ne.s32.totalorder %s182, %s183
      %p197 = scmp.eq.s32.totalorder %s23, 1
      %p198 = por %p196, %p197
      %p200 = scmp.ne.s32.totalorder %s183, %s199
      %p201 = scmp.eq.s32.totalorder %s23, 0
      %p202 = por %p200, %p201
      %p203 = scmp.le.s32.totalorder 1, %s17
      %p204 = scmp.lt.s32.totalorder %s17, 3
      %p205 = pnand %p203, %p204
      %p206 = pneg %p205
      // Predicated region
      $region9: #{tpu_custom_call.1} parent=5 // pred_check
        _
      $region10: #{tpu_custom_call.1} parent=5 // pred_check_branch
        %208 = sbr.rel (%p205) target = $region12
      $region11: #{tpu_custom_call.1} parent=5 // pred_region
        %s209 = ssub.s32 %s17, 1
        // Predicated region
        $region13: #{tpu_custom_call.1} parent=11 // pred_check
          %p210 = pneg %p64
        $region14: #{tpu_custom_call.1} parent=11 // pred_check_branch
          %212 = sbr.rel (%p210) target = $region16
        $region15: #{tpu_custom_call.1} parent=11 // pred_region
          _
        $region16: #{tpu_custom_call.1} parent=11 // pred_fallthru
          _
        // Predicated region
        $region17: #{tpu_custom_call.1} parent=11 // pred_check
          %p213 = pneg %p85
        $region18: #{tpu_custom_call.1} parent=11 // pred_check_branch
          %215 = sbr.rel (%p213) target = $region20
        $region19: #{tpu_custom_call.1} parent=11 // pred_region
          %s217 = ssub.s32 9216, 9216
          %218 = vsyncadd [#allocation4], %s217
          %s219 = sshll.u32 [#allocation3], 4
          %s220 = int_to_ptr.vmem [resolvable:$true] %s219
          %225 = dma.hbm_to_vmem [thread:$0]  %s2, 9216, %s220, [#allocation4], 64, 64, 4
        $region20: #{tpu_custom_call.1} parent=11 // pred_fallthru
          _
        // Predicated region
        $region21: #{tpu_custom_call.1} parent=11 // pred_check
          %p226 = pneg %p106
        $region22: #{tpu_custom_call.1} parent=11 // pred_check_branch
          %228 = sbr.rel (%p226) target = $region24
        $region23: #{tpu_custom_call.1} parent=11 // pred_region
          _
        $region24: #{tpu_custom_call.1} parent=11 // pred_fallthru
          _
        // Predicated region
        $region25: #{tpu_custom_call.1} parent=11 // pred_check
          %p229 = pneg %p127
        $region26: #{tpu_custom_call.1} parent=11 // pred_check_branch
          %231 = sbr.rel (%p229) target = $region28
        $region27: #{tpu_custom_call.1} parent=11 // pred_region
          _
        $region28: #{tpu_custom_call.1} parent=11 // pred_fallthru
          _
        // Predicated region
        $region29: #{tpu_custom_call.1} parent=11 // pred_check
          %p232 = pneg %p148
        $region30: #{tpu_custom_call.1} parent=11 // pred_check_branch
          %234 = sbr.rel (%p232) target = $region32
        $region31: #{tpu_custom_call.1} parent=11 // pred_region
          _
        $region32: #{tpu_custom_call.1} parent=11 // pred_fallthru
          _
        // Predicated region
        $region33: #{tpu_custom_call.1} parent=11 // pred_check
          %p235 = pneg %p169
        $region34: #{tpu_custom_call.1} parent=11 // pred_check_branch
          %237 = sbr.rel (%p235) target = $region36
        $region35: #{tpu_custom_call.1} parent=11 // pred_region
          _
        $region36: #{tpu_custom_call.1} parent=11 // pred_fallthru
          _
      $region12: #{tpu_custom_call.1} parent=5 // pred_fallthru
        _
      %p238 = scmp.lt.s32.totalorder %s17, 2
      // Predicated region
      $region37: #{tpu_custom_call.1} parent=5 // pred_check
        %p239 = pneg %p238
      $region38: #{tpu_custom_call.1} parent=5 // pred_check_branch
        %241 = sbr.rel (%p239) target = $region40
      $region39: #{tpu_custom_call.1} parent=5 // pred_region
        // Predicated region
        $region41: #{tpu_custom_call.1} parent=39 // pred_check
          %p242 = pneg %p37
        $region42: #{tpu_custom_call.1} parent=39 // pred_check_branch
          %244 = sbr.rel (%p242) target = $region44
        $region43: #{tpu_custom_call.1} parent=39 // pred_region
          %p245 = scmp.lt.s32.totalorder %s17, 1
          %s246 = scalar_select %p245, %s17, 1
          %s247 = smul.addr %s246, 54
          %s248 = smul.addr %s247, 4
          %s249 = scalar_lea.vmem %s0, %s248
        $region44: #{tpu_custom_call.1} parent=39 // pred_fallthru
          _
      $region40: #{tpu_custom_call.1} parent=5 // pred_fallthru
        _
      %p250 = scmp.le.s32.totalorder 1, %s17
      %p251 = scmp.lt.s32.totalorder %s17, 3
      %p252 = pnand %p250, %p251
      %p253 = pneg %p252
      // Predicated region
      $region45: #{tpu_custom_call.1} parent=5 // pred_check
        _
      $region46: #{tpu_custom_call.1} parent=5 // pred_check_branch
        %255 = sbr.rel (%p252) target = $region48
      $region47: #{tpu_custom_call.1} parent=5 // pred_region
        %s256 = ssub.s32 %s17, 1
        // Predicated region
        $region49: #{tpu_custom_call.1} parent=47 // pred_check
          %p257 = pneg %p85
        $region50: #{tpu_custom_call.1} parent=47 // pred_check_branch
          %259 = sbr.rel (%p257) target = $region52
        $region51: #{tpu_custom_call.1} parent=47 // pred_region
          %260 = dma.done [#allocation4], 9216
        $region52: #{tpu_custom_call.1} parent=47 // pred_fallthru
          _
        %p261 = scmp.lt.s32.totalorder %s22, 1
        %s262 = scalar_select %p261, %s22, 1
        %s263 = smul.addr %s262, 54
        %s264 = smul.addr %s263, 4
        %s265 = scalar_lea.vmem %s0, %s264
        %p266 = pneg %p43
        %p267 = pneg %p40
        %p268 = pneg %p64
        %p269 = pneg %p61
        %p270 = pneg %p85
        %p271 = pneg %p82
        %p272 = pneg %p106
        %p273 = pneg %p103
        %p274 = pneg %p127
        %p275 = pneg %p124
        %p276 = pneg %p148
        %p277 = pneg %p145
        %p278 = pneg %p169
        %p279 = pneg %p166
        %p280 = pneg %p195
        %p281 = pneg %p192
        %s282 = sand.u32 %s182, 1
        %s283 = scalar_lea.sflag [#allocation5], %s282
        %s284 = sand.u32 %s182, 1
        %s285 = smul.addr %s284, 256
        %s286 = scalar_lea.vmem [#allocation6], %s285
        %p287 = scmp.lt.s32.totalorder %s22, 1
        %s288 = scalar_select %p287, %s22, 1
        %s289 = smul.addr %s288, 54
        %s290 = smul.addr %s289, 4
        %s291 = scalar_lea.vmem %s0, %s290
        %293 = vst [vmem:[#allocation2] sm:$0xff] 0.0
        %294 = vst [vmem:[#allocation2 + $0x8] sm:$0xff] 0.0
        %295 = vst [vmem:[#allocation2 + $0x10] sm:$0x3] 0.0
        %s296 = scalar_lea.vmem [#allocation2], 408
        %297 = vst [vmem:[%s296] sm:$0xff] 0.0
        %298 = vst [vmem:[%s296 + $0x8] sm:$0xff] 0.0
        %299 = vst [vmem:[%s296 + $0x10] sm:$0x3] 0.0
        %300 = vst [vmem:[#allocation2] sm:$0x1] 0.0
        %301 = vst [vmem:[#allocation2 + $0x18] sm:$0x1] 0.0
        %302 = vst [vmem:[#allocation2 + $0x30] sm:$0x1] 0.0
        %303 = vst [vmem:[#allocation2 + $0x48] sm:$0x1] 0.0
        %304 = vst [vmem:[#allocation2 + $0x60] sm:$0x1] 0.0
        %305 = vst [vmem:[#allocation2 + $0x78] sm:$0x1] 0.0
        %306 = vst [vmem:[#allocation2 + $0x90] sm:$0x1] 0.0
        %307 = vst [vmem:[#allocation2 + $0xa8] sm:$0x1] 0.0
        %308 = vst [vmem:[#allocation2 + $0xc0] sm:$0x1] 0.0
        %309 = vst [vmem:[#allocation2 + $0xd8] sm:$0x1] 0.0
        %310 = vst [vmem:[#allocation2 + $0xf0] sm:$0x1] 0.0
        %311 = vst [vmem:[#allocation2 + $0x108] sm:$0x1] 0.0
        %312 = vst [vmem:[#allocation2 + $0x120] sm:$0x1] 0.0
        %313 = vst [vmem:[#allocation2 + $0x138] sm:$0x1] 0.0
        %314 = vst [vmem:[#allocation2 + $0x150] sm:$0x1] 0.0
        %315 = vst [vmem:[#allocation2 + $0x168] sm:$0x1] 0.0
        %316 = vst [vmem:[#allocation2 + $0x180] sm:$0x1] 0.0
        %317 = vst [vmem:[#allocation2 + $0x198] sm:$0x1] 0.0
        %318 = vst [vmem:[#allocation2 + $0x11] sm:$0x1] 0.0
        %319 = vst [vmem:[#allocation2 + $0x29] sm:$0x1] 0.0
        %320 = vst [vmem:[#allocation2 + $0x41] sm:$0x1] 0.0
        %321 = vst [vmem:[#allocation2 + $0x59] sm:$0x1] 0.0
        %322 = vst [vmem:[#allocation2 + $0x71] sm:$0x1] 0.0
        %323 = vst [vmem:[#allocation2 + $0x89] sm:$0x1] 0.0
        %324 = vst [vmem:[#allocation2 + $0xa1] sm:$0x1] 0.0
        %325 = vst [vmem:[#allocation2 + $0xb9] sm:$0x1] 0.0
        %326 = vst [vmem:[#allocation2 + $0xd1] sm:$0x1] 0.0
        %327 = vst [vmem:[#allocation2 + $0xe9] sm:$0x1] 0.0
        %328 = vst [vmem:[#allocation2 + $0x101] sm:$0x1] 0.0
        %329 = vst [vmem:[#allocation2 + $0x119] sm:$0x1] 0.0
        %330 = vst [vmem:[#allocation2 + $0x131] sm:$0x1] 0.0
        %331 = vst [vmem:[#allocation2 + $0x149] sm:$0x1] 0.0
        %332 = vst [vmem:[#allocation2 + $0x161] sm:$0x1] 0.0
        %333 = vst [vmem:[#allocation2 + $0x179] sm:$0x1] 0.0
        %334 = vst [vmem:[#allocation2 + $0x191] sm:$0x1] 0.0
        %335 = vst [vmem:[#allocation2 + $0x1a9] sm:$0x1] 0.0
        %v336 = vld [vmem:[%s291] sm:$0xf]
        %v337 = vld [vmem:[%s291 + $0x4] sm:$0xf]
        %v338 = vld [vmem:[%s291 + $0x8] sm:$0x1]
        %v339 = vld [vmem:[%s291 + $0xc] sm:$0xf]
        %v340 = vld [vmem:[%s291 + $0x10] sm:$0xf]
        %v341 = vld [vmem:[%s291 + $0x14] sm:$0x1]
        %v342 = vld [vmem:[%s291 + $0x18] sm:$0xf]
        %v343 = vld [vmem:[%s291 + $0x1c] sm:$0xf]
        %v344 = vld [vmem:[%s291 + $0x20] sm:$0x1]
        %v345 = vld [vmem:[%s291 + $0x24] sm:$0xf]
        %v346 = vld [vmem:[%s291 + $0x28] sm:$0xf]
        %v347 = vld [vmem:[%s291 + $0x2c] sm:$0x1]
        %v348 = vld [vmem:[%s291 + $0x30] sm:$0xf]
        %v349 = vld [vmem:[%s291 + $0x34] sm:$0xf]
        %v350 = vld [vmem:[%s291 + $0x38] sm:$0x1]
        %v351 = vld [vmem:[%s291 + $0x3c] sm:$0xf]
        %v352 = vld [vmem:[%s291 + $0x40] sm:$0xf]
        %v353 = vld [vmem:[%s291 + $0x44] sm:$0x1]
        %v354 = vld [vmem:[%s291 + $0x48] sm:$0xf]
        %v355 = vld [vmem:[%s291 + $0x4c] sm:$0xf]
        %v356 = vld [vmem:[%s291 + $0x50] sm:$0x1]
        %v357 = vld [vmem:[%s291 + $0x54] sm:$0xf]
        %v358 = vld [vmem:[%s291 + $0x58] sm:$0xf]
        %v359 = vld [vmem:[%s291 + $0x5c] sm:$0x1]
        %v360 = vld [vmem:[%s291 + $0x60] sm:$0xf]
        %v361 = vld [vmem:[%s291 + $0x64] sm:$0xf]
        %v362 = vld [vmem:[%s291 + $0x68] sm:$0x1]
        %v363 = vld [vmem:[%s291 + $0x6c] sm:$0xf]
        %v364 = vld [vmem:[%s291 + $0x70] sm:$0xf]
        %v365 = vld [vmem:[%s291 + $0x74] sm:$0x1]
        %v366 = vld [vmem:[%s291 + $0x78] sm:$0xf]
        %v367 = vld [vmem:[%s291 + $0x7c] sm:$0xf]
        %v368 = vld [vmem:[%s291 + $0x80] sm:$0x1]
        %v369 = vld [vmem:[%s291 + $0x84] sm:$0xf]
        %v370 = vld [vmem:[%s291 + $0x88] sm:$0xf]
        %v371 = vld [vmem:[%s291 + $0x8c] sm:$0x1]
        %v372 = vld [vmem:[%s291 + $0x90] sm:$0xf]
        %v373 = vld [vmem:[%s291 + $0x94] sm:$0xf]
        %v374 = vld [vmem:[%s291 + $0x98] sm:$0x1]
        %v375 = vld [vmem:[%s291 + $0x9c] sm:$0xf]
        %v376 = vld [vmem:[%s291 + $0xa0] sm:$0xf]
        %v377 = vld [vmem:[%s291 + $0xa4] sm:$0x1]
        %v378 = vld [vmem:[%s291 + $0xa8] sm:$0xf]
        %v379 = vld [vmem:[%s291 + $0xac] sm:$0xf]
        %v380 = vld [vmem:[%s291 + $0xb0] sm:$0x1]
        %v381 = vld [vmem:[%s291 + $0xb4] sm:$0xf]
        %v382 = vld [vmem:[%s291 + $0xb8] sm:$0xf]
        %v383 = vld [vmem:[%s291 + $0xbc] sm:$0x1]
        %v384 = vld [vmem:[%s291 + $0xc0] sm:$0xf]
        %v385 = vld [vmem:[%s291 + $0xc4] sm:$0xf]
        %v386 = vld [vmem:[%s291 + $0xc8] sm:$0x1]
        %v387 = vld [vmem:[%s291 + $0xcc] sm:$0xf]
        %v388 = vld [vmem:[%s291 + $0xd0] sm:$0xf]
        %v389 = vld [vmem:[%s291 + $0xd4] sm:$0x1]
        %v390 = vunpack.c.l.bf16 %v336
        %v391 = vunpack.c.l.bf16 %v337
        %v392 = vunpack.c.l.bf16 %v338
        %v393 = vunpack.c.l.bf16 %v339
        %v394 = vunpack.c.l.bf16 %v340
        %v395 = vunpack.c.l.bf16 %v341
        %v396 = vunpack.c.l.bf16 %v342
        %v397 = vunpack.c.l.bf16 %v343
        %v398 = vunpack.c.l.bf16 %v344
        %v399 = vunpack.c.l.bf16 %v345
        %v400 = vunpack.c.l.bf16 %v346
        %v401 = vunpack.c.l.bf16 %v347
        %v402 = vunpack.c.l.bf16 %v348
        %v403 = vunpack.c.l.bf16 %v349
        %v404 = vunpack.c.l.bf16 %v350
        %v405 = vunpack.c.l.bf16 %v351
        %v406 = vunpack.c.l.bf16 %v352
        %v407 = vunpack.c.l.bf16 %v353
        %v408 = vunpack.c.l.bf16 %v354
        %v409 = vunpack.c.l.bf16 %v355
        %v410 = vunpack.c.l.bf16 %v356
        %v411 = vunpack.c.l.bf16 %v357
        %v412 = vunpack.c.l.bf16 %v358
        %v413 = vunpack.c.l.bf16 %v359
        %v414 = vunpack.c.l.bf16 %v360
        %v415 = vunpack.c.l.bf16 %v361
        %v416 = vunpack.c.l.bf16 %v362
        %v417 = vunpack.c.l.bf16 %v363
        %v418 = vunpack.c.l.bf16 %v364
        %v419 = vunpack.c.l.bf16 %v365
        %v420 = vunpack.c.l.bf16 %v366
        %v421 = vunpack.c.l.bf16 %v367
        %v422 = vunpack.c.l.bf16 %v368
        %v423 = vunpack.c.l.bf16 %v369
        %v424 = vunpack.c.l.bf16 %v370
        %v425 = vunpack.c.l.bf16 %v371
        %v426 = vunpack.c.l.bf16 %v372
        %v427 = vunpack.c.l.bf16 %v373
        %v428 = vunpack.c.l.bf16 %v374
        %v429 = vunpack.c.l.bf16 %v375
        %v430 = vunpack.c.l.bf16 %v376
        %v431 = vunpack.c.l.bf16 %v377
        %v432 = vunpack.c.l.bf16 %v378
        %v433 = vunpack.c.l.bf16 %v379
        %v434 = vunpack.c.l.bf16 %v380
        %v435 = vunpack.c.l.bf16 %v381
        %v436 = vunpack.c.l.bf16 %v382
        %v437 = vunpack.c.l.bf16 %v383
        %v438 = vunpack.c.l.bf16 %v384
        %v439 = vunpack.c.l.bf16 %v385
        %v440 = vunpack.c.l.bf16 %v386
        %v441 = vunpack.c.l.bf16 %v387
        %v442 = vunpack.c.l.bf16 %v388
        %v443 = vunpack.c.l.bf16 %v389
        %vm492 = vcmask 1046528
        %v493 = vrot.slane %v390, 1
        %v494 = vrot.slane %v391, 1
        %v495 = vsel %vm492, %v493, %v494
        %v496 = vrot.slane %v392, 1
        %v497 = vsel %vm492, %v494, %v496
        %v498 = vrot.slane %v393, 1
        %v499 = vrot.slane %v394, 1
        %v500 = vsel %vm492, %v498, %v499
        %v501 = vrot.slane %v395, 1
        %v502 = vsel %vm492, %v499, %v501
        %v503 = vrot.slane %v396, 1
        %v504 = vrot.slane %v397, 1
        %v505 = vsel %vm492, %v503, %v504
        %v506 = vrot.slane %v398, 1
        %v507 = vsel %vm492, %v504, %v506
        %v508 = vrot.slane %v399, 1
        %v509 = vrot.slane %v400, 1
        %v510 = vsel %vm492, %v508, %v509
        %v511 = vrot.slane %v401, 1
        %v512 = vsel %vm492, %v509, %v511
        %v513 = vrot.slane %v402, 1
        %v514 = vrot.slane %v403, 1
        %v515 = vsel %vm492, %v513, %v514
        %v516 = vrot.slane %v404, 1
        %v517 = vsel %vm492, %v514, %v516
        %v518 = vrot.slane %v405, 1
        %v519 = vrot.slane %v406, 1
        %v520 = vsel %vm492, %v518, %v519
        %v521 = vrot.slane %v407, 1
        %v522 = vsel %vm492, %v519, %v521
        %v523 = vrot.slane %v408, 1
        %v524 = vrot.slane %v409, 1
        %v525 = vsel %vm492, %v523, %v524
        %v526 = vrot.slane %v410, 1
        %v527 = vsel %vm492, %v524, %v526
        %v528 = vrot.slane %v411, 1
        %v529 = vrot.slane %v412, 1
        %v530 = vsel %vm492, %v528, %v529
        %v531 = vrot.slane %v413, 1
        %v532 = vsel %vm492, %v529, %v531
        %v533 = vrot.slane %v414, 1
        %v534 = vrot.slane %v415, 1
        %v535 = vsel %vm492, %v533, %v534
        %v536 = vrot.slane %v416, 1
        %v537 = vsel %vm492, %v534, %v536
        %v538 = vrot.slane %v417, 1
        %v539 = vrot.slane %v418, 1
        %v540 = vsel %vm492, %v538, %v539
        %v541 = vrot.slane %v419, 1
        %v542 = vsel %vm492, %v539, %v541
        %v543 = vrot.slane %v420, 1
        %v544 = vrot.slane %v421, 1
        %v545 = vsel %vm492, %v543, %v544
        %v546 = vrot.slane %v422, 1
        %v547 = vsel %vm492, %v544, %v546
        %v548 = vrot.slane %v423, 1
        %v549 = vrot.slane %v424, 1
        %v550 = vsel %vm492, %v548, %v549
        %v551 = vrot.slane %v425, 1
        %v552 = vsel %vm492, %v549, %v551
        %v553 = vrot.slane %v426, 1
        %v554 = vrot.slane %v427, 1
        %v555 = vsel %vm492, %v553, %v554
        %v556 = vrot.slane %v428, 1
        %v557 = vsel %vm492, %v554, %v556
        %v558 = vrot.slane %v429, 1
        %v559 = vrot.slane %v430, 1
        %v560 = vsel %vm492, %v558, %v559
        %v561 = vrot.slane %v431, 1
        %v562 = vsel %vm492, %v559, %v561
        %v563 = vrot.slane %v432, 1
        %v564 = vrot.slane %v433, 1
        %v565 = vsel %vm492, %v563, %v564
        %v566 = vrot.slane %v434, 1
        %v567 = vsel %vm492, %v564, %v566
        %v568 = vrot.slane %v435, 1
        %v569 = vrot.slane %v436, 1
        %v570 = vsel %vm492, %v568, %v569
        %v571 = vrot.slane %v437, 1
        %v572 = vsel %vm492, %v569, %v571
        %vm605 = vcmask 1045504
        %v606 = vrot.slane %v390, 2
        %v607 = vrot.slane %v391, 2
        %v608 = vsel %vm605, %v606, %v607
        %v609 = vrot.slane %v392, 2
        %v610 = vsel %vm605, %v607, %v609
        %v611 = vrot.slane %v393, 2
        %v612 = vrot.slane %v394, 2
        %v613 = vsel %vm605, %v611, %v612
        %v614 = vrot.slane %v395, 2
        %v615 = vsel %vm605, %v612, %v614
        %v616 = vrot.slane %v396, 2
        %v617 = vrot.slane %v397, 2
        %v618 = vsel %vm605, %v616, %v617
        %v619 = vrot.slane %v398, 2
        %v620 = vsel %vm605, %v617, %v619
        %v621 = vrot.slane %v399, 2
        %v622 = vrot.slane %v400, 2
        %v623 = vsel %vm605, %v621, %v622
        %v624 = vrot.slane %v401, 2
        %v625 = vsel %vm605, %v622, %v624
        %v626 = vrot.slane %v402, 2
        %v627 = vrot.slane %v403, 2
        %v628 = vsel %vm605, %v626, %v627
        %v629 = vrot.slane %v404, 2
        %v630 = vsel %vm605, %v627, %v629
        %v631 = vrot.slane %v405, 2
        %v632 = vrot.slane %v406, 2
        %v633 = vsel %vm605, %v631, %v632
        %v634 = vrot.slane %v407, 2
        %v635 = vsel %vm605, %v632, %v634
        %v636 = vrot.slane %v408, 2
        %v637 = vrot.slane %v409, 2
        %v638 = vsel %vm605, %v636, %v637
        %v639 = vrot.slane %v410, 2
        %v640 = vsel %vm605, %v637, %v639
        %v641 = vrot.slane %v411, 2
        %v642 = vrot.slane %v412, 2
        %v643 = vsel %vm605, %v641, %v642
        %v644 = vrot.slane %v413, 2
        %v645 = vsel %vm605, %v642, %v644
        %v646 = vrot.slane %v414, 2
        %v647 = vrot.slane %v415, 2
        %v648 = vsel %vm605, %v646, %v647
        %v649 = vrot.slane %v416, 2
        %v650 = vsel %vm605, %v647, %v649
        %v651 = vrot.slane %v417, 2
        %v652 = vrot.slane %v418, 2
        %v653 = vsel %vm605, %v651, %v652
        %v654 = vrot.slane %v419, 2
        %v655 = vsel %vm605, %v652, %v654
        %v656 = vrot.slane %v420, 2
        %v657 = vrot.slane %v421, 2
        %v658 = vsel %vm605, %v656, %v657
        %v659 = vrot.slane %v422, 2
        %v660 = vsel %vm605, %v657, %v659
        %v661 = vrot.slane %v423, 2
        %v662 = vrot.slane %v424, 2
        %v663 = vsel %vm605, %v661, %v662
        %v664 = vrot.slane %v425, 2
        %v665 = vsel %vm605, %v662, %v664
        %v666 = vrot.slane %v426, 2
        %v667 = vrot.slane %v427, 2
        %v668 = vsel %vm605, %v666, %v667
        %v669 = vrot.slane %v428, 2
        %v670 = vsel %vm605, %v667, %v669
        %v671 = vrot.slane %v429, 2
        %v672 = vrot.slane %v430, 2
        %v673 = vsel %vm605, %v671, %v672
        %v674 = vrot.slane %v431, 2
        %v675 = vsel %vm605, %v672, %v674
        %v676 = vrot.slane %v432, 2
        %v677 = vrot.slane %v433, 2
        %v678 = vsel %vm605, %v676, %v677
        %v679 = vrot.slane %v434, 2
        %v680 = vsel %vm605, %v677, %v679
        %v681 = vrot.slane %v435, 2
        %v682 = vrot.slane %v436, 2
        %v683 = vsel %vm605, %v681, %v682
        %v684 = vrot.slane %v437, 2
        %v685 = vsel %vm605, %v682, %v684
        %v718 = vpack.c.bf16 %v391, %v390
        %v719 = vpack.c.bf16 %v497, %v495
        %v720 = vpack.c.bf16 %v610, %v608
        %v721 = vpack.c.bf16 %v394, %v393
        %v722 = vpack.c.bf16 %v502, %v500
        %v723 = vpack.c.bf16 %v615, %v613
        %v724 = vpack.c.bf16 %v397, %v396
        %v725 = vpack.c.bf16 %v507, %v505
        %v726 = vpack.c.bf16 %v620, %v618
        %v727 = vpack.c.bf16 %v400, %v399
        %v728 = vpack.c.bf16 %v512, %v510
        %v729 = vpack.c.bf16 %v625, %v623
        %v730 = vpack.c.bf16 %v403, %v402
        %v731 = vpack.c.bf16 %v517, %v515
        %v732 = vpack.c.bf16 %v630, %v628
        %v733 = vpack.c.bf16 %v406, %v405
        %v734 = vpack.c.bf16 %v522, %v520
        %v735 = vpack.c.bf16 %v635, %v633
        %v736 = vpack.c.bf16 %v409, %v408
        %v737 = vpack.c.bf16 %v527, %v525
        %v738 = vpack.c.bf16 %v640, %v638
        %v739 = vpack.c.bf16 %v412, %v411
        %v740 = vpack.c.bf16 %v532, %v530
        %v741 = vpack.c.bf16 %v645, %v643
        %v742 = vpack.c.bf16 %v415, %v414
        %v743 = vpack.c.bf16 %v537, %v535
        %v744 = vpack.c.bf16 %v650, %v648
        %v745 = vpack.c.bf16 %v418, %v417
        %v746 = vpack.c.bf16 %v542, %v540
        %v747 = vpack.c.bf16 %v655, %v653
        %v748 = vpack.c.bf16 %v421, %v420
        %v749 = vpack.c.bf16 %v547, %v545
        %v750 = vpack.c.bf16 %v660, %v658
        %v751 = vpack.c.bf16 %v424, %v423
        %v752 = vpack.c.bf16 %v552, %v550
        %v753 = vpack.c.bf16 %v665, %v663
        %v754 = vpack.c.bf16 %v427, %v426
        %v755 = vpack.c.bf16 %v557, %v555
        %v756 = vpack.c.bf16 %v670, %v668
        %v757 = vpack.c.bf16 %v430, %v429
        %v758 = vpack.c.bf16 %v562, %v560
        %v759 = vpack.c.bf16 %v675, %v673
        %v760 = vpack.c.bf16 %v433, %v432
        %v761 = vpack.c.bf16 %v567, %v565
        %v762 = vpack.c.bf16 %v680, %v678
        %v763 = vpack.c.bf16 %v436, %v435
        %v764 = vpack.c.bf16 %v572, %v570
        %v765 = vpack.c.bf16 %v685, %v683
        %v766 = vld [vmem:[%s1] sm:$0xf]
        %v767 = vld [vmem:[%s1 + $0x4] sm:$0xf]
        %v768 = vld [vmem:[%s1 + $0x8] sm:$0xf]
        %v769 = vld [vmem:[%s1 + $0xc] sm:$0xf]
        %v770 = vld [vmem:[%s1 + $0x10] sm:$0xf]
        %v771 = vld [vmem:[%s1 + $0x14] sm:$0xf]
        %v772 = vld [vmem:[%s1 + $0x18] sm:$0xf]
        %v773 = vld [vmem:[%s1 + $0x1c] sm:$0xf]
        %v774 = vld [vmem:[%s1 + $0x20] sm:$0xf]
        %v775 = vld [vmem:[%s1 + $0x24] sm:$0xf]
        %v776 = vld [vmem:[%s1 + $0x28] sm:$0xf]
        %v777 = vld [vmem:[%s1 + $0x2c] sm:$0xf]
        %v778 = vld [vmem:[%s1 + $0x30] sm:$0xf]
        %v779 = vld [vmem:[%s1 + $0x34] sm:$0xf]
        %v780 = vld [vmem:[%s1 + $0x38] sm:$0xf]
        %v781 = vld [vmem:[%s1 + $0x3c] sm:$0xf]
        %v782 = vld [vmem:[%s1 + $0x40] sm:$0xf]
        %v783 = vld [vmem:[%s1 + $0x44] sm:$0xf]
        %v784 = vld [vmem:[%s1 + $0x48] sm:$0xf]
        %v785 = vld [vmem:[%s1 + $0x4c] sm:$0xf]
        %v786 = vld [vmem:[%s1 + $0x50] sm:$0xf]
        %v787 = vld [vmem:[%s1 + $0x54] sm:$0xf]
        %v788 = vld [vmem:[%s1 + $0x58] sm:$0xf]
        %v789 = vld [vmem:[%s1 + $0x5c] sm:$0xf]
        %v790 = vld [vmem:[%s1 + $0x60] sm:$0xf]
        %v791 = vld [vmem:[%s1 + $0x64] sm:$0xf]
        %v792 = vld [vmem:[%s1 + $0x68] sm:$0xf]
        %v793 = vld [vmem:[%s1 + $0x6c] sm:$0xf]
        %v794 = vld [vmem:[%s1 + $0x70] sm:$0xf]
        %v795 = vld [vmem:[%s1 + $0x74] sm:$0xf]
        %v796 = vld [vmem:[%s1 + $0x78] sm:$0xf]
        %v797 = vld [vmem:[%s1 + $0x7c] sm:$0xf]
        %v798 = vld [vmem:[%s1 + $0x80] sm:$0xf]
        %v799 = vld [vmem:[%s1 + $0x84] sm:$0xf]
        %v800 = vld [vmem:[%s1 + $0x88] sm:$0xf]
        %v801 = vld [vmem:[%s1 + $0x8c] sm:$0xf]
        %v802 = vld [vmem:[%s1 + $0x90] sm:$0xf]
        %v803 = vld [vmem:[%s1 + $0x94] sm:$0xf]
        %v804 = vld [vmem:[%s1 + $0x98] sm:$0xf]
        %v805 = vld [vmem:[%s1 + $0x9c] sm:$0xf]
        %v806 = vld [vmem:[%s1 + $0xa0] sm:$0xf]
        %v807 = vld [vmem:[%s1 + $0xa4] sm:$0xf]
        %v808 = vld [vmem:[%s1 + $0xa8] sm:$0xf]
        %v809 = vld [vmem:[%s1 + $0xac] sm:$0xf]
        %v810 = vld [vmem:[%s1 + $0xb0] sm:$0xf]
        %v811 = vld [vmem:[%s1 + $0xb4] sm:$0xf]
        %v812 = vld [vmem:[%s1 + $0xb8] sm:$0xf]
        %v813 = vld [vmem:[%s1 + $0xbc] sm:$0xf]
        %v817 = vrot.slane %v438, 1
        %v818 = vrot.slane %v439, 1
        %v819 = vsel %vm492, %v817, %v818
        %v820 = vrot.slane %v440, 1
        %v821 = vsel %vm492, %v818, %v820
        %v824 = vrot.slane %v438, 2
        %v825 = vrot.slane %v439, 2
        %v826 = vsel %vm605, %v824, %v825
        %v827 = vrot.slane %v440, 2
        %v828 = vsel %vm605, %v825, %v827
        %v831 = vpack.c.bf16 %v439, %v438
        %v832 = vpack.c.bf16 %v821, %v819
        %v833 = vpack.c.bf16 %v828, %v826
        %s834 = scalar_lea.vmem %s1, 192
        %v835 = vld [vmem:[%s834] sm:$0xf]
        %v836 = vld [vmem:[%s834 + $0x4] sm:$0xf]
        %v837 = vld [vmem:[%s834 + $0x8] sm:$0xf]
        %v838 = vld [vmem:[%s834 + $0xc] sm:$0xf]
        %v839 = vld [vmem:[%s834 + $0x10] sm:$0xf]
        %v840 = vld [vmem:[%s834 + $0x14] sm:$0xf]
        %v841 = vld [vmem:[%s834 + $0x18] sm:$0xf]
        %v842 = vld [vmem:[%s834 + $0x1c] sm:$0xf]
        %v843 = vld [vmem:[%s834 + $0x20] sm:$0xf]
        %v844 = vld [vmem:[%s834 + $0x24] sm:$0xf]
        %v845 = vld [vmem:[%s834 + $0x28] sm:$0xf]
        %v846 = vld [vmem:[%s834 + $0x2c] sm:$0xf]
        %v847 = vld [vmem:[%s834 + $0x30] sm:$0xf]
        %v848 = vld [vmem:[%s834 + $0x34] sm:$0xf]
        %v849 = vld [vmem:[%s834 + $0x38] sm:$0xf]
        %v850 = vld [vmem:[%s834 + $0x3c] sm:$0xf]
        %v851 = vld [vmem:[%s834 + $0x40] sm:$0xf]
        %v852 = vld [vmem:[%s834 + $0x44] sm:$0xf]
        %v853 = vld [vmem:[%s834 + $0x48] sm:$0xf]
        %v854 = vld [vmem:[%s834 + $0x4c] sm:$0xf]
        %v855 = vld [vmem:[%s834 + $0x50] sm:$0xf]
        %v856 = vld [vmem:[%s834 + $0x54] sm:$0xf]
        %v857 = vld [vmem:[%s834 + $0x58] sm:$0xf]
        %v858 = vld [vmem:[%s834 + $0x5c] sm:$0xf]
        %v859 = vld [vmem:[%s834 + $0x60] sm:$0xf]
        %v860 = vld [vmem:[%s834 + $0x64] sm:$0xf]
        %v861 = vld [vmem:[%s834 + $0x68] sm:$0xf]
        %v862 = vld [vmem:[%s834 + $0x6c] sm:$0xf]
        %v863 = vld [vmem:[%s834 + $0x70] sm:$0xf]
        %v864 = vld [vmem:[%s834 + $0x74] sm:$0xf]
        %v865 = vld [vmem:[%s834 + $0x78] sm:$0xf]
        %v866 = vld [vmem:[%s834 + $0x7c] sm:$0xf]
        %v867 = vld [vmem:[%s834 + $0x80] sm:$0xf]
        %v868 = vld [vmem:[%s834 + $0x84] sm:$0xf]
        %v869 = vld [vmem:[%s834 + $0x88] sm:$0xf]
        %v870 = vld [vmem:[%s834 + $0x8c] sm:$0xf]
        %v871 = vld [vmem:[%s834 + $0x90] sm:$0xf]
        %v872 = vld [vmem:[%s834 + $0x94] sm:$0xf]
        %v873 = vld [vmem:[%s834 + $0x98] sm:$0xf]
        %v874 = vld [vmem:[%s834 + $0x9c] sm:$0xf]
        %v875 = vld [vmem:[%s834 + $0xa0] sm:$0xf]
        %v876 = vld [vmem:[%s834 + $0xa4] sm:$0xf]
        %v877 = vld [vmem:[%s834 + $0xa8] sm:$0xf]
        %v878 = vld [vmem:[%s834 + $0xac] sm:$0xf]
        %v879 = vld [vmem:[%s834 + $0xb0] sm:$0xf]
        %v880 = vld [vmem:[%s834 + $0xb4] sm:$0xf]
        %v881 = vld [vmem:[%s834 + $0xb8] sm:$0xf]
        %v882 = vld [vmem:[%s834 + $0xbc] sm:$0xf]
        %v931 = vunpack.c.l.b16 %v835
        %v932 = vunpack.c.l.b16 %v836
        %v933 = vunpack.c.l.b16 %v837
        %v934 = vunpack.c.l.b16 %v838
        %v935 = vunpack.c.l.b16 %v839
        %v936 = vunpack.c.l.b16 %v840
        %v937 = vunpack.c.l.b16 %v841
        %v938 = vunpack.c.l.b16 %v842
        %v939 = vunpack.c.l.b16 %v843
        %v940 = vunpack.c.l.b16 %v844
        %v941 = vunpack.c.l.b16 %v845
        %v942 = vunpack.c.l.b16 %v846
        %v943 = vunpack.c.l.b16 %v847
        %v944 = vunpack.c.l.b16 %v848
        %v945 = vunpack.c.l.b16 %v849
        %v946 = vunpack.c.l.b16 %v850
        %v947 = vunpack.c.l.b16 %v851
        %v948 = vunpack.c.l.b16 %v852
        %v949 = vunpack.c.l.b16 %v853
        %v950 = vunpack.c.l.b16 %v854
        %v951 = vunpack.c.l.b16 %v855
        %v952 = vunpack.c.l.b16 %v856
        %v953 = vunpack.c.l.b16 %v857
        %v954 = vunpack.c.l.b16 %v858
        %v955 = vunpack.c.l.b16 %v859
        %v956 = vunpack.c.l.b16 %v860
        %v957 = vunpack.c.l.b16 %v861
        %v958 = vunpack.c.l.b16 %v862
        %v959 = vunpack.c.l.b16 %v863
        %v960 = vunpack.c.l.b16 %v864
        %v961 = vunpack.c.l.b16 %v865
        %v962 = vunpack.c.l.b16 %v866
        %v963 = vunpack.c.l.b16 %v867
        %v964 = vunpack.c.l.b16 %v868
        %v965 = vunpack.c.l.b16 %v869
        %v966 = vunpack.c.l.b16 %v870
        %v967 = vunpack.c.l.b16 %v871
        %v968 = vunpack.c.l.b16 %v872
        %v969 = vunpack.c.l.b16 %v873
        %v970 = vunpack.c.l.b16 %v874
        %v971 = vunpack.c.l.b16 %v875
        %v972 = vunpack.c.l.b16 %v876
        %v973 = vunpack.c.l.b16 %v877
        %v974 = vunpack.c.l.b16 %v878
        %v975 = vunpack.c.l.b16 %v879
        %v976 = vunpack.c.l.b16 %v880
        %v977 = vunpack.c.l.b16 %v881
        %v978 = vunpack.c.l.b16 %v882
        %v979 = vpack.c.b16 %v932, %v931
        %v980 = vpack.c.b16 %v934, %v933
        %v981 = vpack.c.b16 %v936, %v935
        %v982 = vpack.c.b16 %v938, %v937
        %v983 = vpack.c.b16 %v940, %v939
        %v984 = vpack.c.b16 %v942, %v941
        %v985 = vpack.c.b16 %v944, %v943
        %v986 = vpack.c.b16 %v946, %v945
        %v987 = vpack.c.b16 %v948, %v947
        %v988 = vpack.c.b16 %v950, %v949
        %v989 = vpack.c.b16 %v952, %v951
        %v990 = vpack.c.b16 %v954, %v953
        %v991 = vpack.c.b16 %v956, %v955
        %v992 = vpack.c.b16 %v958, %v957
        %v993 = vpack.c.b16 %v960, %v959
        %v994 = vpack.c.b16 %v962, %v961
        %v995 = vpack.c.b16 %v964, %v963
        %v996 = vpack.c.b16 %v966, %v965
        %v997 = vpack.c.b16 %v968, %v967
        %v998 = vpack.c.b16 %v970, %v969
        %v999 = vpack.c.b16 %v972, %v971
        %v1000 = vpack.c.b16 %v974, %v973
        %v1001 = vpack.c.b16 %v976, %v975
        %v1002 = vpack.c.b16 %v978, %v977
        %1027 = vmatprep.subr.bf16.mxu0 0
        %1028 = vmatpush1.bf16.msra.mxu0 %v986
        %1029 = vmatprep.subr.bf16.mxu0 0
        %1030 = vmatpush1.bf16.msra.mxu0 %v985
        %1031 = vmatprep.subr.bf16.mxu0 0
        %1032 = vmatpush1.bf16.msra.mxu0 %v984
        %1033 = vmatprep.subr.bf16.mxu0 0
        %1034 = vmatpush1.bf16.msra.mxu0 %v983
        %1035 = vmatprep.subr.bf16.mxu0 0
        %1036 = vmatpush1.bf16.msra.mxu0 %v982
        %1037 = vmatprep.subr.bf16.mxu0 0
        %1038 = vmatpush1.bf16.msra.mxu0 %v981
        %1039 = vmatprep.subr.bf16.mxu0 0
        %1040 = vmatpush1.bf16.msra.mxu0 %v980
        %1041 = vmatprep.subr.bf16.mxu0 0
        %1042 = vmatpush1.bf16.msra.mxu0 %v979
        %1043 = vmatprep.subr.bf16.mxu0 0
        %1044 = vmatpush2.bf16.msra.mxu0 %v994
        %1045 = vmatprep.subr.bf16.mxu0 0
        %1046 = vmatpush2.bf16.msra.mxu0 %v993
        %1047 = vmatprep.subr.bf16.mxu0 0
        %1048 = vmatpush2.bf16.msra.mxu0 %v992
        %1049 = vmatprep.subr.bf16.mxu0 0
        %1050 = vmatpush2.bf16.msra.mxu0 %v991
        %1051 = vmatprep.subr.bf16.mxu0 0
        %1052 = vmatpush2.bf16.msra.mxu0 %v990
        %1053 = vmatprep.subr.bf16.mxu0 0
        %1054 = vmatpush2.bf16.msra.mxu0 %v989
        %1055 = vmatprep.subr.bf16.mxu0 0
        %1056 = vmatpush2.bf16.msra.mxu0 %v988
        %1057 = vmatprep.subr.bf16.mxu0 0
        %1058 = vmatpush2.bf16.msra.mxu0 %v987
        %1059 = vmatprep.mubr.bf16.mxu0 %v722
        %1060 = vmatmul.mubr.bf16.gmra.mxu0 %v721
        %v1061 = vpop.f32.mrf.mxu0
        %v1062 = vadd.f32 0.0, %v1061
        %v1063 = vpop.f32.mrf.mxu0
        %v1064 = vpop.f32.mrf.mxu0
        %v1065 = vadd.f32 0.0, %v1064
        %v1066 = vpop.f32.mrf.mxu0
        %1067 = vmatprep.mubr.bf16.mxu0 %v725
        %1068 = vmatmul.mubr.bf16.gmra.mxu0 %v724
        %v1069 = vpop.f32.mrf.mxu0
        %v1070 = vadd.f32 0.0, %v1069
        %v1071 = vpop.f32.mrf.mxu0
        %v1072 = vpop.f32.mrf.mxu0
        %v1073 = vadd.f32 0.0, %v1072
        %v1074 = vpop.f32.mrf.mxu0
        %1075 = vmatprep.mubr.bf16.mxu0 %v728
        %1076 = vmatmul.mubr.bf16.gmra.mxu0 %v727
        %v1077 = vpop.f32.mrf.mxu0
        %v1078 = vadd.f32 0.0, %v1077
        %v1079 = vpop.f32.mrf.mxu0
        %v1080 = vpop.f32.mrf.mxu0
        %v1081 = vadd.f32 0.0, %v1080
        %v1082 = vpop.f32.mrf.mxu0
        %1083 = vmatprep.mubr.bf16.mxu0 %v731
        %1084 = vmatmul.mubr.bf16.gmra.mxu0 %v730
        %v1085 = vpop.f32.mrf.mxu0
        %v1086 = vadd.f32 0.0, %v1085
        %v1087 = vpop.f32.mrf.mxu0
        %v1088 = vpop.f32.mrf.mxu0
        %v1089 = vadd.f32 0.0, %v1088
        %v1090 = vpop.f32.mrf.mxu0
        %1091 = vmatprep.mubr.bf16.mxu0 %v734
        %1092 = vmatmul.mubr.bf16.gmra.mxu0 %v733
        %v1093 = vpop.f32.mrf.mxu0
        %v1094 = vadd.f32 0.0, %v1093
        %v1095 = vpop.f32.mrf.mxu0
        %v1096 = vpop.f32.mrf.mxu0
        %v1097 = vadd.f32 0.0, %v1096
        %v1098 = vpop.f32.mrf.mxu0
        %1099 = vmatprep.mubr.bf16.mxu0 %v737
        %1100 = vmatmul.mubr.bf16.gmra.mxu0 %v736
        %v1101 = vpop.f32.mrf.mxu0
        %v1102 = vadd.f32 0.0, %v1101
        %v1103 = vpop.f32.mrf.mxu0
        %v1104 = vpop.f32.mrf.mxu0
        %v1105 = vadd.f32 0.0, %v1104
        %v1106 = vpop.f32.mrf.mxu0
        %1107 = vmatprep.mubr.bf16.mxu0 %v740
        %1108 = vmatmul.mubr.bf16.gmra.mxu0 %v739
        %v1109 = vpop.f32.mrf.mxu0
        %v1110 = vadd.f32 0.0, %v1109
        %v1111 = vpop.f32.mrf.mxu0
        %v1112 = vpop.f32.mrf.mxu0
        %v1113 = vadd.f32 0.0, %v1112
        %v1114 = vpop.f32.mrf.mxu0
        %1115 = vmatprep.mubr.bf16.mxu0 %v743
        %1116 = vmatmul.mubr.bf16.gmra.mxu0 %v742
        %v1117 = vpop.f32.mrf.mxu0
        %v1118 = vadd.f32 0.0, %v1117
        %v1119 = vpop.f32.mrf.mxu0
        %v1120 = vpop.f32.mrf.mxu0
        %v1121 = vadd.f32 0.0, %v1120
        %v1122 = vpop.f32.mrf.mxu0
        %1123 = vmatprep.mubr.bf16.mxu0 %v746
        %1124 = vmatmul.mubr.bf16.gmra.mxu0 %v745
        %v1125 = vpop.f32.mrf.mxu0
        %v1126 = vadd.f32 0.0, %v1125
        %v1127 = vpop.f32.mrf.mxu0
        %v1128 = vpop.f32.mrf.mxu0
        %v1129 = vadd.f32 0.0, %v1128
        %v1130 = vpop.f32.mrf.mxu0
        %1131 = vmatprep.mubr.bf16.mxu0 %v749
        %1132 = vmatmul.mubr.bf16.gmra.mxu0 %v748
        %v1133 = vpop.f32.mrf.mxu0
        %v1134 = vadd.f32 0.0, %v1133
        %v1135 = vpop.f32.mrf.mxu0
        %v1136 = vpop.f32.mrf.mxu0
        %v1137 = vadd.f32 0.0, %v1136
        %v1138 = vpop.f32.mrf.mxu0
        %1139 = vmatprep.mubr.bf16.mxu0 %v752
        %1140 = vmatmul.mubr.bf16.gmra.mxu0 %v751
        %v1141 = vpop.f32.mrf.mxu0
        %v1142 = vadd.f32 0.0, %v1141
        %v1143 = vpop.f32.mrf.mxu0
        %v1144 = vpop.f32.mrf.mxu0
        %v1145 = vadd.f32 0.0, %v1144
        %v1146 = vpop.f32.mrf.mxu0
        %1147 = vmatprep.mubr.bf16.mxu0 %v755
        %1148 = vmatmul.mubr.bf16.gmra.mxu0 %v754
        %v1149 = vpop.f32.mrf.mxu0
        %v1150 = vadd.f32 0.0, %v1149
        %v1151 = vpop.f32.mrf.mxu0
        %v1152 = vpop.f32.mrf.mxu0
        %v1153 = vadd.f32 0.0, %v1152
        %v1154 = vpop.f32.mrf.mxu0
        %1155 = vmatprep.mubr.bf16.mxu0 %v758
        %1156 = vmatmul.mubr.bf16.gmra.mxu0 %v757
        %v1157 = vpop.f32.mrf.mxu0
        %v1158 = vadd.f32 0.0, %v1157
        %v1159 = vpop.f32.mrf.mxu0
        %v1160 = vpop.f32.mrf.mxu0
        %v1161 = vadd.f32 0.0, %v1160
        %v1162 = vpop.f32.mrf.mxu0
        %1163 = vmatprep.mubr.bf16.mxu0 %v761
        %1164 = vmatmul.mubr.bf16.gmra.mxu0 %v760
        %v1165 = vpop.f32.mrf.mxu0
        %v1166 = vadd.f32 0.0, %v1165
        %v1167 = vpop.f32.mrf.mxu0
        %v1168 = vpop.f32.mrf.mxu0
        %v1169 = vadd.f32 0.0, %v1168
        %v1170 = vpop.f32.mrf.mxu0
        %1171 = vmatprep.mubr.bf16.mxu0 %v764
        %1172 = vmatmul.mubr.bf16.gmra.mxu0 %v763
        %v1173 = vpop.f32.mrf.mxu0
        %v1174 = vadd.f32 0.0, %v1173
        %v1175 = vpop.f32.mrf.mxu0
        %v1176 = vpop.f32.mrf.mxu0
        %v1177 = vadd.f32 0.0, %v1176
        %v1178 = vpop.f32.mrf.mxu0
        %1179 = vmatprep.mubr.bf16.mxu0 %v832
        %1180 = vmatmul.mubr.bf16.gmra.mxu0 %v831
        %v1181 = vpop.f32.mrf.mxu0
        %v1182 = vadd.f32 0.0, %v1181
        %v1183 = vpop.f32.mrf.mxu0
        %v1184 = vpop.f32.mrf.mxu0
        %v1185 = vadd.f32 0.0, %v1184
        %v1186 = vpop.f32.mrf.mxu0
        %1187 = vdwg.mxu0
        %1188 = vmatprep.subr.bf16.mxu0 0
        %1189 = vmatpush1.bf16.msra.mxu0 %v1002
        %1190 = vmatprep.subr.bf16.mxu0 0
        %1191 = vmatpush1.bf16.msra.mxu0 %v1001
        %1192 = vmatprep.subr.bf16.mxu0 0
        %1193 = vmatpush1.bf16.msra.mxu0 %v1000
        %1194 = vmatprep.subr.bf16.mxu0 0
        %1195 = vmatpush1.bf16.msra.mxu0 %v999
        %1196 = vmatprep.subr.bf16.mxu0 0
        %1197 = vmatpush1.bf16.msra.mxu0 %v998
        %1198 = vmatprep.subr.bf16.mxu0 0
        %1199 = vmatpush1.bf16.msra.mxu0 %v997
        %1200 = vmatprep.subr.bf16.mxu0 0
        %1201 = vmatpush1.bf16.msra.mxu0 %v996
        %1202 = vmatprep.subr.bf16.mxu0 0
        %1203 = vmatpush1.bf16.msra.mxu0 %v995
        %1204 = vmatprep.subr.bf16.mxu0 0
        %1205 = vmatpush2.bf16.msra.mxu0 0
        %1206 = vmatprep.subr.bf16.mxu0 0
        %1207 = vmatpush2.bf16.msra.mxu0 0
        %1208 = vmatprep.subr.bf16.mxu0 0
        %1209 = vmatpush2.bf16.msra.mxu0 0
        %1210 = vmatprep.subr.bf16.mxu0 0
        %1211 = vmatpush2.bf16.msra.mxu0 0
        %1212 = vmatprep.subr.bf16.mxu0 0
        %1213 = vmatpush2.bf16.msra.mxu0 0
        %1214 = vmatprep.subr.bf16.mxu0 0
        %1215 = vmatpush2.bf16.msra.mxu0 0
        %1216 = vmatprep.subr.bf16.mxu0 0
        %1217 = vmatpush2.bf16.msra.mxu0 0
        %1218 = vmatprep.subr.bf16.mxu0 0
        %1219 = vmatpush2.bf16.msra.mxu0 0
        %1220 = vmatprep.mubr.bf16.mxu0 0
        %1221 = vmatmul.mubr.bf16.gmra.mxu0 %v723
        %v1222 = vpop.f32.mrf.mxu0
        %v1223 = vadd.f32 %v1062, %v1222
        %v1224 = vpop.f32.mrf.mxu0
        %v1225 = vpop.f32.mrf.mxu0
        %v1226 = vadd.f32 %v1065, %v1225
        %v1227 = vpop.f32.mrf.mxu0
        %1228 = vmatprep.mubr.bf16.mxu0 0
        %1229 = vmatmul.mubr.bf16.gmra.mxu0 %v726
        %v1230 = vpop.f32.mrf.mxu0
        %v1231 = vadd.f32 %v1070, %v1230
        %v1232 = vpop.f32.mrf.mxu0
        %v1233 = vpop.f32.mrf.mxu0
        %v1234 = vadd.f32 %v1073, %v1233
        %v1235 = vpop.f32.mrf.mxu0
        %1236 = vmatprep.mubr.bf16.mxu0 0
        %1237 = vmatmul.mubr.bf16.gmra.mxu0 %v729
        %v1238 = vpop.f32.mrf.mxu0
        %v1239 = vadd.f32 %v1078, %v1238
        %v1240 = vpop.f32.mrf.mxu0
        %v1241 = vpop.f32.mrf.mxu0
        %v1242 = vadd.f32 %v1081, %v1241
        %v1243 = vpop.f32.mrf.mxu0
        %1244 = vmatprep.mubr.bf16.mxu0 0
        %1245 = vmatmul.mubr.bf16.gmra.mxu0 %v732
        %v1246 = vpop.f32.mrf.mxu0
        %v1247 = vadd.f32 %v1086, %v1246
        %v1248 = vpop.f32.mrf.mxu0
        %v1249 = vpop.f32.mrf.mxu0
        %v1250 = vadd.f32 %v1089, %v1249
        %v1251 = vpop.f32.mrf.mxu0
        %1252 = vmatprep.mubr.bf16.mxu0 0
        %1253 = vmatmul.mubr.bf16.gmra.mxu0 %v735
        %v1254 = vpop.f32.mrf.mxu0
        %v1255 = vadd.f32 %v1094, %v1254
        %v1256 = vpop.f32.mrf.mxu0
        %v1257 = vpop.f32.mrf.mxu0
        %v1258 = vadd.f32 %v1097, %v1257
        %v1259 = vpop.f32.mrf.mxu0
        %1260 = vmatprep.mubr.bf16.mxu0 0
        %1261 = vmatmul.mubr.bf16.gmra.mxu0 %v738
        %v1262 = vpop.f32.mrf.mxu0
        %v1263 = vadd.f32 %v1102, %v1262
        %v1264 = vpop.f32.mrf.mxu0
        %v1265 = vpop.f32.mrf.mxu0
        %v1266 = vadd.f32 %v1105, %v1265
        %v1267 = vpop.f32.mrf.mxu0
        %1268 = vmatprep.mubr.bf16.mxu0 0
        %1269 = vmatmul.mubr.bf16.gmra.mxu0 %v741
        %v1270 = vpop.f32.mrf.mxu0
        %v1271 = vadd.f32 %v1110, %v1270
        %v1272 = vpop.f32.mrf.mxu0
        %v1273 = vpop.f32.mrf.mxu0
        %v1274 = vadd.f32 %v1113, %v1273
        %v1275 = vpop.f32.mrf.mxu0
        %1276 = vmatprep.mubr.bf16.mxu0 0
        %1277 = vmatmul.mubr.bf16.gmra.mxu0 %v744
        %v1278 = vpop.f32.mrf.mxu0
        %v1279 = vadd.f32 %v1118, %v1278
        %v1280 = vpop.f32.mrf.mxu0
        %v1281 = vpop.f32.mrf.mxu0
        %v1282 = vadd.f32 %v1121, %v1281
        %v1283 = vpop.f32.mrf.mxu0
        %1284 = vmatprep.mubr.bf16.mxu0 0
        %1285 = vmatmul.mubr.bf16.gmra.mxu0 %v747
        %v1286 = vpop.f32.mrf.mxu0
        %v1287 = vadd.f32 %v1126, %v1286
        %v1288 = vpop.f32.mrf.mxu0
        %v1289 = vpop.f32.mrf.mxu0
        %v1290 = vadd.f32 %v1129, %v1289
        %v1291 = vpop.f32.mrf.mxu0
        %1292 = vmatprep.mubr.bf16.mxu0 0
        %1293 = vmatmul.mubr.bf16.gmra.mxu0 %v750
        %v1294 = vpop.f32.mrf.mxu0
        %v1295 = vadd.f32 %v1134, %v1294
        %v1296 = vpop.f32.mrf.mxu0
        %v1297 = vpop.f32.mrf.mxu0
        %v1298 = vadd.f32 %v1137, %v1297
        %v1299 = vpop.f32.mrf.mxu0
        %1300 = vmatprep.mubr.bf16.mxu0 0
        %1301 = vmatmul.mubr.bf16.gmra.mxu0 %v753
        %v1302 = vpop.f32.mrf.mxu0
        %v1303 = vadd.f32 %v1142, %v1302
        %v1304 = vpop.f32.mrf.mxu0
        %v1305 = vpop.f32.mrf.mxu0
        %v1306 = vadd.f32 %v1145, %v1305
        %v1307 = vpop.f32.mrf.mxu0
        %1308 = vmatprep.mubr.bf16.mxu0 0
        %1309 = vmatmul.mubr.bf16.gmra.mxu0 %v756
        %v1310 = vpop.f32.mrf.mxu0
        %v1311 = vadd.f32 %v1150, %v1310
        %v1312 = vpop.f32.mrf.mxu0
        %v1313 = vpop.f32.mrf.mxu0
        %v1314 = vadd.f32 %v1153, %v1313
        %v1315 = vpop.f32.mrf.mxu0
        %1316 = vmatprep.mubr.bf16.mxu0 0
        %1317 = vmatmul.mubr.bf16.gmra.mxu0 %v759
        %v1318 = vpop.f32.mrf.mxu0
        %v1319 = vadd.f32 %v1158, %v1318
        %v1320 = vpop.f32.mrf.mxu0
        %v1321 = vpop.f32.mrf.mxu0
        %v1322 = vadd.f32 %v1161, %v1321
        %v1323 = vpop.f32.mrf.mxu0
        %1324 = vmatprep.mubr.bf16.mxu0 0
        %1325 = vmatmul.mubr.bf16.gmra.mxu0 %v762
        %v1326 = vpop.f32.mrf.mxu0
        %v1327 = vadd.f32 %v1166, %v1326
        %v1328 = vpop.f32.mrf.mxu0
        %v1329 = vpop.f32.mrf.mxu0
        %v1330 = vadd.f32 %v1169, %v1329
        %v1331 = vpop.f32.mrf.mxu0
        %1332 = vmatprep.mubr.bf16.mxu0 0
        %1333 = vmatmul.mubr.bf16.gmra.mxu0 %v765
        %v1334 = vpop.f32.mrf.mxu0
        %v1335 = vadd.f32 %v1174, %v1334
        %v1336 = vpop.f32.mrf.mxu0
        %v1337 = vpop.f32.mrf.mxu0
        %v1338 = vadd.f32 %v1177, %v1337
        %v1339 = vpop.f32.mrf.mxu0
        %1340 = vmatprep.mubr.bf16.mxu0 0
        %1341 = vmatmul.mubr.bf16.gmra.mxu0 %v833
        %v1342 = vpop.f32.mrf.mxu0
        %v1343 = vadd.f32 %v1182, %v1342
        %v1344 = vpop.f32.mrf.mxu0
        %v1345 = vpop.f32.mrf.mxu0
        %v1346 = vadd.f32 %v1185, %v1345
        %v1347 = vpop.f32.mrf.mxu0
        %1348 = vdwg.mxu0
        %v1397 = vunpack.c.l.b16 %v766
        %v1398 = vunpack.c.l.b16 %v767
        %v1399 = vunpack.c.l.b16 %v768
        %v1400 = vunpack.c.l.b16 %v769
        %v1401 = vunpack.c.l.b16 %v770
        %v1402 = vunpack.c.l.b16 %v771
        %v1403 = vunpack.c.l.b16 %v772
        %v1404 = vunpack.c.l.b16 %v773
        %v1405 = vunpack.c.l.b16 %v774
        %v1406 = vunpack.c.l.b16 %v775
        %v1407 = vunpack.c.l.b16 %v776
        %v1408 = vunpack.c.l.b16 %v777
        %v1409 = vunpack.c.l.b16 %v778
        %v1410 = vunpack.c.l.b16 %v779
        %v1411 = vunpack.c.l.b16 %v780
        %v1412 = vunpack.c.l.b16 %v781
        %v1413 = vunpack.c.l.b16 %v782
        %v1414 = vunpack.c.l.b16 %v783
        %v1415 = vunpack.c.l.b16 %v784
        %v1416 = vunpack.c.l.b16 %v785
        %v1417 = vunpack.c.l.b16 %v786
        %v1418 = vunpack.c.l.b16 %v787
        %v1419 = vunpack.c.l.b16 %v788
        %v1420 = vunpack.c.l.b16 %v789
        %v1421 = vunpack.c.l.b16 %v790
        %v1422 = vunpack.c.l.b16 %v791
        %v1423 = vunpack.c.l.b16 %v792
        %v1424 = vunpack.c.l.b16 %v793
        %v1425 = vunpack.c.l.b16 %v794
        %v1426 = vunpack.c.l.b16 %v795
        %v1427 = vunpack.c.l.b16 %v796
        %v1428 = vunpack.c.l.b16 %v797
        %v1429 = vunpack.c.l.b16 %v798
        %v1430 = vunpack.c.l.b16 %v799
        %v1431 = vunpack.c.l.b16 %v800
        %v1432 = vunpack.c.l.b16 %v801
        %v1433 = vunpack.c.l.b16 %v802
        %v1434 = vunpack.c.l.b16 %v803
        %v1435 = vunpack.c.l.b16 %v804
        %v1436 = vunpack.c.l.b16 %v805
        %v1437 = vunpack.c.l.b16 %v806
        %v1438 = vunpack.c.l.b16 %v807
        %v1439 = vunpack.c.l.b16 %v808
        %v1440 = vunpack.c.l.b16 %v809
        %v1441 = vunpack.c.l.b16 %v810
        %v1442 = vunpack.c.l.b16 %v811
        %v1443 = vunpack.c.l.b16 %v812
        %v1444 = vunpack.c.l.b16 %v813
        %v1445 = vpack.c.b16 %v1398, %v1397
        %v1446 = vpack.c.b16 %v1400, %v1399
        %v1447 = vpack.c.b16 %v1402, %v1401
        %v1448 = vpack.c.b16 %v1404, %v1403
        %v1449 = vpack.c.b16 %v1406, %v1405
        %v1450 = vpack.c.b16 %v1408, %v1407
        %v1451 = vpack.c.b16 %v1410, %v1409
        %v1452 = vpack.c.b16 %v1412, %v1411
        %v1453 = vpack.c.b16 %v1414, %v1413
        %v1454 = vpack.c.b16 %v1416, %v1415
        %v1455 = vpack.c.b16 %v1418, %v1417
        %v1456 = vpack.c.b16 %v1420, %v1419
        %v1457 = vpack.c.b16 %v1422, %v1421
        %v1458 = vpack.c.b16 %v1424, %v1423
        %v1459 = vpack.c.b16 %v1426, %v1425
        %v1460 = vpack.c.b16 %v1428, %v1427
        %v1461 = vpack.c.b16 %v1430, %v1429
        %v1462 = vpack.c.b16 %v1432, %v1431
        %v1463 = vpack.c.b16 %v1434, %v1433
        %v1464 = vpack.c.b16 %v1436, %v1435
        %v1465 = vpack.c.b16 %v1438, %v1437
        %v1466 = vpack.c.b16 %v1440, %v1439
        %v1467 = vpack.c.b16 %v1442, %v1441
        %v1468 = vpack.c.b16 %v1444, %v1443
        %1493 = vmatprep.subr.bf16.mxu0 0
        %1494 = vmatpush1.bf16.msra.mxu0 %v1452
        %1495 = vmatprep.subr.bf16.mxu0 0
        %1496 = vmatpush1.bf16.msra.mxu0 %v1451
        %1497 = vmatprep.subr.bf16.mxu0 0
        %1498 = vmatpush1.bf16.msra.mxu0 %v1450
        %1499 = vmatprep.subr.bf16.mxu0 0
        %1500 = vmatpush1.bf16.msra.mxu0 %v1449
        %1501 = vmatprep.subr.bf16.mxu0 0
        %1502 = vmatpush1.bf16.msra.mxu0 %v1448
        %1503 = vmatprep.subr.bf16.mxu0 0
        %1504 = vmatpush1.bf16.msra.mxu0 %v1447
        %1505 = vmatprep.subr.bf16.mxu0 0
        %1506 = vmatpush1.bf16.msra.mxu0 %v1446
        %1507 = vmatprep.subr.bf16.mxu0 0
        %1508 = vmatpush1.bf16.msra.mxu0 %v1445
        %1509 = vmatprep.subr.bf16.mxu0 0
        %1510 = vmatpush2.bf16.msra.mxu0 %v1460
        %1511 = vmatprep.subr.bf16.mxu0 0
        %1512 = vmatpush2.bf16.msra.mxu0 %v1459
        %1513 = vmatprep.subr.bf16.mxu0 0
        %1514 = vmatpush2.bf16.msra.mxu0 %v1458
        %1515 = vmatprep.subr.bf16.mxu0 0
        %1516 = vmatpush2.bf16.msra.mxu0 %v1457
        %1517 = vmatprep.subr.bf16.mxu0 0
        %1518 = vmatpush2.bf16.msra.mxu0 %v1456
        %1519 = vmatprep.subr.bf16.mxu0 0
        %1520 = vmatpush2.bf16.msra.mxu0 %v1455
        %1521 = vmatprep.subr.bf16.mxu0 0
        %1522 = vmatpush2.bf16.msra.mxu0 %v1454
        %1523 = vmatprep.subr.bf16.mxu0 0
        %1524 = vmatpush2.bf16.msra.mxu0 %v1453
        %1525 = vmatprep.mubr.bf16.mxu0 %v719
        %1526 = vmatmul.mubr.bf16.gmra.mxu0 %v718
        %v1527 = vpop.f32.mrf.mxu0
        %v1528 = vadd.f32 %v1223, %v1527
        %v1529 = vpop.f32.mrf.mxu0
        %v1530 = vpop.f32.mrf.mxu0
        %v1531 = vadd.f32 %v1226, %v1530
        %v1532 = vpop.f32.mrf.mxu0
        %1533 = vmatprep.mubr.bf16.mxu0 %v722
        %1534 = vmatmul.mubr.bf16.gmra.mxu0 %v721
        %v1535 = vpop.f32.mrf.mxu0
        %v1536 = vadd.f32 %v1231, %v1535
        %v1537 = vpop.f32.mrf.mxu0
        %v1538 = vpop.f32.mrf.mxu0
        %v1539 = vadd.f32 %v1234, %v1538
        %v1540 = vpop.f32.mrf.mxu0
        %1541 = vmatprep.mubr.bf16.mxu0 %v725
        %1542 = vmatmul.mubr.bf16.gmra.mxu0 %v724
        %v1543 = vpop.f32.mrf.mxu0
        %v1544 = vadd.f32 %v1239, %v1543
        %v1545 = vpop.f32.mrf.mxu0
        %v1546 = vpop.f32.mrf.mxu0
        %v1547 = vadd.f32 %v1242, %v1546
        %v1548 = vpop.f32.mrf.mxu0
        %1549 = vmatprep.mubr.bf16.mxu0 %v728
        %1550 = vmatmul.mubr.bf16.gmra.mxu0 %v727
        %v1551 = vpop.f32.mrf.mxu0
        %v1552 = vadd.f32 %v1247, %v1551
        %v1553 = vpop.f32.mrf.mxu0
        %v1554 = vpop.f32.mrf.mxu0
        %v1555 = vadd.f32 %v1250, %v1554
        %v1556 = vpop.f32.mrf.mxu0
        %1557 = vmatprep.mubr.bf16.mxu0 %v731
        %1558 = vmatmul.mubr.bf16.gmra.mxu0 %v730
        %v1559 = vpop.f32.mrf.mxu0
        %v1560 = vadd.f32 %v1255, %v1559
        %v1561 = vpop.f32.mrf.mxu0
        %v1562 = vpop.f32.mrf.mxu0
        %v1563 = vadd.f32 %v1258, %v1562
        %v1564 = vpop.f32.mrf.mxu0
        %1565 = vmatprep.mubr.bf16.mxu0 %v734
        %1566 = vmatmul.mubr.bf16.gmra.mxu0 %v733
        %v1567 = vpop.f32.mrf.mxu0
        %v1568 = vadd.f32 %v1263, %v1567
        %v1569 = vpop.f32.mrf.mxu0
        %v1570 = vpop.f32.mrf.mxu0
        %v1571 = vadd.f32 %v1266, %v1570
        %v1572 = vpop.f32.mrf.mxu0
        %1573 = vmatprep.mubr.bf16.mxu0 %v737
        %1574 = vmatmul.mubr.bf16.gmra.mxu0 %v736
        %v1575 = vpop.f32.mrf.mxu0
        %v1576 = vadd.f32 %v1271, %v1575
        %v1577 = vpop.f32.mrf.mxu0
        %v1578 = vpop.f32.mrf.mxu0
        %v1579 = vadd.f32 %v1274, %v1578
        %v1580 = vpop.f32.mrf.mxu0
        %1581 = vmatprep.mubr.bf16.mxu0 %v740
        %1582 = vmatmul.mubr.bf16.gmra.mxu0 %v739
        %v1583 = vpop.f32.mrf.mxu0
        %v1584 = vadd.f32 %v1279, %v1583
        %v1585 = vpop.f32.mrf.mxu0
        %v1586 = vpop.f32.mrf.mxu0
        %v1587 = vadd.f32 %v1282, %v1586
        %v1588 = vpop.f32.mrf.mxu0
        %1589 = vmatprep.mubr.bf16.mxu0 %v743
        %1590 = vmatmul.mubr.bf16.gmra.mxu0 %v742
        %v1591 = vpop.f32.mrf.mxu0
        %v1592 = vadd.f32 %v1287, %v1591
        %v1593 = vpop.f32.mrf.mxu0
        %v1594 = vpop.f32.mrf.mxu0
        %v1595 = vadd.f32 %v1290, %v1594
        %v1596 = vpop.f32.mrf.mxu0
        %1597 = vmatprep.mubr.bf16.mxu0 %v746
        %1598 = vmatmul.mubr.bf16.gmra.mxu0 %v745
        %v1599 = vpop.f32.mrf.mxu0
        %v1600 = vadd.f32 %v1295, %v1599
        %v1601 = vpop.f32.mrf.mxu0
        %v1602 = vpop.f32.mrf.mxu0
        %v1603 = vadd.f32 %v1298, %v1602
        %v1604 = vpop.f32.mrf.mxu0
        %1605 = vmatprep.mubr.bf16.mxu0 %v749
        %1606 = vmatmul.mubr.bf16.gmra.mxu0 %v748
        %v1607 = vpop.f32.mrf.mxu0
        %v1608 = vadd.f32 %v1303, %v1607
        %v1609 = vpop.f32.mrf.mxu0
        %v1610 = vpop.f32.mrf.mxu0
        %v1611 = vadd.f32 %v1306, %v1610
        %v1612 = vpop.f32.mrf.mxu0
        %1613 = vmatprep.mubr.bf16.mxu0 %v752
        %1614 = vmatmul.mubr.bf16.gmra.mxu0 %v751
        %v1615 = vpop.f32.mrf.mxu0
        %v1616 = vadd.f32 %v1311, %v1615
        %v1617 = vpop.f32.mrf.mxu0
        %v1618 = vpop.f32.mrf.mxu0
        %v1619 = vadd.f32 %v1314, %v1618
        %v1620 = vpop.f32.mrf.mxu0
        %1621 = vmatprep.mubr.bf16.mxu0 %v755
        %1622 = vmatmul.mubr.bf16.gmra.mxu0 %v754
        %v1623 = vpop.f32.mrf.mxu0
        %v1624 = vadd.f32 %v1319, %v1623
        %v1625 = vpop.f32.mrf.mxu0
        %v1626 = vpop.f32.mrf.mxu0
        %v1627 = vadd.f32 %v1322, %v1626
        %v1628 = vpop.f32.mrf.mxu0
        %1629 = vmatprep.mubr.bf16.mxu0 %v758
        %1630 = vmatmul.mubr.bf16.gmra.mxu0 %v757
        %v1631 = vpop.f32.mrf.mxu0
        %v1632 = vadd.f32 %v1327, %v1631
        %v1633 = vpop.f32.mrf.mxu0
        %v1634 = vpop.f32.mrf.mxu0
        %v1635 = vadd.f32 %v1330, %v1634
        %v1636 = vpop.f32.mrf.mxu0
        %1637 = vmatprep.mubr.bf16.mxu0 %v761
        %1638 = vmatmul.mubr.bf16.gmra.mxu0 %v760
        %v1639 = vpop.f32.mrf.mxu0
        %v1640 = vadd.f32 %v1335, %v1639
        %v1641 = vpop.f32.mrf.mxu0
        %v1642 = vpop.f32.mrf.mxu0
        %v1643 = vadd.f32 %v1338, %v1642
        %v1644 = vpop.f32.mrf.mxu0
        %1645 = vmatprep.mubr.bf16.mxu0 %v764
        %1646 = vmatmul.mubr.bf16.gmra.mxu0 %v763
        %v1647 = vpop.f32.mrf.mxu0
        %v1648 = vadd.f32 %v1343, %v1647
        %v1649 = vpop.f32.mrf.mxu0
        %v1650 = vpop.f32.mrf.mxu0
        %v1651 = vadd.f32 %v1346, %v1650
        %v1652 = vpop.f32.mrf.mxu0
        %1653 = vdwg.mxu0
        %1654 = vmatprep.subr.bf16.mxu0 0
        %1655 = vmatpush1.bf16.msra.mxu0 %v1468
        %1656 = vmatprep.subr.bf16.mxu0 0
        %1657 = vmatpush1.bf16.msra.mxu0 %v1467
        %1658 = vmatprep.subr.bf16.mxu0 0
        %1659 = vmatpush1.bf16.msra.mxu0 %v1466
        %1660 = vmatprep.subr.bf16.mxu0 0
        %1661 = vmatpush1.bf16.msra.mxu0 %v1465
        %1662 = vmatprep.subr.bf16.mxu0 0
        %1663 = vmatpush1.bf16.msra.mxu0 %v1464
        %1664 = vmatprep.subr.bf16.mxu0 0
        %1665 = vmatpush1.bf16.msra.mxu0 %v1463
        %1666 = vmatprep.subr.bf16.mxu0 0
        %1667 = vmatpush1.bf16.msra.mxu0 %v1462
        %1668 = vmatprep.subr.bf16.mxu0 0
        %1669 = vmatpush1.bf16.msra.mxu0 %v1461
        %1670 = vmatprep.subr.bf16.mxu0 0
        %1671 = vmatpush2.bf16.msra.mxu0 0
        %1672 = vmatprep.subr.bf16.mxu0 0
        %1673 = vmatpush2.bf16.msra.mxu0 0
        %1674 = vmatprep.subr.bf16.mxu0 0
        %1675 = vmatpush2.bf16.msra.mxu0 0
        %1676 = vmatprep.subr.bf16.mxu0 0
        %1677 = vmatpush2.bf16.msra.mxu0 0
        %1678 = vmatprep.subr.bf16.mxu0 0
        %1679 = vmatpush2.bf16.msra.mxu0 0
        %1680 = vmatprep.subr.bf16.mxu0 0
        %1681 = vmatpush2.bf16.msra.mxu0 0
        %1682 = vmatprep.subr.bf16.mxu0 0
        %1683 = vmatpush2.bf16.msra.mxu0 0
        %1684 = vmatprep.subr.bf16.mxu0 0
        %1685 = vmatpush2.bf16.msra.mxu0 0
        %1686 = vmatprep.mubr.bf16.mxu0 0
        %1687 = vmatmul.mubr.bf16.gmra.mxu0 %v720
        %v1688 = vpop.f32.mrf.mxu0
        %v1689 = vadd.f32 %v1528, %v1688
        %v1690 = vpop.f32.mrf.mxu0
        %v1691 = vpop.f32.mrf.mxu0
        %v1692 = vadd.f32 %v1531, %v1691
        %v1693 = vpop.f32.mrf.mxu0
        %1694 = vmatprep.mubr.bf16.mxu0 0
        %1695 = vmatmul.mubr.bf16.gmra.mxu0 %v723
        %v1696 = vpop.f32.mrf.mxu0
        %v1697 = vadd.f32 %v1536, %v1696
        %v1698 = vpop.f32.mrf.mxu0
        %v1699 = vpop.f32.mrf.mxu0
        %v1700 = vadd.f32 %v1539, %v1699
        %v1701 = vpop.f32.mrf.mxu0
        %1702 = vmatprep.mubr.bf16.mxu0 0
        %1703 = vmatmul.mubr.bf16.gmra.mxu0 %v726
        %v1704 = vpop.f32.mrf.mxu0
        %v1705 = vadd.f32 %v1544, %v1704
        %v1706 = vpop.f32.mrf.mxu0
        %v1707 = vpop.f32.mrf.mxu0
        %v1708 = vadd.f32 %v1547, %v1707
        %v1709 = vpop.f32.mrf.mxu0
        %1710 = vmatprep.mubr.bf16.mxu0 0
        %1711 = vmatmul.mubr.bf16.gmra.mxu0 %v729
        %v1712 = vpop.f32.mrf.mxu0
        %v1713 = vadd.f32 %v1552, %v1712
        %v1714 = vpop.f32.mrf.mxu0
        %v1715 = vpop.f32.mrf.mxu0
        %v1716 = vadd.f32 %v1555, %v1715
        %v1717 = vpop.f32.mrf.mxu0
        %1718 = vmatprep.mubr.bf16.mxu0 0
        %1719 = vmatmul.mubr.bf16.gmra.mxu0 %v732
        %v1720 = vpop.f32.mrf.mxu0
        %v1721 = vadd.f32 %v1560, %v1720
        %v1722 = vpop.f32.mrf.mxu0
        %v1723 = vpop.f32.mrf.mxu0
        %v1724 = vadd.f32 %v1563, %v1723
        %v1725 = vpop.f32.mrf.mxu0
        %1726 = vmatprep.mubr.bf16.mxu0 0
        %1727 = vmatmul.mubr.bf16.gmra.mxu0 %v735
        %v1728 = vpop.f32.mrf.mxu0
        %v1729 = vadd.f32 %v1568, %v1728
        %v1730 = vpop.f32.mrf.mxu0
        %v1731 = vpop.f32.mrf.mxu0
        %v1732 = vadd.f32 %v1571, %v1731
        %v1733 = vpop.f32.mrf.mxu0
        %1734 = vmatprep.mubr.bf16.mxu0 0
        %1735 = vmatmul.mubr.bf16.gmra.mxu0 %v738
        %v1736 = vpop.f32.mrf.mxu0
        %v1737 = vadd.f32 %v1576, %v1736
        %v1738 = vpop.f32.mrf.mxu0
        %v1739 = vpop.f32.mrf.mxu0
        %v1740 = vadd.f32 %v1579, %v1739
        %v1741 = vpop.f32.mrf.mxu0
        %1742 = vmatprep.mubr.bf16.mxu0 0
        %1743 = vmatmul.mubr.bf16.gmra.mxu0 %v741
        %v1744 = vpop.f32.mrf.mxu0
        %v1745 = vadd.f32 %v1584, %v1744
        %v1746 = vpop.f32.mrf.mxu0
        %v1747 = vpop.f32.mrf.mxu0
        %v1748 = vadd.f32 %v1587, %v1747
        %v1749 = vpop.f32.mrf.mxu0
        %1750 = vmatprep.mubr.bf16.mxu0 0
        %1751 = vmatmul.mubr.bf16.gmra.mxu0 %v744
        %v1752 = vpop.f32.mrf.mxu0
        %v1753 = vadd.f32 %v1592, %v1752
        %v1754 = vpop.f32.mrf.mxu0
        %v1755 = vpop.f32.mrf.mxu0
        %v1756 = vadd.f32 %v1595, %v1755
        %v1757 = vpop.f32.mrf.mxu0
        %1758 = vmatprep.mubr.bf16.mxu0 0
        %1759 = vmatmul.mubr.bf16.gmra.mxu0 %v747
        %v1760 = vpop.f32.mrf.mxu0
        %v1761 = vadd.f32 %v1600, %v1760
        %v1762 = vpop.f32.mrf.mxu0
        %v1763 = vpop.f32.mrf.mxu0
        %v1764 = vadd.f32 %v1603, %v1763
        %v1765 = vpop.f32.mrf.mxu0
        %1766 = vmatprep.mubr.bf16.mxu0 0
        %1767 = vmatmul.mubr.bf16.gmra.mxu0 %v750
        %v1768 = vpop.f32.mrf.mxu0
        %v1769 = vadd.f32 %v1608, %v1768
        %v1770 = vpop.f32.mrf.mxu0
        %v1771 = vpop.f32.mrf.mxu0
        %v1772 = vadd.f32 %v1611, %v1771
        %v1773 = vpop.f32.mrf.mxu0
        %1774 = vmatprep.mubr.bf16.mxu0 0
        %1775 = vmatmul.mubr.bf16.gmra.mxu0 %v753
        %v1776 = vpop.f32.mrf.mxu0
        %v1777 = vadd.f32 %v1616, %v1776
        %v1778 = vpop.f32.mrf.mxu0
        %v1779 = vpop.f32.mrf.mxu0
        %v1780 = vadd.f32 %v1619, %v1779
        %v1781 = vpop.f32.mrf.mxu0
        %1782 = vmatprep.mubr.bf16.mxu0 0
        %1783 = vmatmul.mubr.bf16.gmra.mxu0 %v756
        %v1784 = vpop.f32.mrf.mxu0
        %v1785 = vadd.f32 %v1624, %v1784
        %v1786 = vpop.f32.mrf.mxu0
        %v1787 = vpop.f32.mrf.mxu0
        %v1788 = vadd.f32 %v1627, %v1787
        %v1789 = vpop.f32.mrf.mxu0
        %1790 = vmatprep.mubr.bf16.mxu0 0
        %1791 = vmatmul.mubr.bf16.gmra.mxu0 %v759
        %v1792 = vpop.f32.mrf.mxu0
        %v1793 = vadd.f32 %v1632, %v1792
        %v1794 = vpop.f32.mrf.mxu0
        %v1795 = vpop.f32.mrf.mxu0
        %v1796 = vadd.f32 %v1635, %v1795
        %v1797 = vpop.f32.mrf.mxu0
        %1798 = vmatprep.mubr.bf16.mxu0 0
        %1799 = vmatmul.mubr.bf16.gmra.mxu0 %v762
        %v1800 = vpop.f32.mrf.mxu0
        %v1801 = vadd.f32 %v1640, %v1800
        %v1802 = vpop.f32.mrf.mxu0
        %v1803 = vpop.f32.mrf.mxu0
        %v1804 = vadd.f32 %v1643, %v1803
        %v1805 = vpop.f32.mrf.mxu0
        %1806 = vmatprep.mubr.bf16.mxu0 0
        %1807 = vmatmul.mubr.bf16.gmra.mxu0 %v765
        %v1808 = vpop.f32.mrf.mxu0
        %v1809 = vadd.f32 %v1648, %v1808
        %v1810 = vpop.f32.mrf.mxu0
        %v1811 = vpop.f32.mrf.mxu0
        %v1812 = vadd.f32 %v1651, %v1811
        %v1813 = vpop.f32.mrf.mxu0
        %1814 = vdwg.mxu0
        %v1818 = vrot.slane %v441, 1
        %v1819 = vrot.slane %v442, 1
        %v1820 = vsel %vm492, %v1818, %v1819
        %v1821 = vrot.slane %v443, 1
        %v1822 = vsel %vm492, %v1819, %v1821
        %v1825 = vrot.slane %v441, 2
        %v1826 = vrot.slane %v442, 2
        %v1827 = vsel %vm605, %v1825, %v1826
        %v1828 = vrot.slane %v443, 2
        %v1829 = vsel %vm605, %v1826, %v1828
        %v1832 = vpack.c.bf16 %v442, %v441
        %v1833 = vpack.c.bf16 %v1822, %v1820
        %v1834 = vpack.c.bf16 %v1829, %v1827
        %s1835 = scalar_lea.vmem %s1, 384
        %v1836 = vld [vmem:[%s1835] sm:$0xf]
        %v1837 = vld [vmem:[%s1835 + $0x4] sm:$0xf]
        %v1838 = vld [vmem:[%s1835 + $0x8] sm:$0xf]
        %v1839 = vld [vmem:[%s1835 + $0xc] sm:$0xf]
        %v1840 = vld [vmem:[%s1835 + $0x10] sm:$0xf]
        %v1841 = vld [vmem:[%s1835 + $0x14] sm:$0xf]
        %v1842 = vld [vmem:[%s1835 + $0x18] sm:$0xf]
        %v1843 = vld [vmem:[%s1835 + $0x1c] sm:$0xf]
        %v1844 = vld [vmem:[%s1835 + $0x20] sm:$0xf]
        %v1845 = vld [vmem:[%s1835 + $0x24] sm:$0xf]
        %v1846 = vld [vmem:[%s1835 + $0x28] sm:$0xf]
        %v1847 = vld [vmem:[%s1835 + $0x2c] sm:$0xf]
        %v1848 = vld [vmem:[%s1835 + $0x30] sm:$0xf]
        %v1849 = vld [vmem:[%s1835 + $0x34] sm:$0xf]
        %v1850 = vld [vmem:[%s1835 + $0x38] sm:$0xf]
        %v1851 = vld [vmem:[%s1835 + $0x3c] sm:$0xf]
        %v1852 = vld [vmem:[%s1835 + $0x40] sm:$0xf]
        %v1853 = vld [vmem:[%s1835 + $0x44] sm:$0xf]
        %v1854 = vld [vmem:[%s1835 + $0x48] sm:$0xf]
        %v1855 = vld [vmem:[%s1835 + $0x4c] sm:$0xf]
        %v1856 = vld [vmem:[%s1835 + $0x50] sm:$0xf]
        %v1857 = vld [vmem:[%s1835 + $0x54] sm:$0xf]
        %v1858 = vld [vmem:[%s1835 + $0x58] sm:$0xf]
        %v1859 = vld [vmem:[%s1835 + $0x5c] sm:$0xf]
        %v1860 = vld [vmem:[%s1835 + $0x60] sm:$0xf]
        %v1861 = vld [vmem:[%s1835 + $0x64] sm:$0xf]
        %v1862 = vld [vmem:[%s1835 + $0x68] sm:$0xf]
        %v1863 = vld [vmem:[%s1835 + $0x6c] sm:$0xf]
        %v1864 = vld [vmem:[%s1835 + $0x70] sm:$0xf]
        %v1865 = vld [vmem:[%s1835 + $0x74] sm:$0xf]
        %v1866 = vld [vmem:[%s1835 + $0x78] sm:$0xf]
        %v1867 = vld [vmem:[%s1835 + $0x7c] sm:$0xf]
        %v1868 = vld [vmem:[%s1835 + $0x80] sm:$0xf]
        %v1869 = vld [vmem:[%s1835 + $0x84] sm:$0xf]
        %v1870 = vld [vmem:[%s1835 + $0x88] sm:$0xf]
        %v1871 = vld [vmem:[%s1835 + $0x8c] sm:$0xf]
        %v1872 = vld [vmem:[%s1835 + $0x90] sm:$0xf]
        %v1873 = vld [vmem:[%s1835 + $0x94] sm:$0xf]
        %v1874 = vld [vmem:[%s1835 + $0x98] sm:$0xf]
        %v1875 = vld [vmem:[%s1835 + $0x9c] sm:$0xf]
        %v1876 = vld [vmem:[%s1835 + $0xa0] sm:$0xf]
        %v1877 = vld [vmem:[%s1835 + $0xa4] sm:$0xf]
        %v1878 = vld [vmem:[%s1835 + $0xa8] sm:$0xf]
        %v1879 = vld [vmem:[%s1835 + $0xac] sm:$0xf]
        %v1880 = vld [vmem:[%s1835 + $0xb0] sm:$0xf]
        %v1881 = vld [vmem:[%s1835 + $0xb4] sm:$0xf]
        %v1882 = vld [vmem:[%s1835 + $0xb8] sm:$0xf]
        %v1883 = vld [vmem:[%s1835 + $0xbc] sm:$0xf]
        %v1932 = vunpack.c.l.b16 %v1836
        %v1933 = vunpack.c.l.b16 %v1837
        %v1934 = vunpack.c.l.b16 %v1838
        %v1935 = vunpack.c.l.b16 %v1839
        %v1936 = vunpack.c.l.b16 %v1840
        %v1937 = vunpack.c.l.b16 %v1841
        %v1938 = vunpack.c.l.b16 %v1842
        %v1939 = vunpack.c.l.b16 %v1843
        %v1940 = vunpack.c.l.b16 %v1844
        %v1941 = vunpack.c.l.b16 %v1845
        %v1942 = vunpack.c.l.b16 %v1846
        %v1943 = vunpack.c.l.b16 %v1847
        %v1944 = vunpack.c.l.b16 %v1848
        %v1945 = vunpack.c.l.b16 %v1849
        %v1946 = vunpack.c.l.b16 %v1850
        %v1947 = vunpack.c.l.b16 %v1851
        %v1948 = vunpack.c.l.b16 %v1852
        %v1949 = vunpack.c.l.b16 %v1853
        %v1950 = vunpack.c.l.b16 %v1854
        %v1951 = vunpack.c.l.b16 %v1855
        %v1952 = vunpack.c.l.b16 %v1856
        %v1953 = vunpack.c.l.b16 %v1857
        %v1954 = vunpack.c.l.b16 %v1858
        %v1955 = vunpack.c.l.b16 %v1859
        %v1956 = vunpack.c.l.b16 %v1860
        %v1957 = vunpack.c.l.b16 %v1861
        %v1958 = vunpack.c.l.b16 %v1862
        %v1959 = vunpack.c.l.b16 %v1863
        %v1960 = vunpack.c.l.b16 %v1864
        %v1961 = vunpack.c.l.b16 %v1865
        %v1962 = vunpack.c.l.b16 %v1866
        %v1963 = vunpack.c.l.b16 %v1867
        %v1964 = vunpack.c.l.b16 %v1868
        %v1965 = vunpack.c.l.b16 %v1869
        %v1966 = vunpack.c.l.b16 %v1870
        %v1967 = vunpack.c.l.b16 %v1871
        %v1968 = vunpack.c.l.b16 %v1872
        %v1969 = vunpack.c.l.b16 %v1873
        %v1970 = vunpack.c.l.b16 %v1874
        %v1971 = vunpack.c.l.b16 %v1875
        %v1972 = vunpack.c.l.b16 %v1876
        %v1973 = vunpack.c.l.b16 %v1877
        %v1974 = vunpack.c.l.b16 %v1878
        %v1975 = vunpack.c.l.b16 %v1879
        %v1976 = vunpack.c.l.b16 %v1880
        %v1977 = vunpack.c.l.b16 %v1881
        %v1978 = vunpack.c.l.b16 %v1882
        %v1979 = vunpack.c.l.b16 %v1883
        %v1980 = vpack.c.b16 %v1933, %v1932
        %v1981 = vpack.c.b16 %v1935, %v1934
        %v1982 = vpack.c.b16 %v1937, %v1936
        %v1983 = vpack.c.b16 %v1939, %v1938
        %v1984 = vpack.c.b16 %v1941, %v1940
        %v1985 = vpack.c.b16 %v1943, %v1942
        %v1986 = vpack.c.b16 %v1945, %v1944
        %v1987 = vpack.c.b16 %v1947, %v1946
        %v1988 = vpack.c.b16 %v1949, %v1948
        %v1989 = vpack.c.b16 %v1951, %v1950
        %v1990 = vpack.c.b16 %v1953, %v1952
        %v1991 = vpack.c.b16 %v1955, %v1954
        %v1992 = vpack.c.b16 %v1957, %v1956
        %v1993 = vpack.c.b16 %v1959, %v1958
        %v1994 = vpack.c.b16 %v1961, %v1960
        %v1995 = vpack.c.b16 %v1963, %v1962
        %v1996 = vpack.c.b16 %v1965, %v1964
        %v1997 = vpack.c.b16 %v1967, %v1966
        %v1998 = vpack.c.b16 %v1969, %v1968
        %v1999 = vpack.c.b16 %v1971, %v1970
        %v2000 = vpack.c.b16 %v1973, %v1972
        %v2001 = vpack.c.b16 %v1975, %v1974
        %v2002 = vpack.c.b16 %v1977, %v1976
        %v2003 = vpack.c.b16 %v1979, %v1978
        %2028 = vmatprep.subr.bf16.mxu0 0
        %2029 = vmatpush1.bf16.msra.mxu0 %v1987
        %2030 = vmatprep.subr.bf16.mxu0 0
        %2031 = vmatpush1.bf16.msra.mxu0 %v1986
        %2032 = vmatprep.subr.bf16.mxu0 0
        %2033 = vmatpush1.bf16.msra.mxu0 %v1985
        %2034 = vmatprep.subr.bf16.mxu0 0
        %2035 = vmatpush1.bf16.msra.mxu0 %v1984
        %2036 = vmatprep.subr.bf16.mxu0 0
        %2037 = vmatpush1.bf16.msra.mxu0 %v1983
        %2038 = vmatprep.subr.bf16.mxu0 0
        %2039 = vmatpush1.bf16.msra.mxu0 %v1982
        %2040 = vmatprep.subr.bf16.mxu0 0
        %2041 = vmatpush1.bf16.msra.mxu0 %v1981
        %2042 = vmatprep.subr.bf16.mxu0 0
        %2043 = vmatpush1.bf16.msra.mxu0 %v1980
        %2044 = vmatprep.subr.bf16.mxu0 0
        %2045 = vmatpush2.bf16.msra.mxu0 %v1995
        %2046 = vmatprep.subr.bf16.mxu0 0
        %2047 = vmatpush2.bf16.msra.mxu0 %v1994
        %2048 = vmatprep.subr.bf16.mxu0 0
        %2049 = vmatpush2.bf16.msra.mxu0 %v1993
        %2050 = vmatprep.subr.bf16.mxu0 0
        %2051 = vmatpush2.bf16.msra.mxu0 %v1992
        %2052 = vmatprep.subr.bf16.mxu0 0
        %2053 = vmatpush2.bf16.msra.mxu0 %v1991
        %2054 = vmatprep.subr.bf16.mxu0 0
        %2055 = vmatpush2.bf16.msra.mxu0 %v1990
        %2056 = vmatprep.subr.bf16.mxu0 0
        %2057 = vmatpush2.bf16.msra.mxu0 %v1989
        %2058 = vmatprep.subr.bf16.mxu0 0
        %2059 = vmatpush2.bf16.msra.mxu0 %v1988
        %2060 = vmatprep.mubr.bf16.mxu0 %v725
        %2061 = vmatmul.mubr.bf16.gmra.mxu0 %v724
        %v2062 = vpop.f32.mrf.mxu0
        %v2063 = vadd.f32 0.0, %v2062
        %v2064 = vpop.f32.mrf.mxu0
        %v2065 = vpop.f32.mrf.mxu0
        %v2066 = vadd.f32 0.0, %v2065
        %v2067 = vpop.f32.mrf.mxu0
        %2068 = vmatprep.mubr.bf16.mxu0 %v728
        %2069 = vmatmul.mubr.bf16.gmra.mxu0 %v727
        %v2070 = vpop.f32.mrf.mxu0
        %v2071 = vadd.f32 0.0, %v2070
        %v2072 = vpop.f32.mrf.mxu0
        %v2073 = vpop.f32.mrf.mxu0
        %v2074 = vadd.f32 0.0, %v2073
        %v2075 = vpop.f32.mrf.mxu0
        %2076 = vmatprep.mubr.bf16.mxu0 %v731
        %2077 = vmatmul.mubr.bf16.gmra.mxu0 %v730
        %v2078 = vpop.f32.mrf.mxu0
        %v2079 = vadd.f32 0.0, %v2078
        %v2080 = vpop.f32.mrf.mxu0
        %v2081 = vpop.f32.mrf.mxu0
        %v2082 = vadd.f32 0.0, %v2081
        %v2083 = vpop.f32.mrf.mxu0
        %2084 = vmatprep.mubr.bf16.mxu0 %v734
        %2085 = vmatmul.mubr.bf16.gmra.mxu0 %v733
        %v2086 = vpop.f32.mrf.mxu0
        %v2087 = vadd.f32 0.0, %v2086
        %v2088 = vpop.f32.mrf.mxu0
        %v2089 = vpop.f32.mrf.mxu0
        %v2090 = vadd.f32 0.0, %v2089
        %v2091 = vpop.f32.mrf.mxu0
        %2092 = vmatprep.mubr.bf16.mxu0 %v737
        %2093 = vmatmul.mubr.bf16.gmra.mxu0 %v736
        %v2094 = vpop.f32.mrf.mxu0
        %v2095 = vadd.f32 0.0, %v2094
        %v2096 = vpop.f32.mrf.mxu0
        %v2097 = vpop.f32.mrf.mxu0
        %v2098 = vadd.f32 0.0, %v2097
        %v2099 = vpop.f32.mrf.mxu0
        %2100 = vmatprep.mubr.bf16.mxu0 %v740
        %2101 = vmatmul.mubr.bf16.gmra.mxu0 %v739
        %v2102 = vpop.f32.mrf.mxu0
        %v2103 = vadd.f32 0.0, %v2102
        %v2104 = vpop.f32.mrf.mxu0
        %v2105 = vpop.f32.mrf.mxu0
        %v2106 = vadd.f32 0.0, %v2105
        %v2107 = vpop.f32.mrf.mxu0
        %2108 = vmatprep.mubr.bf16.mxu0 %v743
        %2109 = vmatmul.mubr.bf16.gmra.mxu0 %v742
        %v2110 = vpop.f32.mrf.mxu0
        %v2111 = vadd.f32 0.0, %v2110
        %v2112 = vpop.f32.mrf.mxu0
        %v2113 = vpop.f32.mrf.mxu0
        %v2114 = vadd.f32 0.0, %v2113
        %v2115 = vpop.f32.mrf.mxu0
        %2116 = vmatprep.mubr.bf16.mxu0 %v746
        %2117 = vmatmul.mubr.bf16.gmra.mxu0 %v745
        %v2118 = vpop.f32.mrf.mxu0
        %v2119 = vadd.f32 0.0, %v2118
        %v2120 = vpop.f32.mrf.mxu0
        %v2121 = vpop.f32.mrf.mxu0
        %v2122 = vadd.f32 0.0, %v2121
        %v2123 = vpop.f32.mrf.mxu0
        %2124 = vmatprep.mubr.bf16.mxu0 %v749
        %2125 = vmatmul.mubr.bf16.gmra.mxu0 %v748
        %v2126 = vpop.f32.mrf.mxu0
        %v2127 = vadd.f32 0.0, %v2126
        %v2128 = vpop.f32.mrf.mxu0
        %v2129 = vpop.f32.mrf.mxu0
        %v2130 = vadd.f32 0.0, %v2129
        %v2131 = vpop.f32.mrf.mxu0
        %2132 = vmatprep.mubr.bf16.mxu0 %v752
        %2133 = vmatmul.mubr.bf16.gmra.mxu0 %v751
        %v2134 = vpop.f32.mrf.mxu0
        %v2135 = vadd.f32 0.0, %v2134
        %v2136 = vpop.f32.mrf.mxu0
        %v2137 = vpop.f32.mrf.mxu0
        %v2138 = vadd.f32 0.0, %v2137
        %v2139 = vpop.f32.mrf.mxu0
        %2140 = vmatprep.mubr.bf16.mxu0 %v755
        %2141 = vmatmul.mubr.bf16.gmra.mxu0 %v754
        %v2142 = vpop.f32.mrf.mxu0
        %v2143 = vadd.f32 0.0, %v2142
        %v2144 = vpop.f32.mrf.mxu0
        %v2145 = vpop.f32.mrf.mxu0
        %v2146 = vadd.f32 0.0, %v2145
        %v2147 = vpop.f32.mrf.mxu0
        %2148 = vmatprep.mubr.bf16.mxu0 %v758
        %2149 = vmatmul.mubr.bf16.gmra.mxu0 %v757
        %v2150 = vpop.f32.mrf.mxu0
        %v2151 = vadd.f32 0.0, %v2150
        %v2152 = vpop.f32.mrf.mxu0
        %v2153 = vpop.f32.mrf.mxu0
        %v2154 = vadd.f32 0.0, %v2153
        %v2155 = vpop.f32.mrf.mxu0
        %2156 = vmatprep.mubr.bf16.mxu0 %v761
        %2157 = vmatmul.mubr.bf16.gmra.mxu0 %v760
        %v2158 = vpop.f32.mrf.mxu0
        %v2159 = vadd.f32 0.0, %v2158
        %v2160 = vpop.f32.mrf.mxu0
        %v2161 = vpop.f32.mrf.mxu0
        %v2162 = vadd.f32 0.0, %v2161
        %v2163 = vpop.f32.mrf.mxu0
        %2164 = vmatprep.mubr.bf16.mxu0 %v764
        %2165 = vmatmul.mubr.bf16.gmra.mxu0 %v763
        %v2166 = vpop.f32.mrf.mxu0
        %v2167 = vadd.f32 0.0, %v2166
        %v2168 = vpop.f32.mrf.mxu0
        %v2169 = vpop.f32.mrf.mxu0
        %v2170 = vadd.f32 0.0, %v2169
        %v2171 = vpop.f32.mrf.mxu0
        %2172 = vmatprep.mubr.bf16.mxu0 %v832
        %2173 = vmatmul.mubr.bf16.gmra.mxu0 %v831
        %v2174 = vpop.f32.mrf.mxu0
        %v2175 = vadd.f32 0.0, %v2174
        %v2176 = vpop.f32.mrf.mxu0
        %v2177 = vpop.f32.mrf.mxu0
        %v2178 = vadd.f32 0.0, %v2177
        %v2179 = vpop.f32.mrf.mxu0
        %2180 = vmatprep.mubr.bf16.mxu0 %v1833
        %2181 = vmatmul.mubr.bf16.gmra.mxu0 %v1832
        %v2182 = vpop.f32.mrf.mxu0
        %v2183 = vadd.f32 0.0, %v2182
        %v2184 = vpop.f32.mrf.mxu0
        %v2185 = vpop.f32.mrf.mxu0
        %v2186 = vadd.f32 0.0, %v2185
        %v2187 = vpop.f32.mrf.mxu0
        %2188 = vdwg.mxu0
        %2189 = vmatprep.subr.bf16.mxu0 0
        %2190 = vmatpush1.bf16.msra.mxu0 %v2003
        %2191 = vmatprep.subr.bf16.mxu0 0
        %2192 = vmatpush1.bf16.msra.mxu0 %v2002
        %2193 = vmatprep.subr.bf16.mxu0 0
        %2194 = vmatpush1.bf16.msra.mxu0 %v2001
        %2195 = vmatprep.subr.bf16.mxu0 0
        %2196 = vmatpush1.bf16.msra.mxu0 %v2000
        %2197 = vmatprep.subr.bf16.mxu0 0
        %2198 = vmatpush1.bf16.msra.mxu0 %v1999
        %2199 = vmatprep.subr.bf16.mxu0 0
        %2200 = vmatpush1.bf16.msra.mxu0 %v1998
        %2201 = vmatprep.subr.bf16.mxu0 0
        %2202 = vmatpush1.bf16.msra.mxu0 %v1997
        %2203 = vmatprep.subr.bf16.mxu0 0
        %2204 = vmatpush1.bf16.msra.mxu0 %v1996
        %2205 = vmatprep.subr.bf16.mxu0 0
        %2206 = vmatpush2.bf16.msra.mxu0 0
        %2207 = vmatprep.subr.bf16.mxu0 0
        %2208 = vmatpush2.bf16.msra.mxu0 0
        %2209 = vmatprep.subr.bf16.mxu0 0
        %2210 = vmatpush2.bf16.msra.mxu0 0
        %2211 = vmatprep.subr.bf16.mxu0 0
        %2212 = vmatpush2.bf16.msra.mxu0 0
        %2213 = vmatprep.subr.bf16.mxu0 0
        %2214 = vmatpush2.bf16.msra.mxu0 0
        %2215 = vmatprep.subr.bf16.mxu0 0
        %2216 = vmatpush2.bf16.msra.mxu0 0
        %2217 = vmatprep.subr.bf16.mxu0 0
        %2218 = vmatpush2.bf16.msra.mxu0 0
        %2219 = vmatprep.subr.bf16.mxu0 0
        %2220 = vmatpush2.bf16.msra.mxu0 0
        %2221 = vmatprep.mubr.bf16.mxu0 0
        %2222 = vmatmul.mubr.bf16.gmra.mxu0 %v726
        %v2223 = vpop.f32.mrf.mxu0
        %v2224 = vadd.f32 %v2063, %v2223
        %v2225 = vpop.f32.mrf.mxu0
        %v2226 = vpop.f32.mrf.mxu0
        %v2227 = vadd.f32 %v2066, %v2226
        %v2228 = vpop.f32.mrf.mxu0
        %2229 = vmatprep.mubr.bf16.mxu0 0
        %2230 = vmatmul.mubr.bf16.gmra.mxu0 %v729
        %v2231 = vpop.f32.mrf.mxu0
        %v2232 = vadd.f32 %v2071, %v2231
        %v2233 = vpop.f32.mrf.mxu0
        %v2234 = vpop.f32.mrf.mxu0
        %v2235 = vadd.f32 %v2074, %v2234
        %v2236 = vpop.f32.mrf.mxu0
        %2237 = vmatprep.mubr.bf16.mxu0 0
        %2238 = vmatmul.mubr.bf16.gmra.mxu0 %v732
        %v2239 = vpop.f32.mrf.mxu0
        %v2240 = vadd.f32 %v2079, %v2239
        %v2241 = vpop.f32.mrf.mxu0
        %v2242 = vpop.f32.mrf.mxu0
        %v2243 = vadd.f32 %v2082, %v2242
        %v2244 = vpop.f32.mrf.mxu0
        %2245 = vmatprep.mubr.bf16.mxu0 0
        %2246 = vmatmul.mubr.bf16.gmra.mxu0 %v735
        %v2247 = vpop.f32.mrf.mxu0
        %v2248 = vadd.f32 %v2087, %v2247
        %v2249 = vpop.f32.mrf.mxu0
        %v2250 = vpop.f32.mrf.mxu0
        %v2251 = vadd.f32 %v2090, %v2250
        %v2252 = vpop.f32.mrf.mxu0
        %2253 = vmatprep.mubr.bf16.mxu0 0
        %2254 = vmatmul.mubr.bf16.gmra.mxu0 %v738
        %v2255 = vpop.f32.mrf.mxu0
        %v2256 = vadd.f32 %v2095, %v2255
        %v2257 = vpop.f32.mrf.mxu0
        %v2258 = vpop.f32.mrf.mxu0
        %v2259 = vadd.f32 %v2098, %v2258
        %v2260 = vpop.f32.mrf.mxu0
        %2261 = vmatprep.mubr.bf16.mxu0 0
        %2262 = vmatmul.mubr.bf16.gmra.mxu0 %v741
        %v2263 = vpop.f32.mrf.mxu0
        %v2264 = vadd.f32 %v2103, %v2263
        %v2265 = vpop.f32.mrf.mxu0
        %v2266 = vpop.f32.mrf.mxu0
        %v2267 = vadd.f32 %v2106, %v2266
        %v2268 = vpop.f32.mrf.mxu0
        %2269 = vmatprep.mubr.bf16.mxu0 0
        %2270 = vmatmul.mubr.bf16.gmra.mxu0 %v744
        %v2271 = vpop.f32.mrf.mxu0
        %v2272 = vadd.f32 %v2111, %v2271
        %v2273 = vpop.f32.mrf.mxu0
        %v2274 = vpop.f32.mrf.mxu0
        %v2275 = vadd.f32 %v2114, %v2274
        %v2276 = vpop.f32.mrf.mxu0
        %2277 = vmatprep.mubr.bf16.mxu0 0
        %2278 = vmatmul.mubr.bf16.gmra.mxu0 %v747
        %v2279 = vpop.f32.mrf.mxu0
        %v2280 = vadd.f32 %v2119, %v2279
        %v2281 = vpop.f32.mrf.mxu0
        %v2282 = vpop.f32.mrf.mxu0
        %v2283 = vadd.f32 %v2122, %v2282
        %v2284 = vpop.f32.mrf.mxu0
        %2285 = vmatprep.mubr.bf16.mxu0 0
        %2286 = vmatmul.mubr.bf16.gmra.mxu0 %v750
        %v2287 = vpop.f32.mrf.mxu0
        %v2288 = vadd.f32 %v2127, %v2287
        %v2289 = vpop.f32.mrf.mxu0
        %v2290 = vpop.f32.mrf.mxu0
        %v2291 = vadd.f32 %v2130, %v2290
        %v2292 = vpop.f32.mrf.mxu0
        %2293 = vmatprep.mubr.bf16.mxu0 0
        %2294 = vmatmul.mubr.bf16.gmra.mxu0 %v753
        %v2295 = vpop.f32.mrf.mxu0
        %v2296 = vadd.f32 %v2135, %v2295
        %v2297 = vpop.f32.mrf.mxu0
        %v2298 = vpop.f32.mrf.mxu0
        %v2299 = vadd.f32 %v2138, %v2298
        %v2300 = vpop.f32.mrf.mxu0
        %2301 = vmatprep.mubr.bf16.mxu0 0
        %2302 = vmatmul.mubr.bf16.gmra.mxu0 %v756
        %v2303 = vpop.f32.mrf.mxu0
        %v2304 = vadd.f32 %v2143, %v2303
        %v2305 = vpop.f32.mrf.mxu0
        %v2306 = vpop.f32.mrf.mxu0
        %v2307 = vadd.f32 %v2146, %v2306
        %v2308 = vpop.f32.mrf.mxu0
        %2309 = vmatprep.mubr.bf16.mxu0 0
        %2310 = vmatmul.mubr.bf16.gmra.mxu0 %v759
        %v2311 = vpop.f32.mrf.mxu0
        %v2312 = vadd.f32 %v2151, %v2311
        %v2313 = vpop.f32.mrf.mxu0
        %v2314 = vpop.f32.mrf.mxu0
        %v2315 = vadd.f32 %v2154, %v2314
        %v2316 = vpop.f32.mrf.mxu0
        %2317 = vmatprep.mubr.bf16.mxu0 0
        %2318 = vmatmul.mubr.bf16.gmra.mxu0 %v762
        %v2319 = vpop.f32.mrf.mxu0
        %v2320 = vadd.f32 %v2159, %v2319
        %v2321 = vpop.f32.mrf.mxu0
        %v2322 = vpop.f32.mrf.mxu0
        %v2323 = vadd.f32 %v2162, %v2322
        %v2324 = vpop.f32.mrf.mxu0
        %2325 = vmatprep.mubr.bf16.mxu0 0
        %2326 = vmatmul.mubr.bf16.gmra.mxu0 %v765
        %v2327 = vpop.f32.mrf.mxu0
        %v2328 = vadd.f32 %v2167, %v2327
        %v2329 = vpop.f32.mrf.mxu0
        %v2330 = vpop.f32.mrf.mxu0
        %v2331 = vadd.f32 %v2170, %v2330
        %v2332 = vpop.f32.mrf.mxu0
        %2333 = vmatprep.mubr.bf16.mxu0 0
        %2334 = vmatmul.mubr.bf16.gmra.mxu0 %v833
        %v2335 = vpop.f32.mrf.mxu0
        %v2336 = vadd.f32 %v2175, %v2335
        %v2337 = vpop.f32.mrf.mxu0
        %v2338 = vpop.f32.mrf.mxu0
        %v2339 = vadd.f32 %v2178, %v2338
        %v2340 = vpop.f32.mrf.mxu0
        %2341 = vmatprep.mubr.bf16.mxu0 0
        %2342 = vmatmul.mubr.bf16.gmra.mxu0 %v1834
        %v2343 = vpop.f32.mrf.mxu0
        %v2344 = vadd.f32 %v2183, %v2343
        %v2345 = vpop.f32.mrf.mxu0
        %v2346 = vpop.f32.mrf.mxu0
        %v2347 = vadd.f32 %v2186, %v2346
        %v2348 = vpop.f32.mrf.mxu0
        %2349 = vdwg.mxu0
        %v2350 = vadd.f32 %v1689, %v2224
        %v2351 = vadd.f32 %v1692, %v2227
        %v2352 = vadd.f32 %v1697, %v2232
        %v2353 = vadd.f32 %v1700, %v2235
        %v2354 = vadd.f32 %v1705, %v2240
        %v2355 = vadd.f32 %v1708, %v2243
        %v2356 = vadd.f32 %v1713, %v2248
        %v2357 = vadd.f32 %v1716, %v2251
        %v2358 = vadd.f32 %v1721, %v2256
        %v2359 = vadd.f32 %v1724, %v2259
        %v2360 = vadd.f32 %v1729, %v2264
        %v2361 = vadd.f32 %v1732, %v2267
        %v2362 = vadd.f32 %v1737, %v2272
        %v2363 = vadd.f32 %v1740, %v2275
        %v2364 = vadd.f32 %v1745, %v2280
        %v2365 = vadd.f32 %v1748, %v2283
        %v2366 = vadd.f32 %v1753, %v2288
        %v2367 = vadd.f32 %v1756, %v2291
        %v2368 = vadd.f32 %v1761, %v2296
        %v2369 = vadd.f32 %v1764, %v2299
        %v2370 = vadd.f32 %v1769, %v2304
        %v2371 = vadd.f32 %v1772, %v2307
        %v2372 = vadd.f32 %v1777, %v2312
        %v2373 = vadd.f32 %v1780, %v2315
        %v2374 = vadd.f32 %v1785, %v2320
        %v2375 = vadd.f32 %v1788, %v2323
        %v2376 = vadd.f32 %v1793, %v2328
        %v2377 = vadd.f32 %v1796, %v2331
        %v2378 = vadd.f32 %v1801, %v2336
        %v2379 = vadd.f32 %v1804, %v2339
        %v2380 = vadd.f32 %v1809, %v2344
        %v2381 = vadd.f32 %v1812, %v2347
        %v2382 = vld [vmem:[%s3] sm:$0x1]
        %v2384 = vlaneseq
        %v2385 = vshrl.u32 %v2384, 7
        %v2386 = vsub.s32 0, %v2385
        %v2387 = vrot.slane %v2382, %v2386
        %v2389 = vmul.f32 %v2350, %v2387
        %v2390 = vmul.f32 %v2351, %v2387
        %v2391 = vmul.f32 %v2352, %v2387
        %v2392 = vmul.f32 %v2353, %v2387
        %v2393 = vmul.f32 %v2354, %v2387
        %v2394 = vmul.f32 %v2355, %v2387
        %v2395 = vmul.f32 %v2356, %v2387
        %v2396 = vmul.f32 %v2357, %v2387
        %v2397 = vmul.f32 %v2358, %v2387
        %v2398 = vmul.f32 %v2359, %v2387
        %v2399 = vmul.f32 %v2360, %v2387
        %v2400 = vmul.f32 %v2361, %v2387
        %v2401 = vmul.f32 %v2362, %v2387
        %v2402 = vmul.f32 %v2363, %v2387
        %v2403 = vmul.f32 %v2364, %v2387
        %v2404 = vmul.f32 %v2365, %v2387
        %v2405 = vmul.f32 %v2366, %v2387
        %v2406 = vmul.f32 %v2367, %v2387
        %v2407 = vmul.f32 %v2368, %v2387
        %v2408 = vmul.f32 %v2369, %v2387
        %v2409 = vmul.f32 %v2370, %v2387
        %v2410 = vmul.f32 %v2371, %v2387
        %v2411 = vmul.f32 %v2372, %v2387
        %v2412 = vmul.f32 %v2373, %v2387
        %v2413 = vmul.f32 %v2374, %v2387
        %v2414 = vmul.f32 %v2375, %v2387
        %v2415 = vmul.f32 %v2376, %v2387
        %v2416 = vmul.f32 %v2377, %v2387
        %v2417 = vmul.f32 %v2378, %v2387
        %v2418 = vmul.f32 %v2379, %v2387
        %v2419 = vmul.f32 %v2380, %v2387
        %v2420 = vmul.f32 %v2381, %v2387
        %v2421 = vld [vmem:[%s4] sm:$0x1]
        %v2423 = vlaneseq
        %v2424 = vshrl.u32 %v2423, 7
        %v2425 = vsub.s32 0, %v2424
        %v2426 = vrot.slane %v2421, %v2425
        %v2428 = vadd.f32 %v2389, %v2426
        %v2429 = vadd.f32 %v2390, %v2426
        %v2430 = vadd.f32 %v2391, %v2426
        %v2431 = vadd.f32 %v2392, %v2426
        %v2432 = vadd.f32 %v2393, %v2426
        %v2433 = vadd.f32 %v2394, %v2426
        %v2434 = vadd.f32 %v2395, %v2426
        %v2435 = vadd.f32 %v2396, %v2426
        %v2436 = vadd.f32 %v2397, %v2426
        %v2437 = vadd.f32 %v2398, %v2426
        %v2438 = vadd.f32 %v2399, %v2426
        %v2439 = vadd.f32 %v2400, %v2426
        %v2440 = vadd.f32 %v2401, %v2426
        %v2441 = vadd.f32 %v2402, %v2426
        %v2442 = vadd.f32 %v2403, %v2426
        %v2443 = vadd.f32 %v2404, %v2426
        %v2444 = vadd.f32 %v2405, %v2426
        %v2445 = vadd.f32 %v2406, %v2426
        %v2446 = vadd.f32 %v2407, %v2426
        %v2447 = vadd.f32 %v2408, %v2426
        %v2448 = vadd.f32 %v2409, %v2426
        %v2449 = vadd.f32 %v2410, %v2426
        %v2450 = vadd.f32 %v2411, %v2426
        %v2451 = vadd.f32 %v2412, %v2426
        %v2452 = vadd.f32 %v2413, %v2426
        %v2453 = vadd.f32 %v2414, %v2426
        %v2454 = vadd.f32 %v2415, %v2426
        %v2455 = vadd.f32 %v2416, %v2426
        %v2456 = vadd.f32 %v2417, %v2426
        %v2457 = vadd.f32 %v2418, %v2426
        %v2458 = vadd.f32 %v2419, %v2426
        %v2459 = vadd.f32 %v2420, %v2426
        %v2460 = vmax.f32 %v2428, 0.0
        %v2461 = vmax.f32 %v2429, 0.0
        %v2462 = vmax.f32 %v2430, 0.0
        %v2463 = vmax.f32 %v2431, 0.0
        %v2464 = vmax.f32 %v2432, 0.0
        %v2465 = vmax.f32 %v2433, 0.0
        %v2466 = vmax.f32 %v2434, 0.0
        %v2467 = vmax.f32 %v2435, 0.0
        %v2468 = vmax.f32 %v2436, 0.0
        %v2469 = vmax.f32 %v2437, 0.0
        %v2470 = vmax.f32 %v2438, 0.0
        %v2471 = vmax.f32 %v2439, 0.0
        %v2472 = vmax.f32 %v2440, 0.0
        %v2473 = vmax.f32 %v2441, 0.0
        %v2474 = vmax.f32 %v2442, 0.0
        %v2475 = vmax.f32 %v2443, 0.0
        %v2476 = vmax.f32 %v2444, 0.0
        %v2477 = vmax.f32 %v2445, 0.0
        %v2478 = vmax.f32 %v2446, 0.0
        %v2479 = vmax.f32 %v2447, 0.0
        %v2480 = vmax.f32 %v2448, 0.0
        %v2481 = vmax.f32 %v2449, 0.0
        %v2482 = vmax.f32 %v2450, 0.0
        %v2483 = vmax.f32 %v2451, 0.0
        %v2484 = vmax.f32 %v2452, 0.0
        %v2485 = vmax.f32 %v2453, 0.0
        %v2486 = vmax.f32 %v2454, 0.0
        %v2487 = vmax.f32 %v2455, 0.0
        %v2488 = vmax.f32 %v2456, 0.0
        %v2489 = vmax.f32 %v2457, 0.0
        %v2490 = vmax.f32 %v2458, 0.0
        %v2491 = vmax.f32 %v2459, 0.0
        %s2492 = scalar_lea.vmem [#allocation2], 24
        %2493 = vst [vmem:[%s2492 + $0x1] sm:$0xff] %v2460
        %2494 = vst [vmem:[%s2492 + $0x9] sm:$0xff] %v2461
        %2495 = vst [vmem:[%s2492 + $0x19] sm:$0xff] %v2462
        %2496 = vst [vmem:[%s2492 + $0x21] sm:$0xff] %v2463
        %2497 = vst [vmem:[%s2492 + $0x31] sm:$0xff] %v2464
        %2498 = vst [vmem:[%s2492 + $0x39] sm:$0xff] %v2465
        %2499 = vst [vmem:[%s2492 + $0x49] sm:$0xff] %v2466
        %2500 = vst [vmem:[%s2492 + $0x51] sm:$0xff] %v2467
        %2501 = vst [vmem:[%s2492 + $0x61] sm:$0xff] %v2468
        %2502 = vst [vmem:[%s2492 + $0x69] sm:$0xff] %v2469
        %2503 = vst [vmem:[%s2492 + $0x79] sm:$0xff] %v2470
        %2504 = vst [vmem:[%s2492 + $0x81] sm:$0xff] %v2471
        %2505 = vst [vmem:[%s2492 + $0x91] sm:$0xff] %v2472
        %2506 = vst [vmem:[%s2492 + $0x99] sm:$0xff] %v2473
        %2507 = vst [vmem:[%s2492 + $0xa9] sm:$0xff] %v2474
        %2508 = vst [vmem:[%s2492 + $0xb1] sm:$0xff] %v2475
        %2509 = vst [vmem:[%s2492 + $0xc1] sm:$0xff] %v2476
        %2510 = vst [vmem:[%s2492 + $0xc9] sm:$0xff] %v2477
        %2511 = vst [vmem:[%s2492 + $0xd9] sm:$0xff] %v2478
        %2512 = vst [vmem:[%s2492 + $0xe1] sm:$0xff] %v2479
        %2513 = vst [vmem:[%s2492 + $0xf1] sm:$0xff] %v2480
        %2514 = vst [vmem:[%s2492 + $0xf9] sm:$0xff] %v2481
        %2515 = vst [vmem:[%s2492 + $0x109] sm:$0xff] %v2482
        %2516 = vst [vmem:[%s2492 + $0x111] sm:$0xff] %v2483
        %2517 = vst [vmem:[%s2492 + $0x121] sm:$0xff] %v2484
        %2518 = vst [vmem:[%s2492 + $0x129] sm:$0xff] %v2485
        %2519 = vst [vmem:[%s2492 + $0x139] sm:$0xff] %v2486
        %2520 = vst [vmem:[%s2492 + $0x141] sm:$0xff] %v2487
        %2521 = vst [vmem:[%s2492 + $0x151] sm:$0xff] %v2488
        %2522 = vst [vmem:[%s2492 + $0x159] sm:$0xff] %v2489
        %2523 = vst [vmem:[%s2492 + $0x169] sm:$0xff] %v2490
        %2524 = vst [vmem:[%s2492 + $0x171] sm:$0xff] %v2491
        %v2525 = vld [vmem:[#allocation2] sm:$0xff]
        %v2526 = vld [vmem:[#allocation2 + $0x8] sm:$0xff]
        %v2527 = vld [vmem:[#allocation2 + $0x10] sm:$0x3]
        %v2528 = vld [vmem:[#allocation2 + $0x18] sm:$0xff]
        %v2529 = vld [vmem:[#allocation2 + $0x20] sm:$0xff]
        %v2530 = vld [vmem:[#allocation2 + $0x28] sm:$0x3]
        %v2531 = vld [vmem:[#allocation2 + $0x30] sm:$0xff]
        %v2532 = vld [vmem:[#allocation2 + $0x38] sm:$0xff]
        %v2533 = vld [vmem:[#allocation2 + $0x40] sm:$0x3]
        %v2534 = vld [vmem:[#allocation2 + $0x48] sm:$0xff]
        %v2535 = vld [vmem:[#allocation2 + $0x50] sm:$0xff]
        %v2536 = vld [vmem:[#allocation2 + $0x58] sm:$0x3]
        %v2537 = vld [vmem:[#allocation2 + $0x60] sm:$0xff]
        %v2538 = vld [vmem:[#allocation2 + $0x68] sm:$0xff]
        %v2539 = vld [vmem:[#allocation2 + $0x70] sm:$0x3]
        %v2540 = vld [vmem:[#allocation2 + $0x78] sm:$0xff]
        %v2541 = vld [vmem:[#allocation2 + $0x80] sm:$0xff]
        %v2542 = vld [vmem:[#allocation2 + $0x88] sm:$0x3]
        %v2543 = vld [vmem:[#allocation2 + $0x90] sm:$0xff]
        %v2544 = vld [vmem:[#allocation2 + $0x98] sm:$0xff]
        %v2545 = vld [vmem:[#allocation2 + $0xa0] sm:$0x3]
        %v2546 = vld [vmem:[#allocation2 + $0xa8] sm:$0xff]
        %v2547 = vld [vmem:[#allocation2 + $0xb0] sm:$0xff]
        %v2548 = vld [vmem:[#allocation2 + $0xb8] sm:$0x3]
        %v2549 = vld [vmem:[#allocation2 + $0xc0] sm:$0xff]
        %v2550 = vld [vmem:[#allocation2 + $0xc8] sm:$0xff]
        %v2551 = vld [vmem:[#allocation2 + $0xd0] sm:$0x3]
        %v2552 = vld [vmem:[#allocation2 + $0xd8] sm:$0xff]
        %v2553 = vld [vmem:[#allocation2 + $0xe0] sm:$0xff]
        %v2554 = vld [vmem:[#allocation2 + $0xe8] sm:$0x3]
        %v2555 = vld [vmem:[#allocation2 + $0xf0] sm:$0xff]
        %v2556 = vld [vmem:[#allocation2 + $0xf8] sm:$0xff]
        %v2557 = vld [vmem:[#allocation2 + $0x100] sm:$0x3]
        %v2558 = vld [vmem:[#allocation2 + $0x108] sm:$0xff]
        %v2559 = vld [vmem:[#allocation2 + $0x110] sm:$0xff]
        %v2560 = vld [vmem:[#allocation2 + $0x118] sm:$0x3]
        %v2561 = vld [vmem:[#allocation2 + $0x120] sm:$0xff]
        %v2562 = vld [vmem:[#allocation2 + $0x128] sm:$0xff]
        %v2563 = vld [vmem:[#allocation2 + $0x130] sm:$0x3]
        %v2564 = vld [vmem:[#allocation2 + $0x138] sm:$0xff]
        %v2565 = vld [vmem:[#allocation2 + $0x140] sm:$0xff]
        %v2566 = vld [vmem:[#allocation2 + $0x148] sm:$0x3]
        %v2567 = vld [vmem:[#allocation2 + $0x150] sm:$0xff]
        %v2568 = vld [vmem:[#allocation2 + $0x158] sm:$0xff]
        %v2569 = vld [vmem:[#allocation2 + $0x160] sm:$0x3]
        %v2570 = vld [vmem:[#allocation2 + $0x168] sm:$0xff]
        %v2571 = vld [vmem:[#allocation2 + $0x170] sm:$0xff]
        %v2572 = vld [vmem:[#allocation2 + $0x178] sm:$0x3]
        %v2573 = vld [vmem:[#allocation2 + $0x180] sm:$0xff]
        %v2574 = vld [vmem:[#allocation2 + $0x188] sm:$0xff]
        %v2575 = vld [vmem:[#allocation2 + $0x190] sm:$0x3]
        %v2576 = vld [vmem:[#allocation2 + $0x198] sm:$0xff]
        %v2577 = vld [vmem:[#allocation2 + $0x1a0] sm:$0xff]
        %v2578 = vld [vmem:[#allocation2 + $0x1a8] sm:$0x3]
        %v2627 = vrot.slane %v2525, 1
        %v2628 = vrot.slane %v2526, 1
        %v2629 = vsel %vm492, %v2627, %v2628
        %v2630 = vrot.slane %v2527, 1
        %v2631 = vsel %vm492, %v2628, %v2630
        %v2632 = vrot.slane %v2528, 1
        %v2633 = vrot.slane %v2529, 1
        %v2634 = vsel %vm492, %v2632, %v2633
        %v2635 = vrot.slane %v2530, 1
        %v2636 = vsel %vm492, %v2633, %v2635
        %v2637 = vrot.slane %v2531, 1
        %v2638 = vrot.slane %v2532, 1
        %v2639 = vsel %vm492, %v2637, %v2638
        %v2640 = vrot.slane %v2533, 1
        %v2641 = vsel %vm492, %v2638, %v2640
        %v2642 = vrot.slane %v2534, 1
        %v2643 = vrot.slane %v2535, 1
        %v2644 = vsel %vm492, %v2642, %v2643
        %v2645 = vrot.slane %v2536, 1
        %v2646 = vsel %vm492, %v2643, %v2645
        %v2647 = vrot.slane %v2537, 1
        %v2648 = vrot.slane %v2538, 1
        %v2649 = vsel %vm492, %v2647, %v2648
        %v2650 = vrot.slane %v2539, 1
        %v2651 = vsel %vm492, %v2648, %v2650
        %v2652 = vrot.slane %v2540, 1
        %v2653 = vrot.slane %v2541, 1
        %v2654 = vsel %vm492, %v2652, %v2653
        %v2655 = vrot.slane %v2542, 1
        %v2656 = vsel %vm492, %v2653, %v2655
        %v2657 = vrot.slane %v2543, 1
        %v2658 = vrot.slane %v2544, 1
        %v2659 = vsel %vm492, %v2657, %v2658
        %v2660 = vrot.slane %v2545, 1
        %v2661 = vsel %vm492, %v2658, %v2660
        %v2662 = vrot.slane %v2546, 1
        %v2663 = vrot.slane %v2547, 1
        %v2664 = vsel %vm492, %v2662, %v2663
        %v2665 = vrot.slane %v2548, 1
        %v2666 = vsel %vm492, %v2663, %v2665
        %v2667 = vrot.slane %v2549, 1
        %v2668 = vrot.slane %v2550, 1
        %v2669 = vsel %vm492, %v2667, %v2668
        %v2670 = vrot.slane %v2551, 1
        %v2671 = vsel %vm492, %v2668, %v2670
        %v2672 = vrot.slane %v2552, 1
        %v2673 = vrot.slane %v2553, 1
        %v2674 = vsel %vm492, %v2672, %v2673
        %v2675 = vrot.slane %v2554, 1
        %v2676 = vsel %vm492, %v2673, %v2675
        %v2677 = vrot.slane %v2555, 1
        %v2678 = vrot.slane %v2556, 1
        %v2679 = vsel %vm492, %v2677, %v2678
        %v2680 = vrot.slane %v2557, 1
        %v2681 = vsel %vm492, %v2678, %v2680
        %v2682 = vrot.slane %v2558, 1
        %v2683 = vrot.slane %v2559, 1
        %v2684 = vsel %vm492, %v2682, %v2683
        %v2685 = vrot.slane %v2560, 1
        %v2686 = vsel %vm492, %v2683, %v2685
        %v2687 = vrot.slane %v2561, 1
        %v2688 = vrot.slane %v2562, 1
        %v2689 = vsel %vm492, %v2687, %v2688
        %v2690 = vrot.slane %v2563, 1
        %v2691 = vsel %vm492, %v2688, %v2690
        %v2692 = vrot.slane %v2564, 1
        %v2693 = vrot.slane %v2565, 1
        %v2694 = vsel %vm492, %v2692, %v2693
        %v2695 = vrot.slane %v2566, 1
        %v2696 = vsel %vm492, %v2693, %v2695
        %v2697 = vrot.slane %v2567, 1
        %v2698 = vrot.slane %v2568, 1
        %v2699 = vsel %vm492, %v2697, %v2698
        %v2700 = vrot.slane %v2569, 1
        %v2701 = vsel %vm492, %v2698, %v2700
        %v2702 = vrot.slane %v2570, 1
        %v2703 = vrot.slane %v2571, 1
        %v2704 = vsel %vm492, %v2702, %v2703
        %v2705 = vrot.slane %v2572, 1
        %v2706 = vsel %vm492, %v2703, %v2705
        %v2739 = vrot.slane %v2525, 2
        %v2740 = vrot.slane %v2526, 2
        %v2741 = vsel %vm605, %v2739, %v2740
        %v2742 = vrot.slane %v2527, 2
        %v2743 = vsel %vm605, %v2740, %v2742
        %v2744 = vrot.slane %v2528, 2
        %v2745 = vrot.slane %v2529, 2
        %v2746 = vsel %vm605, %v2744, %v2745
        %v2747 = vrot.slane %v2530, 2
        %v2748 = vsel %vm605, %v2745, %v2747
        %v2749 = vrot.slane %v2531, 2
        %v2750 = vrot.slane %v2532, 2
        %v2751 = vsel %vm605, %v2749, %v2750
        %v2752 = vrot.slane %v2533, 2
        %v2753 = vsel %vm605, %v2750, %v2752
        %v2754 = vrot.slane %v2534, 2
        %v2755 = vrot.slane %v2535, 2
        %v2756 = vsel %vm605, %v2754, %v2755
        %v2757 = vrot.slane %v2536, 2
        %v2758 = vsel %vm605, %v2755, %v2757
        %v2759 = vrot.slane %v2537, 2
        %v2760 = vrot.slane %v2538, 2
        %v2761 = vsel %vm605, %v2759, %v2760
        %v2762 = vrot.slane %v2539, 2
        %v2763 = vsel %vm605, %v2760, %v2762
        %v2764 = vrot.slane %v2540, 2
        %v2765 = vrot.slane %v2541, 2
        %v2766 = vsel %vm605, %v2764, %v2765
        %v2767 = vrot.slane %v2542, 2
        %v2768 = vsel %vm605, %v2765, %v2767
        %v2769 = vrot.slane %v2543, 2
        %v2770 = vrot.slane %v2544, 2
        %v2771 = vsel %vm605, %v2769, %v2770
        %v2772 = vrot.slane %v2545, 2
        %v2773 = vsel %vm605, %v2770, %v2772
        %v2774 = vrot.slane %v2546, 2
        %v2775 = vrot.slane %v2547, 2
        %v2776 = vsel %vm605, %v2774, %v2775
        %v2777 = vrot.slane %v2548, 2
        %v2778 = vsel %vm605, %v2775, %v2777
        %v2779 = vrot.slane %v2549, 2
        %v2780 = vrot.slane %v2550, 2
        %v2781 = vsel %vm605, %v2779, %v2780
        %v2782 = vrot.slane %v2551, 2
        %v2783 = vsel %vm605, %v2780, %v2782
        %v2784 = vrot.slane %v2552, 2
        %v2785 = vrot.slane %v2553, 2
        %v2786 = vsel %vm605, %v2784, %v2785
        %v2787 = vrot.slane %v2554, 2
        %v2788 = vsel %vm605, %v2785, %v2787
        %v2789 = vrot.slane %v2555, 2
        %v2790 = vrot.slane %v2556, 2
        %v2791 = vsel %vm605, %v2789, %v2790
        %v2792 = vrot.slane %v2557, 2
        %v2793 = vsel %vm605, %v2790, %v2792
        %v2794 = vrot.slane %v2558, 2
        %v2795 = vrot.slane %v2559, 2
        %v2796 = vsel %vm605, %v2794, %v2795
        %v2797 = vrot.slane %v2560, 2
        %v2798 = vsel %vm605, %v2795, %v2797
        %v2799 = vrot.slane %v2561, 2
        %v2800 = vrot.slane %v2562, 2
        %v2801 = vsel %vm605, %v2799, %v2800
        %v2802 = vrot.slane %v2563, 2
        %v2803 = vsel %vm605, %v2800, %v2802
        %v2804 = vrot.slane %v2564, 2
        %v2805 = vrot.slane %v2565, 2
        %v2806 = vsel %vm605, %v2804, %v2805
        %v2807 = vrot.slane %v2566, 2
        %v2808 = vsel %vm605, %v2805, %v2807
        %v2809 = vrot.slane %v2567, 2
        %v2810 = vrot.slane %v2568, 2
        %v2811 = vsel %vm605, %v2809, %v2810
        %v2812 = vrot.slane %v2569, 2
        %v2813 = vsel %vm605, %v2810, %v2812
        %v2814 = vrot.slane %v2570, 2
        %v2815 = vrot.slane %v2571, 2
        %v2816 = vsel %vm605, %v2814, %v2815
        %v2817 = vrot.slane %v2572, 2
        %v2818 = vsel %vm605, %v2815, %v2817
        %v2851 = vpack.c.bf16 %v2526, %v2525
        %v2852 = vpack.c.bf16 %v2631, %v2629
        %v2853 = vpack.c.bf16 %v2743, %v2741
        %v2854 = vpack.c.bf16 %v2529, %v2528
        %v2855 = vpack.c.bf16 %v2636, %v2634
        %v2856 = vpack.c.bf16 %v2748, %v2746
        %v2857 = vpack.c.bf16 %v2532, %v2531
        %v2858 = vpack.c.bf16 %v2641, %v2639
        %v2859 = vpack.c.bf16 %v2753, %v2751
        %v2860 = vpack.c.bf16 %v2535, %v2534
        %v2861 = vpack.c.bf16 %v2646, %v2644
        %v2862 = vpack.c.bf16 %v2758, %v2756
        %v2863 = vpack.c.bf16 %v2538, %v2537
        %v2864 = vpack.c.bf16 %v2651, %v2649
        %v2865 = vpack.c.bf16 %v2763, %v2761
        %v2866 = vpack.c.bf16 %v2541, %v2540
        %v2867 = vpack.c.bf16 %v2656, %v2654
        %v2868 = vpack.c.bf16 %v2768, %v2766
        %v2869 = vpack.c.bf16 %v2544, %v2543
        %v2870 = vpack.c.bf16 %v2661, %v2659
        %v2871 = vpack.c.bf16 %v2773, %v2771
        %v2872 = vpack.c.bf16 %v2547, %v2546
        %v2873 = vpack.c.bf16 %v2666, %v2664
        %v2874 = vpack.c.bf16 %v2778, %v2776
        %v2875 = vpack.c.bf16 %v2550, %v2549
        %v2876 = vpack.c.bf16 %v2671, %v2669
        %v2877 = vpack.c.bf16 %v2783, %v2781
        %v2878 = vpack.c.bf16 %v2553, %v2552
        %v2879 = vpack.c.bf16 %v2676, %v2674
        %v2880 = vpack.c.bf16 %v2788, %v2786
        %v2881 = vpack.c.bf16 %v2556, %v2555
        %v2882 = vpack.c.bf16 %v2681, %v2679
        %v2883 = vpack.c.bf16 %v2793, %v2791
        %v2884 = vpack.c.bf16 %v2559, %v2558
        %v2885 = vpack.c.bf16 %v2686, %v2684
        %v2886 = vpack.c.bf16 %v2798, %v2796
        %v2887 = vpack.c.bf16 %v2562, %v2561
        %v2888 = vpack.c.bf16 %v2691, %v2689
        %v2889 = vpack.c.bf16 %v2803, %v2801
        %v2890 = vpack.c.bf16 %v2565, %v2564
        %v2891 = vpack.c.bf16 %v2696, %v2694
        %v2892 = vpack.c.bf16 %v2808, %v2806
        %v2893 = vpack.c.bf16 %v2568, %v2567
        %v2894 = vpack.c.bf16 %v2701, %v2699
        %v2895 = vpack.c.bf16 %v2813, %v2811
        %v2896 = vpack.c.bf16 %v2571, %v2570
        %v2897 = vpack.c.bf16 %v2706, %v2704
        %v2898 = vpack.c.bf16 %v2818, %v2816
        %v2899 = vld [vmem:[#allocation3] sm:$0xf]
        %v2900 = vld [vmem:[#allocation3 + $0x4] sm:$0xf]
        %v2901 = vld [vmem:[#allocation3 + $0x8] sm:$0xf]
        %v2902 = vld [vmem:[#allocation3 + $0xc] sm:$0xf]
        %v2903 = vld [vmem:[#allocation3 + $0x10] sm:$0xf]
        %v2904 = vld [vmem:[#allocation3 + $0x14] sm:$0xf]
        %v2905 = vld [vmem:[#allocation3 + $0x18] sm:$0xf]
        %v2906 = vld [vmem:[#allocation3 + $0x1c] sm:$0xf]
        %v2907 = vld [vmem:[#allocation3 + $0x20] sm:$0xf]
        %v2908 = vld [vmem:[#allocation3 + $0x24] sm:$0xf]
        %v2909 = vld [vmem:[#allocation3 + $0x28] sm:$0xf]
        %v2910 = vld [vmem:[#allocation3 + $0x2c] sm:$0xf]
        %v2911 = vld [vmem:[#allocation3 + $0x30] sm:$0xf]
        %v2912 = vld [vmem:[#allocation3 + $0x34] sm:$0xf]
        %v2913 = vld [vmem:[#allocation3 + $0x38] sm:$0xf]
        %v2914 = vld [vmem:[#allocation3 + $0x3c] sm:$0xf]
        %v2915 = vld [vmem:[#allocation3 + $0x40] sm:$0xf]
        %v2916 = vld [vmem:[#allocation3 + $0x44] sm:$0xf]
        %v2917 = vld [vmem:[#allocation3 + $0x48] sm:$0xf]
        %v2918 = vld [vmem:[#allocation3 + $0x4c] sm:$0xf]
        %v2919 = vld [vmem:[#allocation3 + $0x50] sm:$0xf]
        %v2920 = vld [vmem:[#allocation3 + $0x54] sm:$0xf]
        %v2921 = vld [vmem:[#allocation3 + $0x58] sm:$0xf]
        %v2922 = vld [vmem:[#allocation3 + $0x5c] sm:$0xf]
        %v2923 = vld [vmem:[#allocation3 + $0x60] sm:$0xf]
        %v2924 = vld [vmem:[#allocation3 + $0x64] sm:$0xf]
        %v2925 = vld [vmem:[#allocation3 + $0x68] sm:$0xf]
        %v2926 = vld [vmem:[#allocation3 + $0x6c] sm:$0xf]
        %v2927 = vld [vmem:[#allocation3 + $0x70] sm:$0xf]
        %v2928 = vld [vmem:[#allocation3 + $0x74] sm:$0xf]
        %v2929 = vld [vmem:[#allocation3 + $0x78] sm:$0xf]
        %v2930 = vld [vmem:[#allocation3 + $0x7c] sm:$0xf]
        %v2931 = vld [vmem:[#allocation3 + $0x80] sm:$0xf]
        %v2932 = vld [vmem:[#allocation3 + $0x84] sm:$0xf]
        %v2933 = vld [vmem:[#allocation3 + $0x88] sm:$0xf]
        %v2934 = vld [vmem:[#allocation3 + $0x8c] sm:$0xf]
        %v2935 = vld [vmem:[#allocation3 + $0x90] sm:$0xf]
        %v2936 = vld [vmem:[#allocation3 + $0x94] sm:$0xf]
        %v2937 = vld [vmem:[#allocation3 + $0x98] sm:$0xf]
        %v2938 = vld [vmem:[#allocation3 + $0x9c] sm:$0xf]
        %v2939 = vld [vmem:[#allocation3 + $0xa0] sm:$0xf]
        %v2940 = vld [vmem:[#allocation3 + $0xa4] sm:$0xf]
        %v2941 = vld [vmem:[#allocation3 + $0xa8] sm:$0xf]
        %v2942 = vld [vmem:[#allocation3 + $0xac] sm:$0xf]
        %v2943 = vld [vmem:[#allocation3 + $0xb0] sm:$0xf]
        %v2944 = vld [vmem:[#allocation3 + $0xb4] sm:$0xf]
        %v2945 = vld [vmem:[#allocation3 + $0xb8] sm:$0xf]
        %v2946 = vld [vmem:[#allocation3 + $0xbc] sm:$0xf]
        %v2950 = vrot.slane %v2573, 1
        %v2951 = vrot.slane %v2574, 1
        %v2952 = vsel %vm492, %v2950, %v2951
        %v2953 = vrot.slane %v2575, 1
        %v2954 = vsel %vm492, %v2951, %v2953
        %v2957 = vrot.slane %v2573, 2
        %v2958 = vrot.slane %v2574, 2
        %v2959 = vsel %vm605, %v2957, %v2958
        %v2960 = vrot.slane %v2575, 2
        %v2961 = vsel %vm605, %v2958, %v2960
        %v2964 = vpack.c.bf16 %v2574, %v2573
        %v2965 = vpack.c.bf16 %v2954, %v2952
        %v2966 = vpack.c.bf16 %v2961, %v2959
        %s2967 = scalar_lea.vmem [#allocation3], 192
        %v2968 = vld [vmem:[%s2967] sm:$0xf]
        %v2969 = vld [vmem:[%s2967 + $0x4] sm:$0xf]
        %v2970 = vld [vmem:[%s2967 + $0x8] sm:$0xf]
        %v2971 = vld [vmem:[%s2967 + $0xc] sm:$0xf]
        %v2972 = vld [vmem:[%s2967 + $0x10] sm:$0xf]
        %v2973 = vld [vmem:[%s2967 + $0x14] sm:$0xf]
        %v2974 = vld [vmem:[%s2967 + $0x18] sm:$0xf]
        %v2975 = vld [vmem:[%s2967 + $0x1c] sm:$0xf]
        %v2976 = vld [vmem:[%s2967 + $0x20] sm:$0xf]
        %v2977 = vld [vmem:[%s2967 + $0x24] sm:$0xf]
        %v2978 = vld [vmem:[%s2967 + $0x28] sm:$0xf]
        %v2979 = vld [vmem:[%s2967 + $0x2c] sm:$0xf]
        %v2980 = vld [vmem:[%s2967 + $0x30] sm:$0xf]
        %v2981 = vld [vmem:[%s2967 + $0x34] sm:$0xf]
        %v2982 = vld [vmem:[%s2967 + $0x38] sm:$0xf]
        %v2983 = vld [vmem:[%s2967 + $0x3c] sm:$0xf]
        %v2984 = vld [vmem:[%s2967 + $0x40] sm:$0xf]
        %v2985 = vld [vmem:[%s2967 + $0x44] sm:$0xf]
        %v2986 = vld [vmem:[%s2967 + $0x48] sm:$0xf]
        %v2987 = vld [vmem:[%s2967 + $0x4c] sm:$0xf]
        %v2988 = vld [vmem:[%s2967 + $0x50] sm:$0xf]
        %v2989 = vld [vmem:[%s2967 + $0x54] sm:$0xf]
        %v2990 = vld [vmem:[%s2967 + $0x58] sm:$0xf]
        %v2991 = vld [vmem:[%s2967 + $0x5c] sm:$0xf]
        %v2992 = vld [vmem:[%s2967 + $0x60] sm:$0xf]
        %v2993 = vld [vmem:[%s2967 + $0x64] sm:$0xf]
        %v2994 = vld [vmem:[%s2967 + $0x68] sm:$0xf]
        %v2995 = vld [vmem:[%s2967 + $0x6c] sm:$0xf]
        %v2996 = vld [vmem:[%s2967 + $0x70] sm:$0xf]
        %v2997 = vld [vmem:[%s2967 + $0x74] sm:$0xf]
        %v2998 = vld [vmem:[%s2967 + $0x78] sm:$0xf]
        %v2999 = vld [vmem:[%s2967 + $0x7c] sm:$0xf]
        %v3000 = vld [vmem:[%s2967 + $0x80] sm:$0xf]
        %v3001 = vld [vmem:[%s2967 + $0x84] sm:$0xf]
        %v3002 = vld [vmem:[%s2967 + $0x88] sm:$0xf]
        %v3003 = vld [vmem:[%s2967 + $0x8c] sm:$0xf]
        %v3004 = vld [vmem:[%s2967 + $0x90] sm:$0xf]
        %v3005 = vld [vmem:[%s2967 + $0x94] sm:$0xf]
        %v3006 = vld [vmem:[%s2967 + $0x98] sm:$0xf]
        %v3007 = vld [vmem:[%s2967 + $0x9c] sm:$0xf]
        %v3008 = vld [vmem:[%s2967 + $0xa0] sm:$0xf]
        %v3009 = vld [vmem:[%s2967 + $0xa4] sm:$0xf]
        %v3010 = vld [vmem:[%s2967 + $0xa8] sm:$0xf]
        %v3011 = vld [vmem:[%s2967 + $0xac] sm:$0xf]
        %v3012 = vld [vmem:[%s2967 + $0xb0] sm:$0xf]
        %v3013 = vld [vmem:[%s2967 + $0xb4] sm:$0xf]
        %v3014 = vld [vmem:[%s2967 + $0xb8] sm:$0xf]
        %v3015 = vld [vmem:[%s2967 + $0xbc] sm:$0xf]
        %v3064 = vunpack.c.l.b16 %v2968
        %v3065 = vunpack.c.l.b16 %v2969
        %v3066 = vunpack.c.l.b16 %v2970
        %v3067 = vunpack.c.l.b16 %v2971
        %v3068 = vunpack.c.l.b16 %v2972
        %v3069 = vunpack.c.l.b16 %v2973
        %v3070 = vunpack.c.l.b16 %v2974
        %v3071 = vunpack.c.l.b16 %v2975
        %v3072 = vunpack.c.l.b16 %v2976
        %v3073 = vunpack.c.l.b16 %v2977
        %v3074 = vunpack.c.l.b16 %v2978
        %v3075 = vunpack.c.l.b16 %v2979
        %v3076 = vunpack.c.l.b16 %v2980
        %v3077 = vunpack.c.l.b16 %v2981
        %v3078 = vunpack.c.l.b16 %v2982
        %v3079 = vunpack.c.l.b16 %v2983
        %v3080 = vunpack.c.l.b16 %v2984
        %v3081 = vunpack.c.l.b16 %v2985
        %v3082 = vunpack.c.l.b16 %v2986
        %v3083 = vunpack.c.l.b16 %v2987
        %v3084 = vunpack.c.l.b16 %v2988
        %v3085 = vunpack.c.l.b16 %v2989
        %v3086 = vunpack.c.l.b16 %v2990
        %v3087 = vunpack.c.l.b16 %v2991
        %v3088 = vunpack.c.l.b16 %v2992
        %v3089 = vunpack.c.l.b16 %v2993
        %v3090 = vunpack.c.l.b16 %v2994
        %v3091 = vunpack.c.l.b16 %v2995
        %v3092 = vunpack.c.l.b16 %v2996
        %v3093 = vunpack.c.l.b16 %v2997
        %v3094 = vunpack.c.l.b16 %v2998
        %v3095 = vunpack.c.l.b16 %v2999
        %v3096 = vunpack.c.l.b16 %v3000
        %v3097 = vunpack.c.l.b16 %v3001
        %v3098 = vunpack.c.l.b16 %v3002
        %v3099 = vunpack.c.l.b16 %v3003
        %v3100 = vunpack.c.l.b16 %v3004
        %v3101 = vunpack.c.l.b16 %v3005
        %v3102 = vunpack.c.l.b16 %v3006
        %v3103 = vunpack.c.l.b16 %v3007
        %v3104 = vunpack.c.l.b16 %v3008
        %v3105 = vunpack.c.l.b16 %v3009
        %v3106 = vunpack.c.l.b16 %v3010
        %v3107 = vunpack.c.l.b16 %v3011
        %v3108 = vunpack.c.l.b16 %v3012
        %v3109 = vunpack.c.l.b16 %v3013
        %v3110 = vunpack.c.l.b16 %v3014
        %v3111 = vunpack.c.l.b16 %v3015
        %v3112 = vpack.c.b16 %v3065, %v3064
        %v3113 = vpack.c.b16 %v3067, %v3066
        %v3114 = vpack.c.b16 %v3069, %v3068
        %v3115 = vpack.c.b16 %v3071, %v3070
        %v3116 = vpack.c.b16 %v3073, %v3072
        %v3117 = vpack.c.b16 %v3075, %v3074
        %v3118 = vpack.c.b16 %v3077, %v3076
        %v3119 = vpack.c.b16 %v3079, %v3078
        %v3120 = vpack.c.b16 %v3081, %v3080
        %v3121 = vpack.c.b16 %v3083, %v3082
        %v3122 = vpack.c.b16 %v3085, %v3084
        %v3123 = vpack.c.b16 %v3087, %v3086
        %v3124 = vpack.c.b16 %v3089, %v3088
        %v3125 = vpack.c.b16 %v3091, %v3090
        %v3126 = vpack.c.b16 %v3093, %v3092
        %v3127 = vpack.c.b16 %v3095, %v3094
        %v3128 = vpack.c.b16 %v3097, %v3096
        %v3129 = vpack.c.b16 %v3099, %v3098
        %v3130 = vpack.c.b16 %v3101, %v3100
        %v3131 = vpack.c.b16 %v3103, %v3102
        %v3132 = vpack.c.b16 %v3105, %v3104
        %v3133 = vpack.c.b16 %v3107, %v3106
        %v3134 = vpack.c.b16 %v3109, %v3108
        %v3135 = vpack.c.b16 %v3111, %v3110
        %3160 = vmatprep.subr.bf16.mxu0 0
        %3161 = vmatpush1.bf16.msra.mxu0 %v3119
        %3162 = vmatprep.subr.bf16.mxu0 0
        %3163 = vmatpush1.bf16.msra.mxu0 %v3118
        %3164 = vmatprep.subr.bf16.mxu0 0
        %3165 = vmatpush1.bf16.msra.mxu0 %v3117
        %3166 = vmatprep.subr.bf16.mxu0 0
        %3167 = vmatpush1.bf16.msra.mxu0 %v3116
        %3168 = vmatprep.subr.bf16.mxu0 0
        %3169 = vmatpush1.bf16.msra.mxu0 %v3115
        %3170 = vmatprep.subr.bf16.mxu0 0
        %3171 = vmatpush1.bf16.msra.mxu0 %v3114
        %3172 = vmatprep.subr.bf16.mxu0 0
        %3173 = vmatpush1.bf16.msra.mxu0 %v3113
        %3174 = vmatprep.subr.bf16.mxu0 0
        %3175 = vmatpush1.bf16.msra.mxu0 %v3112
        %3176 = vmatprep.subr.bf16.mxu0 0
        %3177 = vmatpush2.bf16.msra.mxu0 %v3127
        %3178 = vmatprep.subr.bf16.mxu0 0
        %3179 = vmatpush2.bf16.msra.mxu0 %v3126
        %3180 = vmatprep.subr.bf16.mxu0 0
        %3181 = vmatpush2.bf16.msra.mxu0 %v3125
        %3182 = vmatprep.subr.bf16.mxu0 0
        %3183 = vmatpush2.bf16.msra.mxu0 %v3124
        %3184 = vmatprep.subr.bf16.mxu0 0
        %3185 = vmatpush2.bf16.msra.mxu0 %v3123
        %3186 = vmatprep.subr.bf16.mxu0 0
        %3187 = vmatpush2.bf16.msra.mxu0 %v3122
        %3188 = vmatprep.subr.bf16.mxu0 0
        %3189 = vmatpush2.bf16.msra.mxu0 %v3121
        %3190 = vmatprep.subr.bf16.mxu0 0
        %3191 = vmatpush2.bf16.msra.mxu0 %v3120
        %3192 = vmatprep.mubr.bf16.mxu0 %v2855
        %3193 = vmatmul.mubr.bf16.gmra.mxu0 %v2854
        %v3194 = vpop.f32.mrf.mxu0
        %v3195 = vadd.f32 0.0, %v3194
        %v3196 = vpop.f32.mrf.mxu0
        %v3197 = vpop.f32.mrf.mxu0
        %v3198 = vadd.f32 0.0, %v3197
        %v3199 = vpop.f32.mrf.mxu0
        %3200 = vmatprep.mubr.bf16.mxu0 %v2858
        %3201 = vmatmul.mubr.bf16.gmra.mxu0 %v2857
        %v3202 = vpop.f32.mrf.mxu0
        %v3203 = vadd.f32 0.0, %v3202
        %v3204 = vpop.f32.mrf.mxu0
        %v3205 = vpop.f32.mrf.mxu0
        %v3206 = vadd.f32 0.0, %v3205
        %v3207 = vpop.f32.mrf.mxu0
        %3208 = vmatprep.mubr.bf16.mxu0 %v2861
        %3209 = vmatmul.mubr.bf16.gmra.mxu0 %v2860
        %v3210 = vpop.f32.mrf.mxu0
        %v3211 = vadd.f32 0.0, %v3210
        %v3212 = vpop.f32.mrf.mxu0
        %v3213 = vpop.f32.mrf.mxu0
        %v3214 = vadd.f32 0.0, %v3213
        %v3215 = vpop.f32.mrf.mxu0
        %3216 = vmatprep.mubr.bf16.mxu0 %v2864
        %3217 = vmatmul.mubr.bf16.gmra.mxu0 %v2863
        %v3218 = vpop.f32.mrf.mxu0
        %v3219 = vadd.f32 0.0, %v3218
        %v3220 = vpop.f32.mrf.mxu0
        %v3221 = vpop.f32.mrf.mxu0
        %v3222 = vadd.f32 0.0, %v3221
        %v3223 = vpop.f32.mrf.mxu0
        %3224 = vmatprep.mubr.bf16.mxu0 %v2867
        %3225 = vmatmul.mubr.bf16.gmra.mxu0 %v2866
        %v3226 = vpop.f32.mrf.mxu0
        %v3227 = vadd.f32 0.0, %v3226
        %v3228 = vpop.f32.mrf.mxu0
        %v3229 = vpop.f32.mrf.mxu0
        %v3230 = vadd.f32 0.0, %v3229
        %v3231 = vpop.f32.mrf.mxu0
        %3232 = vmatprep.mubr.bf16.mxu0 %v2870
        %3233 = vmatmul.mubr.bf16.gmra.mxu0 %v2869
        %v3234 = vpop.f32.mrf.mxu0
        %v3235 = vadd.f32 0.0, %v3234
        %v3236 = vpop.f32.mrf.mxu0
        %v3237 = vpop.f32.mrf.mxu0
        %v3238 = vadd.f32 0.0, %v3237
        %v3239 = vpop.f32.mrf.mxu0
        %3240 = vmatprep.mubr.bf16.mxu0 %v2873
        %3241 = vmatmul.mubr.bf16.gmra.mxu0 %v2872
        %v3242 = vpop.f32.mrf.mxu0
        %v3243 = vadd.f32 0.0, %v3242
        %v3244 = vpop.f32.mrf.mxu0
        %v3245 = vpop.f32.mrf.mxu0
        %v3246 = vadd.f32 0.0, %v3245
        %v3247 = vpop.f32.mrf.mxu0
        %3248 = vmatprep.mubr.bf16.mxu0 %v2876
        %3249 = vmatmul.mubr.bf16.gmra.mxu0 %v2875
        %v3250 = vpop.f32.mrf.mxu0
        %v3251 = vadd.f32 0.0, %v3250
        %v3252 = vpop.f32.mrf.mxu0
        %v3253 = vpop.f32.mrf.mxu0
        %v3254 = vadd.f32 0.0, %v3253
        %v3255 = vpop.f32.mrf.mxu0
        %3256 = vmatprep.mubr.bf16.mxu0 %v2879
        %3257 = vmatmul.mubr.bf16.gmra.mxu0 %v2878
        %v3258 = vpop.f32.mrf.mxu0
        %v3259 = vadd.f32 0.0, %v3258
        %v3260 = vpop.f32.mrf.mxu0
        %v3261 = vpop.f32.mrf.mxu0
        %v3262 = vadd.f32 0.0, %v3261
        %v3263 = vpop.f32.mrf.mxu0
        %3264 = vmatprep.mubr.bf16.mxu0 %v2882
        %3265 = vmatmul.mubr.bf16.gmra.mxu0 %v2881
        %v3266 = vpop.f32.mrf.mxu0
        %v3267 = vadd.f32 0.0, %v3266
        %v3268 = vpop.f32.mrf.mxu0
        %v3269 = vpop.f32.mrf.mxu0
        %v3270 = vadd.f32 0.0, %v3269
        %v3271 = vpop.f32.mrf.mxu0
        %3272 = vmatprep.mubr.bf16.mxu0 %v2885
        %3273 = vmatmul.mubr.bf16.gmra.mxu0 %v2884
        %v3274 = vpop.f32.mrf.mxu0
        %v3275 = vadd.f32 0.0, %v3274
        %v3276 = vpop.f32.mrf.mxu0
        %v3277 = vpop.f32.mrf.mxu0
        %v3278 = vadd.f32 0.0, %v3277
        %v3279 = vpop.f32.mrf.mxu0
        %3280 = vmatprep.mubr.bf16.mxu0 %v2888
        %3281 = vmatmul.mubr.bf16.gmra.mxu0 %v2887
        %v3282 = vpop.f32.mrf.mxu0
        %v3283 = vadd.f32 0.0, %v3282
        %v3284 = vpop.f32.mrf.mxu0
        %v3285 = vpop.f32.mrf.mxu0
        %v3286 = vadd.f32 0.0, %v3285
        %v3287 = vpop.f32.mrf.mxu0
        %3288 = vmatprep.mubr.bf16.mxu0 %v2891
        %3289 = vmatmul.mubr.bf16.gmra.mxu0 %v2890
        %v3290 = vpop.f32.mrf.mxu0
        %v3291 = vadd.f32 0.0, %v3290
        %v3292 = vpop.f32.mrf.mxu0
        %v3293 = vpop.f32.mrf.mxu0
        %v3294 = vadd.f32 0.0, %v3293
        %v3295 = vpop.f32.mrf.mxu0
        %3296 = vmatprep.mubr.bf16.mxu0 %v2894
        %3297 = vmatmul.mubr.bf16.gmra.mxu0 %v2893
        %v3298 = vpop.f32.mrf.mxu0
        %v3299 = vadd.f32 0.0, %v3298
        %v3300 = vpop.f32.mrf.mxu0
        %v3301 = vpop.f32.mrf.mxu0
        %v3302 = vadd.f32 0.0, %v3301
        %v3303 = vpop.f32.mrf.mxu0
        %3304 = vmatprep.mubr.bf16.mxu0 %v2897
        %3305 = vmatmul.mubr.bf16.gmra.mxu0 %v2896
        %v3306 = vpop.f32.mrf.mxu0
        %v3307 = vadd.f32 0.0, %v3306
        %v3308 = vpop.f32.mrf.mxu0
        %v3309 = vpop.f32.mrf.mxu0
        %v3310 = vadd.f32 0.0, %v3309
        %v3311 = vpop.f32.mrf.mxu0
        %3312 = vmatprep.mubr.bf16.mxu0 %v2965
        %3313 = vmatmul.mubr.bf16.gmra.mxu0 %v2964
        %v3314 = vpop.f32.mrf.mxu0
        %v3315 = vadd.f32 0.0, %v3314
        %v3316 = vpop.f32.mrf.mxu0
        %v3317 = vpop.f32.mrf.mxu0
        %v3318 = vadd.f32 0.0, %v3317
        %v3319 = vpop.f32.mrf.mxu0
        %3320 = vdwg.mxu0
        %3321 = vmatprep.subr.bf16.mxu0 0
        %3322 = vmatpush1.bf16.msra.mxu0 %v3135
        %3323 = vmatprep.subr.bf16.mxu0 0
        %3324 = vmatpush1.bf16.msra.mxu0 %v3134
        %3325 = vmatprep.subr.bf16.mxu0 0
        %3326 = vmatpush1.bf16.msra.mxu0 %v3133
        %3327 = vmatprep.subr.bf16.mxu0 0
        %3328 = vmatpush1.bf16.msra.mxu0 %v3132
        %3329 = vmatprep.subr.bf16.mxu0 0
        %3330 = vmatpush1.bf16.msra.mxu0 %v3131
        %3331 = vmatprep.subr.bf16.mxu0 0
        %3332 = vmatpush1.bf16.msra.mxu0 %v3130
        %3333 = vmatprep.subr.bf16.mxu0 0
        %3334 = vmatpush1.bf16.msra.mxu0 %v3129
        %3335 = vmatprep.subr.bf16.mxu0 0
        %3336 = vmatpush1.bf16.msra.mxu0 %v3128
        %3337 = vmatprep.subr.bf16.mxu0 0
        %3338 = vmatpush2.bf16.msra.mxu0 0
        %3339 = vmatprep.subr.bf16.mxu0 0
        %3340 = vmatpush2.bf16.msra.mxu0 0
        %3341 = vmatprep.subr.bf16.mxu0 0
        %3342 = vmatpush2.bf16.msra.mxu0 0
        %3343 = vmatprep.subr.bf16.mxu0 0
        %3344 = vmatpush2.bf16.msra.mxu0 0
        %3345 = vmatprep.subr.bf16.mxu0 0
        %3346 = vmatpush2.bf16.msra.mxu0 0
        %3347 = vmatprep.subr.bf16.mxu0 0
        %3348 = vmatpush2.bf16.msra.mxu0 0
        %3349 = vmatprep.subr.bf16.mxu0 0
        %3350 = vmatpush2.bf16.msra.mxu0 0
        %3351 = vmatprep.subr.bf16.mxu0 0
        %3352 = vmatpush2.bf16.msra.mxu0 0
        %3353 = vmatprep.mubr.bf16.mxu0 0
        %3354 = vmatmul.mubr.bf16.gmra.mxu0 %v2856
        %v3355 = vpop.f32.mrf.mxu0
        %v3356 = vadd.f32 %v3195, %v3355
        %v3357 = vpop.f32.mrf.mxu0
        %v3358 = vpop.f32.mrf.mxu0
        %v3359 = vadd.f32 %v3198, %v3358
        %v3360 = vpop.f32.mrf.mxu0
        %3361 = vmatprep.mubr.bf16.mxu0 0
        %3362 = vmatmul.mubr.bf16.gmra.mxu0 %v2859
        %v3363 = vpop.f32.mrf.mxu0
        %v3364 = vadd.f32 %v3203, %v3363
        %v3365 = vpop.f32.mrf.mxu0
        %v3366 = vpop.f32.mrf.mxu0
        %v3367 = vadd.f32 %v3206, %v3366
        %v3368 = vpop.f32.mrf.mxu0
        %3369 = vmatprep.mubr.bf16.mxu0 0
        %3370 = vmatmul.mubr.bf16.gmra.mxu0 %v2862
        %v3371 = vpop.f32.mrf.mxu0
        %v3372 = vadd.f32 %v3211, %v3371
        %v3373 = vpop.f32.mrf.mxu0
        %v3374 = vpop.f32.mrf.mxu0
        %v3375 = vadd.f32 %v3214, %v3374
        %v3376 = vpop.f32.mrf.mxu0
        %3377 = vmatprep.mubr.bf16.mxu0 0
        %3378 = vmatmul.mubr.bf16.gmra.mxu0 %v2865
        %v3379 = vpop.f32.mrf.mxu0
        %v3380 = vadd.f32 %v3219, %v3379
        %v3381 = vpop.f32.mrf.mxu0
        %v3382 = vpop.f32.mrf.mxu0
        %v3383 = vadd.f32 %v3222, %v3382
        %v3384 = vpop.f32.mrf.mxu0
        %3385 = vmatprep.mubr.bf16.mxu0 0
        %3386 = vmatmul.mubr.bf16.gmra.mxu0 %v2868
        %v3387 = vpop.f32.mrf.mxu0
        %v3388 = vadd.f32 %v3227, %v3387
        %v3389 = vpop.f32.mrf.mxu0
        %v3390 = vpop.f32.mrf.mxu0
        %v3391 = vadd.f32 %v3230, %v3390
        %v3392 = vpop.f32.mrf.mxu0
        %3393 = vmatprep.mubr.bf16.mxu0 0
        %3394 = vmatmul.mubr.bf16.gmra.mxu0 %v2871
        %v3395 = vpop.f32.mrf.mxu0
        %v3396 = vadd.f32 %v3235, %v3395
        %v3397 = vpop.f32.mrf.mxu0
        %v3398 = vpop.f32.mrf.mxu0
        %v3399 = vadd.f32 %v3238, %v3398
        %v3400 = vpop.f32.mrf.mxu0
        %3401 = vmatprep.mubr.bf16.mxu0 0
        %3402 = vmatmul.mubr.bf16.gmra.mxu0 %v2874
        %v3403 = vpop.f32.mrf.mxu0
        %v3404 = vadd.f32 %v3243, %v3403
        %v3405 = vpop.f32.mrf.mxu0
        %v3406 = vpop.f32.mrf.mxu0
        %v3407 = vadd.f32 %v3246, %v3406
        %v3408 = vpop.f32.mrf.mxu0
        %3409 = vmatprep.mubr.bf16.mxu0 0
        %3410 = vmatmul.mubr.bf16.gmra.mxu0 %v2877
        %v3411 = vpop.f32.mrf.mxu0
        %v3412 = vadd.f32 %v3251, %v3411
        %v3413 = vpop.f32.mrf.mxu0
        %v3414 = vpop.f32.mrf.mxu0
        %v3415 = vadd.f32 %v3254, %v3414
        %v3416 = vpop.f32.mrf.mxu0
        %3417 = vmatprep.mubr.bf16.mxu0 0
        %3418 = vmatmul.mubr.bf16.gmra.mxu0 %v2880
        %v3419 = vpop.f32.mrf.mxu0
        %v3420 = vadd.f32 %v3259, %v3419
        %v3421 = vpop.f32.mrf.mxu0
        %v3422 = vpop.f32.mrf.mxu0
        %v3423 = vadd.f32 %v3262, %v3422
        %v3424 = vpop.f32.mrf.mxu0
        %3425 = vmatprep.mubr.bf16.mxu0 0
        %3426 = vmatmul.mubr.bf16.gmra.mxu0 %v2883
        %v3427 = vpop.f32.mrf.mxu0
        %v3428 = vadd.f32 %v3267, %v3427
        %v3429 = vpop.f32.mrf.mxu0
        %v3430 = vpop.f32.mrf.mxu0
        %v3431 = vadd.f32 %v3270, %v3430
        %v3432 = vpop.f32.mrf.mxu0
        %3433 = vmatprep.mubr.bf16.mxu0 0
        %3434 = vmatmul.mubr.bf16.gmra.mxu0 %v2886
        %v3435 = vpop.f32.mrf.mxu0
        %v3436 = vadd.f32 %v3275, %v3435
        %v3437 = vpop.f32.mrf.mxu0
        %v3438 = vpop.f32.mrf.mxu0
        %v3439 = vadd.f32 %v3278, %v3438
        %v3440 = vpop.f32.mrf.mxu0
        %3441 = vmatprep.mubr.bf16.mxu0 0
        %3442 = vmatmul.mubr.bf16.gmra.mxu0 %v2889
        %v3443 = vpop.f32.mrf.mxu0
        %v3444 = vadd.f32 %v3283, %v3443
        %v3445 = vpop.f32.mrf.mxu0
        %v3446 = vpop.f32.mrf.mxu0
        %v3447 = vadd.f32 %v3286, %v3446
        %v3448 = vpop.f32.mrf.mxu0
        %3449 = vmatprep.mubr.bf16.mxu0 0
        %3450 = vmatmul.mubr.bf16.gmra.mxu0 %v2892
        %v3451 = vpop.f32.mrf.mxu0
        %v3452 = vadd.f32 %v3291, %v3451
        %v3453 = vpop.f32.mrf.mxu0
        %v3454 = vpop.f32.mrf.mxu0
        %v3455 = vadd.f32 %v3294, %v3454
        %v3456 = vpop.f32.mrf.mxu0
        %3457 = vmatprep.mubr.bf16.mxu0 0
        %3458 = vmatmul.mubr.bf16.gmra.mxu0 %v2895
        %v3459 = vpop.f32.mrf.mxu0
        %v3460 = vadd.f32 %v3299, %v3459
        %v3461 = vpop.f32.mrf.mxu0
        %v3462 = vpop.f32.mrf.mxu0
        %v3463 = vadd.f32 %v3302, %v3462
        %v3464 = vpop.f32.mrf.mxu0
        %3465 = vmatprep.mubr.bf16.mxu0 0
        %3466 = vmatmul.mubr.bf16.gmra.mxu0 %v2898
        %v3467 = vpop.f32.mrf.mxu0
        %v3468 = vadd.f32 %v3307, %v3467
        %v3469 = vpop.f32.mrf.mxu0
        %v3470 = vpop.f32.mrf.mxu0
        %v3471 = vadd.f32 %v3310, %v3470
        %v3472 = vpop.f32.mrf.mxu0
        %3473 = vmatprep.mubr.bf16.mxu0 0
        %3474 = vmatmul.mubr.bf16.gmra.mxu0 %v2966
        %v3475 = vpop.f32.mrf.mxu0
        %v3476 = vadd.f32 %v3315, %v3475
        %v3477 = vpop.f32.mrf.mxu0
        %v3478 = vpop.f32.mrf.mxu0
        %v3479 = vadd.f32 %v3318, %v3478
        %v3480 = vpop.f32.mrf.mxu0
        %3481 = vdwg.mxu0
        %v3530 = vunpack.c.l.b16 %v2899
        %v3531 = vunpack.c.l.b16 %v2900
        %v3532 = vunpack.c.l.b16 %v2901
        %v3533 = vunpack.c.l.b16 %v2902
        %v3534 = vunpack.c.l.b16 %v2903
        %v3535 = vunpack.c.l.b16 %v2904
        %v3536 = vunpack.c.l.b16 %v2905
        %v3537 = vunpack.c.l.b16 %v2906
        %v3538 = vunpack.c.l.b16 %v2907
        %v3539 = vunpack.c.l.b16 %v2908
        %v3540 = vunpack.c.l.b16 %v2909
        %v3541 = vunpack.c.l.b16 %v2910
        %v3542 = vunpack.c.l.b16 %v2911
        %v3543 = vunpack.c.l.b16 %v2912
        %v3544 = vunpack.c.l.b16 %v2913
        %v3545 = vunpack.c.l.b16 %v2914
        %v3546 = vunpack.c.l.b16 %v2915
        %v3547 = vunpack.c.l.b16 %v2916
        %v3548 = vunpack.c.l.b16 %v2917
        %v3549 = vunpack.c.l.b16 %v2918
        %v3550 = vunpack.c.l.b16 %v2919
        %v3551 = vunpack.c.l.b16 %v2920
        %v3552 = vunpack.c.l.b16 %v2921
        %v3553 = vunpack.c.l.b16 %v2922
        %v3554 = vunpack.c.l.b16 %v2923
        %v3555 = vunpack.c.l.b16 %v2924
        %v3556 = vunpack.c.l.b16 %v2925
        %v3557 = vunpack.c.l.b16 %v2926
        %v3558 = vunpack.c.l.b16 %v2927
        %v3559 = vunpack.c.l.b16 %v2928
        %v3560 = vunpack.c.l.b16 %v2929
        %v3561 = vunpack.c.l.b16 %v2930
        %v3562 = vunpack.c.l.b16 %v2931
        %v3563 = vunpack.c.l.b16 %v2932
        %v3564 = vunpack.c.l.b16 %v2933
        %v3565 = vunpack.c.l.b16 %v2934
        %v3566 = vunpack.c.l.b16 %v2935
        %v3567 = vunpack.c.l.b16 %v2936
        %v3568 = vunpack.c.l.b16 %v2937
        %v3569 = vunpack.c.l.b16 %v2938
        %v3570 = vunpack.c.l.b16 %v2939
        %v3571 = vunpack.c.l.b16 %v2940
        %v3572 = vunpack.c.l.b16 %v2941
        %v3573 = vunpack.c.l.b16 %v2942
        %v3574 = vunpack.c.l.b16 %v2943
        %v3575 = vunpack.c.l.b16 %v2944
        %v3576 = vunpack.c.l.b16 %v2945
        %v3577 = vunpack.c.l.b16 %v2946
        %v3578 = vpack.c.b16 %v3531, %v3530
        %v3579 = vpack.c.b16 %v3533, %v3532
        %v3580 = vpack.c.b16 %v3535, %v3534
        %v3581 = vpack.c.b16 %v3537, %v3536
        %v3582 = vpack.c.b16 %v3539, %v3538
        %v3583 = vpack.c.b16 %v3541, %v3540
        %v3584 = vpack.c.b16 %v3543, %v3542
        %v3585 = vpack.c.b16 %v3545, %v3544
        %v3586 = vpack.c.b16 %v3547, %v3546
        %v3587 = vpack.c.b16 %v3549, %v3548
        %v3588 = vpack.c.b16 %v3551, %v3550
        %v3589 = vpack.c.b16 %v3553, %v3552
        %v3590 = vpack.c.b16 %v3555, %v3554
        %v3591 = vpack.c.b16 %v3557, %v3556
        %v3592 = vpack.c.b16 %v3559, %v3558
        %v3593 = vpack.c.b16 %v3561, %v3560
        %v3594 = vpack.c.b16 %v3563, %v3562
        %v3595 = vpack.c.b16 %v3565, %v3564
        %v3596 = vpack.c.b16 %v3567, %v3566
        %v3597 = vpack.c.b16 %v3569, %v3568
        %v3598 = vpack.c.b16 %v3571, %v3570
        %v3599 = vpack.c.b16 %v3573, %v3572
        %v3600 = vpack.c.b16 %v3575, %v3574
        %v3601 = vpack.c.b16 %v3577, %v3576
        %3626 = vmatprep.subr.bf16.mxu0 0
        %3627 = vmatpush1.bf16.msra.mxu0 %v3585
        %3628 = vmatprep.subr.bf16.mxu0 0
        %3629 = vmatpush1.bf16.msra.mxu0 %v3584
        %3630 = vmatprep.subr.bf16.mxu0 0
        %3631 = vmatpush1.bf16.msra.mxu0 %v3583
        %3632 = vmatprep.subr.bf16.mxu0 0
        %3633 = vmatpush1.bf16.msra.mxu0 %v3582
        %3634 = vmatprep.subr.bf16.mxu0 0
        %3635 = vmatpush1.bf16.msra.mxu0 %v3581
        %3636 = vmatprep.subr.bf16.mxu0 0
        %3637 = vmatpush1.bf16.msra.mxu0 %v3580
        %3638 = vmatprep.subr.bf16.mxu0 0
        %3639 = vmatpush1.bf16.msra.mxu0 %v3579
        %3640 = vmatprep.subr.bf16.mxu0 0
        %3641 = vmatpush1.bf16.msra.mxu0 %v3578
        %3642 = vmatprep.subr.bf16.mxu0 0
        %3643 = vmatpush2.bf16.msra.mxu0 %v3593
        %3644 = vmatprep.subr.bf16.mxu0 0
        %3645 = vmatpush2.bf16.msra.mxu0 %v3592
        %3646 = vmatprep.subr.bf16.mxu0 0
        %3647 = vmatpush2.bf16.msra.mxu0 %v3591
        %3648 = vmatprep.subr.bf16.mxu0 0
        %3649 = vmatpush2.bf16.msra.mxu0 %v3590
        %3650 = vmatprep.subr.bf16.mxu0 0
        %3651 = vmatpush2.bf16.msra.mxu0 %v3589
        %3652 = vmatprep.subr.bf16.mxu0 0
        %3653 = vmatpush2.bf16.msra.mxu0 %v3588
        %3654 = vmatprep.subr.bf16.mxu0 0
        %3655 = vmatpush2.bf16.msra.mxu0 %v3587
        %3656 = vmatprep.subr.bf16.mxu0 0
        %3657 = vmatpush2.bf16.msra.mxu0 %v3586
        %3658 = vmatprep.mubr.bf16.mxu0 %v2852
        %3659 = vmatmul.mubr.bf16.gmra.mxu0 %v2851
        %v3660 = vpop.f32.mrf.mxu0
        %v3661 = vadd.f32 %v3356, %v3660
        %v3662 = vpop.f32.mrf.mxu0
        %v3663 = vpop.f32.mrf.mxu0
        %v3664 = vadd.f32 %v3359, %v3663
        %v3665 = vpop.f32.mrf.mxu0
        %3666 = vmatprep.mubr.bf16.mxu0 %v2855
        %3667 = vmatmul.mubr.bf16.gmra.mxu0 %v2854
        %v3668 = vpop.f32.mrf.mxu0
        %v3669 = vadd.f32 %v3364, %v3668
        %v3670 = vpop.f32.mrf.mxu0
        %v3671 = vpop.f32.mrf.mxu0
        %v3672 = vadd.f32 %v3367, %v3671
        %v3673 = vpop.f32.mrf.mxu0
        %3674 = vmatprep.mubr.bf16.mxu0 %v2858
        %3675 = vmatmul.mubr.bf16.gmra.mxu0 %v2857
        %v3676 = vpop.f32.mrf.mxu0
        %v3677 = vadd.f32 %v3372, %v3676
        %v3678 = vpop.f32.mrf.mxu0
        %v3679 = vpop.f32.mrf.mxu0
        %v3680 = vadd.f32 %v3375, %v3679
        %v3681 = vpop.f32.mrf.mxu0
        %3682 = vmatprep.mubr.bf16.mxu0 %v2861
        %3683 = vmatmul.mubr.bf16.gmra.mxu0 %v2860
        %v3684 = vpop.f32.mrf.mxu0
        %v3685 = vadd.f32 %v3380, %v3684
        %v3686 = vpop.f32.mrf.mxu0
        %v3687 = vpop.f32.mrf.mxu0
        %v3688 = vadd.f32 %v3383, %v3687
        %v3689 = vpop.f32.mrf.mxu0
        %3690 = vmatprep.mubr.bf16.mxu0 %v2864
        %3691 = vmatmul.mubr.bf16.gmra.mxu0 %v2863
        %v3692 = vpop.f32.mrf.mxu0
        %v3693 = vadd.f32 %v3388, %v3692
        %v3694 = vpop.f32.mrf.mxu0
        %v3695 = vpop.f32.mrf.mxu0
        %v3696 = vadd.f32 %v3391, %v3695
        %v3697 = vpop.f32.mrf.mxu0
        %3698 = vmatprep.mubr.bf16.mxu0 %v2867
        %3699 = vmatmul.mubr.bf16.gmra.mxu0 %v2866
        %v3700 = vpop.f32.mrf.mxu0
        %v3701 = vadd.f32 %v3396, %v3700
        %v3702 = vpop.f32.mrf.mxu0
        %v3703 = vpop.f32.mrf.mxu0
        %v3704 = vadd.f32 %v3399, %v3703
        %v3705 = vpop.f32.mrf.mxu0
        %3706 = vmatprep.mubr.bf16.mxu0 %v2870
        %3707 = vmatmul.mubr.bf16.gmra.mxu0 %v2869
        %v3708 = vpop.f32.mrf.mxu0
        %v3709 = vadd.f32 %v3404, %v3708
        %v3710 = vpop.f32.mrf.mxu0
        %v3711 = vpop.f32.mrf.mxu0
        %v3712 = vadd.f32 %v3407, %v3711
        %v3713 = vpop.f32.mrf.mxu0
        %3714 = vmatprep.mubr.bf16.mxu0 %v2873
        %3715 = vmatmul.mubr.bf16.gmra.mxu0 %v2872
        %v3716 = vpop.f32.mrf.mxu0
        %v3717 = vadd.f32 %v3412, %v3716
        %v3718 = vpop.f32.mrf.mxu0
        %v3719 = vpop.f32.mrf.mxu0
        %v3720 = vadd.f32 %v3415, %v3719
        %v3721 = vpop.f32.mrf.mxu0
        %3722 = vmatprep.mubr.bf16.mxu0 %v2876
        %3723 = vmatmul.mubr.bf16.gmra.mxu0 %v2875
        %v3724 = vpop.f32.mrf.mxu0
        %v3725 = vadd.f32 %v3420, %v3724
        %v3726 = vpop.f32.mrf.mxu0
        %v3727 = vpop.f32.mrf.mxu0
        %v3728 = vadd.f32 %v3423, %v3727
        %v3729 = vpop.f32.mrf.mxu0
        %3730 = vmatprep.mubr.bf16.mxu0 %v2879
        %3731 = vmatmul.mubr.bf16.gmra.mxu0 %v2878
        %v3732 = vpop.f32.mrf.mxu0
        %v3733 = vadd.f32 %v3428, %v3732
        %v3734 = vpop.f32.mrf.mxu0
        %v3735 = vpop.f32.mrf.mxu0
        %v3736 = vadd.f32 %v3431, %v3735
        %v3737 = vpop.f32.mrf.mxu0
        %3738 = vmatprep.mubr.bf16.mxu0 %v2882
        %3739 = vmatmul.mubr.bf16.gmra.mxu0 %v2881
        %v3740 = vpop.f32.mrf.mxu0
        %v3741 = vadd.f32 %v3436, %v3740
        %v3742 = vpop.f32.mrf.mxu0
        %v3743 = vpop.f32.mrf.mxu0
        %v3744 = vadd.f32 %v3439, %v3743
        %v3745 = vpop.f32.mrf.mxu0
        %3746 = vmatprep.mubr.bf16.mxu0 %v2885
        %3747 = vmatmul.mubr.bf16.gmra.mxu0 %v2884
        %v3748 = vpop.f32.mrf.mxu0
        %v3749 = vadd.f32 %v3444, %v3748
        %v3750 = vpop.f32.mrf.mxu0
        %v3751 = vpop.f32.mrf.mxu0
        %v3752 = vadd.f32 %v3447, %v3751
        %v3753 = vpop.f32.mrf.mxu0
        %3754 = vmatprep.mubr.bf16.mxu0 %v2888
        %3755 = vmatmul.mubr.bf16.gmra.mxu0 %v2887
        %v3756 = vpop.f32.mrf.mxu0
        %v3757 = vadd.f32 %v3452, %v3756
        %v3758 = vpop.f32.mrf.mxu0
        %v3759 = vpop.f32.mrf.mxu0
        %v3760 = vadd.f32 %v3455, %v3759
        %v3761 = vpop.f32.mrf.mxu0
        %3762 = vmatprep.mubr.bf16.mxu0 %v2891
        %3763 = vmatmul.mubr.bf16.gmra.mxu0 %v2890
        %v3764 = vpop.f32.mrf.mxu0
        %v3765 = vadd.f32 %v3460, %v3764
        %v3766 = vpop.f32.mrf.mxu0
        %v3767 = vpop.f32.mrf.mxu0
        %v3768 = vadd.f32 %v3463, %v3767
        %v3769 = vpop.f32.mrf.mxu0
        %3770 = vmatprep.mubr.bf16.mxu0 %v2894
        %3771 = vmatmul.mubr.bf16.gmra.mxu0 %v2893
        %v3772 = vpop.f32.mrf.mxu0
        %v3773 = vadd.f32 %v3468, %v3772
        %v3774 = vpop.f32.mrf.mxu0
        %v3775 = vpop.f32.mrf.mxu0
        %v3776 = vadd.f32 %v3471, %v3775
        %v3777 = vpop.f32.mrf.mxu0
        %3778 = vmatprep.mubr.bf16.mxu0 %v2897
        %3779 = vmatmul.mubr.bf16.gmra.mxu0 %v2896
        %v3780 = vpop.f32.mrf.mxu0
        %v3781 = vadd.f32 %v3476, %v3780
        %v3782 = vpop.f32.mrf.mxu0
        %v3783 = vpop.f32.mrf.mxu0
        %v3784 = vadd.f32 %v3479, %v3783
        %v3785 = vpop.f32.mrf.mxu0
        %3786 = vdwg.mxu0
        %3787 = vmatprep.subr.bf16.mxu0 0
        %3788 = vmatpush1.bf16.msra.mxu0 %v3601
        %3789 = vmatprep.subr.bf16.mxu0 0
        %3790 = vmatpush1.bf16.msra.mxu0 %v3600
        %3791 = vmatprep.subr.bf16.mxu0 0
        %3792 = vmatpush1.bf16.msra.mxu0 %v3599
        %3793 = vmatprep.subr.bf16.mxu0 0
        %3794 = vmatpush1.bf16.msra.mxu0 %v3598
        %3795 = vmatprep.subr.bf16.mxu0 0
        %3796 = vmatpush1.bf16.msra.mxu0 %v3597
        %3797 = vmatprep.subr.bf16.mxu0 0
        %3798 = vmatpush1.bf16.msra.mxu0 %v3596
        %3799 = vmatprep.subr.bf16.mxu0 0
        %3800 = vmatpush1.bf16.msra.mxu0 %v3595
        %3801 = vmatprep.subr.bf16.mxu0 0
        %3802 = vmatpush1.bf16.msra.mxu0 %v3594
        %3803 = vmatprep.subr.bf16.mxu0 0
        %3804 = vmatpush2.bf16.msra.mxu0 0
        %3805 = vmatprep.subr.bf16.mxu0 0
        %3806 = vmatpush2.bf16.msra.mxu0 0
        %3807 = vmatprep.subr.bf16.mxu0 0
        %3808 = vmatpush2.bf16.msra.mxu0 0
        %3809 = vmatprep.subr.bf16.mxu0 0
        %3810 = vmatpush2.bf16.msra.mxu0 0
        %3811 = vmatprep.subr.bf16.mxu0 0
        %3812 = vmatpush2.bf16.msra.mxu0 0
        %3813 = vmatprep.subr.bf16.mxu0 0
        %3814 = vmatpush2.bf16.msra.mxu0 0
        %3815 = vmatprep.subr.bf16.mxu0 0
        %3816 = vmatpush2.bf16.msra.mxu0 0
        %3817 = vmatprep.subr.bf16.mxu0 0
        %3818 = vmatpush2.bf16.msra.mxu0 0
        %3819 = vmatprep.mubr.bf16.mxu0 0
        %3820 = vmatmul.mubr.bf16.gmra.mxu0 %v2853
        %v3821 = vpop.f32.mrf.mxu0
        %v3822 = vadd.f32 %v3661, %v3821
        %v3823 = vpop.f32.mrf.mxu0
        %v3824 = vpop.f32.mrf.mxu0
        %v3825 = vadd.f32 %v3664, %v3824
        %v3826 = vpop.f32.mrf.mxu0
        %3827 = vmatprep.mubr.bf16.mxu0 0
        %3828 = vmatmul.mubr.bf16.gmra.mxu0 %v2856
        %v3829 = vpop.f32.mrf.mxu0
        %v3830 = vadd.f32 %v3669, %v3829
        %v3831 = vpop.f32.mrf.mxu0
        %v3832 = vpop.f32.mrf.mxu0
        %v3833 = vadd.f32 %v3672, %v3832
        %v3834 = vpop.f32.mrf.mxu0
        %3835 = vmatprep.mubr.bf16.mxu0 0
        %3836 = vmatmul.mubr.bf16.gmra.mxu0 %v2859
        %v3837 = vpop.f32.mrf.mxu0
        %v3838 = vadd.f32 %v3677, %v3837
        %v3839 = vpop.f32.mrf.mxu0
        %v3840 = vpop.f32.mrf.mxu0
        %v3841 = vadd.f32 %v3680, %v3840
        %v3842 = vpop.f32.mrf.mxu0
        %3843 = vmatprep.mubr.bf16.mxu0 0
        %3844 = vmatmul.mubr.bf16.gmra.mxu0 %v2862
        %v3845 = vpop.f32.mrf.mxu0
        %v3846 = vadd.f32 %v3685, %v3845
        %v3847 = vpop.f32.mrf.mxu0
        %v3848 = vpop.f32.mrf.mxu0
        %v3849 = vadd.f32 %v3688, %v3848
        %v3850 = vpop.f32.mrf.mxu0
        %3851 = vmatprep.mubr.bf16.mxu0 0
        %3852 = vmatmul.mubr.bf16.gmra.mxu0 %v2865
        %v3853 = vpop.f32.mrf.mxu0
        %v3854 = vadd.f32 %v3693, %v3853
        %v3855 = vpop.f32.mrf.mxu0
        %v3856 = vpop.f32.mrf.mxu0
        %v3857 = vadd.f32 %v3696, %v3856
        %v3858 = vpop.f32.mrf.mxu0
        %3859 = vmatprep.mubr.bf16.mxu0 0
        %3860 = vmatmul.mubr.bf16.gmra.mxu0 %v2868
        %v3861 = vpop.f32.mrf.mxu0
        %v3862 = vadd.f32 %v3701, %v3861
        %v3863 = vpop.f32.mrf.mxu0
        %v3864 = vpop.f32.mrf.mxu0
        %v3865 = vadd.f32 %v3704, %v3864
        %v3866 = vpop.f32.mrf.mxu0
        %3867 = vmatprep.mubr.bf16.mxu0 0
        %3868 = vmatmul.mubr.bf16.gmra.mxu0 %v2871
        %v3869 = vpop.f32.mrf.mxu0
        %v3870 = vadd.f32 %v3709, %v3869
        %v3871 = vpop.f32.mrf.mxu0
        %v3872 = vpop.f32.mrf.mxu0
        %v3873 = vadd.f32 %v3712, %v3872
        %v3874 = vpop.f32.mrf.mxu0
        %3875 = vmatprep.mubr.bf16.mxu0 0
        %3876 = vmatmul.mubr.bf16.gmra.mxu0 %v2874
        %v3877 = vpop.f32.mrf.mxu0
        %v3878 = vadd.f32 %v3717, %v3877
        %v3879 = vpop.f32.mrf.mxu0
        %v3880 = vpop.f32.mrf.mxu0
        %v3881 = vadd.f32 %v3720, %v3880
        %v3882 = vpop.f32.mrf.mxu0
        %3883 = vmatprep.mubr.bf16.mxu0 0
        %3884 = vmatmul.mubr.bf16.gmra.mxu0 %v2877
        %v3885 = vpop.f32.mrf.mxu0
        %v3886 = vadd.f32 %v3725, %v3885
        %v3887 = vpop.f32.mrf.mxu0
        %v3888 = vpop.f32.mrf.mxu0
        %v3889 = vadd.f32 %v3728, %v3888
        %v3890 = vpop.f32.mrf.mxu0
        %3891 = vmatprep.mubr.bf16.mxu0 0
        %3892 = vmatmul.mubr.bf16.gmra.mxu0 %v2880
        %v3893 = vpop.f32.mrf.mxu0
        %v3894 = vadd.f32 %v3733, %v3893
        %v3895 = vpop.f32.mrf.mxu0
        %v3896 = vpop.f32.mrf.mxu0
        %v3897 = vadd.f32 %v3736, %v3896
        %v3898 = vpop.f32.mrf.mxu0
        %3899 = vmatprep.mubr.bf16.mxu0 0
        %3900 = vmatmul.mubr.bf16.gmra.mxu0 %v2883
        %v3901 = vpop.f32.mrf.mxu0
        %v3902 = vadd.f32 %v3741, %v3901
        %v3903 = vpop.f32.mrf.mxu0
        %v3904 = vpop.f32.mrf.mxu0
        %v3905 = vadd.f32 %v3744, %v3904
        %v3906 = vpop.f32.mrf.mxu0
        %3907 = vmatprep.mubr.bf16.mxu0 0
        %3908 = vmatmul.mubr.bf16.gmra.mxu0 %v2886
        %v3909 = vpop.f32.mrf.mxu0
        %v3910 = vadd.f32 %v3749, %v3909
        %v3911 = vpop.f32.mrf.mxu0
        %v3912 = vpop.f32.mrf.mxu0
        %v3913 = vadd.f32 %v3752, %v3912
        %v3914 = vpop.f32.mrf.mxu0
        %3915 = vmatprep.mubr.bf16.mxu0 0
        %3916 = vmatmul.mubr.bf16.gmra.mxu0 %v2889
        %v3917 = vpop.f32.mrf.mxu0
        %v3918 = vadd.f32 %v3757, %v3917
        %v3919 = vpop.f32.mrf.mxu0
        %v3920 = vpop.f32.mrf.mxu0
        %v3921 = vadd.f32 %v3760, %v3920
        %v3922 = vpop.f32.mrf.mxu0
        %3923 = vmatprep.mubr.bf16.mxu0 0
        %3924 = vmatmul.mubr.bf16.gmra.mxu0 %v2892
        %v3925 = vpop.f32.mrf.mxu0
        %v3926 = vadd.f32 %v3765, %v3925
        %v3927 = vpop.f32.mrf.mxu0
        %v3928 = vpop.f32.mrf.mxu0
        %v3929 = vadd.f32 %v3768, %v3928
        %v3930 = vpop.f32.mrf.mxu0
        %3931 = vmatprep.mubr.bf16.mxu0 0
        %3932 = vmatmul.mubr.bf16.gmra.mxu0 %v2895
        %v3933 = vpop.f32.mrf.mxu0
        %v3934 = vadd.f32 %v3773, %v3933
        %v3935 = vpop.f32.mrf.mxu0
        %v3936 = vpop.f32.mrf.mxu0
        %v3937 = vadd.f32 %v3776, %v3936
        %v3938 = vpop.f32.mrf.mxu0
        %3939 = vmatprep.mubr.bf16.mxu0 0
        %3940 = vmatmul.mubr.bf16.gmra.mxu0 %v2898
        %v3941 = vpop.f32.mrf.mxu0
        %v3942 = vadd.f32 %v3781, %v3941
        %v3943 = vpop.f32.mrf.mxu0
        %v3944 = vpop.f32.mrf.mxu0
        %v3945 = vadd.f32 %v3784, %v3944
        %v3946 = vpop.f32.mrf.mxu0
        %3947 = vdwg.mxu0
        %v3951 = vrot.slane %v2576, 1
        %v3952 = vrot.slane %v2577, 1
        %v3953 = vsel %vm492, %v3951, %v3952
        %v3954 = vrot.slane %v2578, 1
        %v3955 = vsel %vm492, %v3952, %v3954
        %v3958 = vrot.slane %v2576, 2
        %v3959 = vrot.slane %v2577, 2
        %v3960 = vsel %vm605, %v3958, %v3959
        %v3961 = vrot.slane %v2578, 2
        %v3962 = vsel %vm605, %v3959, %v3961
        %v3965 = vpack.c.bf16 %v2577, %v2576
        %v3966 = vpack.c.bf16 %v3955, %v3953
        %v3967 = vpack.c.bf16 %v3962, %v3960
        %s3968 = scalar_lea.vmem [#allocation3], 384
        %v3969 = vld [vmem:[%s3968] sm:$0xf]
        %v3970 = vld [vmem:[%s3968 + $0x4] sm:$0xf]
        %v3971 = vld [vmem:[%s3968 + $0x8] sm:$0xf]
        %v3972 = vld [vmem:[%s3968 + $0xc] sm:$0xf]
        %v3973 = vld [vmem:[%s3968 + $0x10] sm:$0xf]
        %v3974 = vld [vmem:[%s3968 + $0x14] sm:$0xf]
        %v3975 = vld [vmem:[%s3968 + $0x18] sm:$0xf]
        %v3976 = vld [vmem:[%s3968 + $0x1c] sm:$0xf]
        %v3977 = vld [vmem:[%s3968 + $0x20] sm:$0xf]
        %v3978 = vld [vmem:[%s3968 + $0x24] sm:$0xf]
        %v3979 = vld [vmem:[%s3968 + $0x28] sm:$0xf]
        %v3980 = vld [vmem:[%s3968 + $0x2c] sm:$0xf]
        %v3981 = vld [vmem:[%s3968 + $0x30] sm:$0xf]
        %v3982 = vld [vmem:[%s3968 + $0x34] sm:$0xf]
        %v3983 = vld [vmem:[%s3968 + $0x38] sm:$0xf]
        %v3984 = vld [vmem:[%s3968 + $0x3c] sm:$0xf]
        %v3985 = vld [vmem:[%s3968 + $0x40] sm:$0xf]
        %v3986 = vld [vmem:[%s3968 + $0x44] sm:$0xf]
        %v3987 = vld [vmem:[%s3968 + $0x48] sm:$0xf]
        %v3988 = vld [vmem:[%s3968 + $0x4c] sm:$0xf]
        %v3989 = vld [vmem:[%s3968 + $0x50] sm:$0xf]
        %v3990 = vld [vmem:[%s3968 + $0x54] sm:$0xf]
        %v3991 = vld [vmem:[%s3968 + $0x58] sm:$0xf]
        %v3992 = vld [vmem:[%s3968 + $0x5c] sm:$0xf]
        %v3993 = vld [vmem:[%s3968 + $0x60] sm:$0xf]
        %v3994 = vld [vmem:[%s3968 + $0x64] sm:$0xf]
        %v3995 = vld [vmem:[%s3968 + $0x68] sm:$0xf]
        %v3996 = vld [vmem:[%s3968 + $0x6c] sm:$0xf]
        %v3997 = vld [vmem:[%s3968 + $0x70] sm:$0xf]
        %v3998 = vld [vmem:[%s3968 + $0x74] sm:$0xf]
        %v3999 = vld [vmem:[%s3968 + $0x78] sm:$0xf]
        %v4000 = vld [vmem:[%s3968 + $0x7c] sm:$0xf]
        %v4001 = vld [vmem:[%s3968 + $0x80] sm:$0xf]
        %v4002 = vld [vmem:[%s3968 + $0x84] sm:$0xf]
        %v4003 = vld [vmem:[%s3968 + $0x88] sm:$0xf]
        %v4004 = vld [vmem:[%s3968 + $0x8c] sm:$0xf]
        %v4005 = vld [vmem:[%s3968 + $0x90] sm:$0xf]
        %v4006 = vld [vmem:[%s3968 + $0x94] sm:$0xf]
        %v4007 = vld [vmem:[%s3968 + $0x98] sm:$0xf]
        %v4008 = vld [vmem:[%s3968 + $0x9c] sm:$0xf]
        %v4009 = vld [vmem:[%s3968 + $0xa0] sm:$0xf]
        %v4010 = vld [vmem:[%s3968 + $0xa4] sm:$0xf]
        %v4011 = vld [vmem:[%s3968 + $0xa8] sm:$0xf]
        %v4012 = vld [vmem:[%s3968 + $0xac] sm:$0xf]
        %v4013 = vld [vmem:[%s3968 + $0xb0] sm:$0xf]
        %v4014 = vld [vmem:[%s3968 + $0xb4] sm:$0xf]
        %v4015 = vld [vmem:[%s3968 + $0xb8] sm:$0xf]
        %v4016 = vld [vmem:[%s3968 + $0xbc] sm:$0xf]
        %v4065 = vunpack.c.l.b16 %v3969
        %v4066 = vunpack.c.l.b16 %v3970
        %v4067 = vunpack.c.l.b16 %v3971
        %v4068 = vunpack.c.l.b16 %v3972
        %v4069 = vunpack.c.l.b16 %v3973
        %v4070 = vunpack.c.l.b16 %v3974
        %v4071 = vunpack.c.l.b16 %v3975
        %v4072 = vunpack.c.l.b16 %v3976
        %v4073 = vunpack.c.l.b16 %v3977
        %v4074 = vunpack.c.l.b16 %v3978
        %v4075 = vunpack.c.l.b16 %v3979
        %v4076 = vunpack.c.l.b16 %v3980
        %v4077 = vunpack.c.l.b16 %v3981
        %v4078 = vunpack.c.l.b16 %v3982
        %v4079 = vunpack.c.l.b16 %v3983
        %v4080 = vunpack.c.l.b16 %v3984
        %v4081 = vunpack.c.l.b16 %v3985
        %v4082 = vunpack.c.l.b16 %v3986
        %v4083 = vunpack.c.l.b16 %v3987
        %v4084 = vunpack.c.l.b16 %v3988
        %v4085 = vunpack.c.l.b16 %v3989
        %v4086 = vunpack.c.l.b16 %v3990
        %v4087 = vunpack.c.l.b16 %v3991
        %v4088 = vunpack.c.l.b16 %v3992
        %v4089 = vunpack.c.l.b16 %v3993
        %v4090 = vunpack.c.l.b16 %v3994
        %v4091 = vunpack.c.l.b16 %v3995
        %v4092 = vunpack.c.l.b16 %v3996
        %v4093 = vunpack.c.l.b16 %v3997
        %v4094 = vunpack.c.l.b16 %v3998
        %v4095 = vunpack.c.l.b16 %v3999
        %v4096 = vunpack.c.l.b16 %v4000
        %v4097 = vunpack.c.l.b16 %v4001
        %v4098 = vunpack.c.l.b16 %v4002
        %v4099 = vunpack.c.l.b16 %v4003
        %v4100 = vunpack.c.l.b16 %v4004
        %v4101 = vunpack.c.l.b16 %v4005
        %v4102 = vunpack.c.l.b16 %v4006
        %v4103 = vunpack.c.l.b16 %v4007
        %v4104 = vunpack.c.l.b16 %v4008
        %v4105 = vunpack.c.l.b16 %v4009
        %v4106 = vunpack.c.l.b16 %v4010
        %v4107 = vunpack.c.l.b16 %v4011
        %v4108 = vunpack.c.l.b16 %v4012
        %v4109 = vunpack.c.l.b16 %v4013
        %v4110 = vunpack.c.l.b16 %v4014
        %v4111 = vunpack.c.l.b16 %v4015
        %v4112 = vunpack.c.l.b16 %v4016
        %v4113 = vpack.c.b16 %v4066, %v4065
        %v4114 = vpack.c.b16 %v4068, %v4067
        %v4115 = vpack.c.b16 %v4070, %v4069
        %v4116 = vpack.c.b16 %v4072, %v4071
        %v4117 = vpack.c.b16 %v4074, %v4073
        %v4118 = vpack.c.b16 %v4076, %v4075
        %v4119 = vpack.c.b16 %v4078, %v4077
        %v4120 = vpack.c.b16 %v4080, %v4079
        %v4121 = vpack.c.b16 %v4082, %v4081
        %v4122 = vpack.c.b16 %v4084, %v4083
        %v4123 = vpack.c.b16 %v4086, %v4085
        %v4124 = vpack.c.b16 %v4088, %v4087
        %v4125 = vpack.c.b16 %v4090, %v4089
        %v4126 = vpack.c.b16 %v4092, %v4091
        %v4127 = vpack.c.b16 %v4094, %v4093
        %v4128 = vpack.c.b16 %v4096, %v4095
        %v4129 = vpack.c.b16 %v4098, %v4097
        %v4130 = vpack.c.b16 %v4100, %v4099
        %v4131 = vpack.c.b16 %v4102, %v4101
        %v4132 = vpack.c.b16 %v4104, %v4103
        %v4133 = vpack.c.b16 %v4106, %v4105
        %v4134 = vpack.c.b16 %v4108, %v4107
        %v4135 = vpack.c.b16 %v4110, %v4109
        %v4136 = vpack.c.b16 %v4112, %v4111
        %4161 = vmatprep.subr.bf16.mxu0 0
        %4162 = vmatpush1.bf16.msra.mxu0 %v4120
        %4163 = vmatprep.subr.bf16.mxu0 0
        %4164 = vmatpush1.bf16.msra.mxu0 %v4119
        %4165 = vmatprep.subr.bf16.mxu0 0
        %4166 = vmatpush1.bf16.msra.mxu0 %v4118
        %4167 = vmatprep.subr.bf16.mxu0 0
        %4168 = vmatpush1.bf16.msra.mxu0 %v4117
        %4169 = vmatprep.subr.bf16.mxu0 0
        %4170 = vmatpush1.bf16.msra.mxu0 %v4116
        %4171 = vmatprep.subr.bf16.mxu0 0
        %4172 = vmatpush1.bf16.msra.mxu0 %v4115
        %4173 = vmatprep.subr.bf16.mxu0 0
        %4174 = vmatpush1.bf16.msra.mxu0 %v4114
        %4175 = vmatprep.subr.bf16.mxu0 0
        %4176 = vmatpush1.bf16.msra.mxu0 %v4113
        %4177 = vmatprep.subr.bf16.mxu0 0
        %4178 = vmatpush2.bf16.msra.mxu0 %v4128
        %4179 = vmatprep.subr.bf16.mxu0 0
        %4180 = vmatpush2.bf16.msra.mxu0 %v4127
        %4181 = vmatprep.subr.bf16.mxu0 0
        %4182 = vmatpush2.bf16.msra.mxu0 %v4126
        %4183 = vmatprep.subr.bf16.mxu0 0
        %4184 = vmatpush2.bf16.msra.mxu0 %v4125
        %4185 = vmatprep.subr.bf16.mxu0 0
        %4186 = vmatpush2.bf16.msra.mxu0 %v4124
        %4187 = vmatprep.subr.bf16.mxu0 0
        %4188 = vmatpush2.bf16.msra.mxu0 %v4123
        %4189 = vmatprep.subr.bf16.mxu0 0
        %4190 = vmatpush2.bf16.msra.mxu0 %v4122
        %4191 = vmatprep.subr.bf16.mxu0 0
        %4192 = vmatpush2.bf16.msra.mxu0 %v4121
        %4193 = vmatprep.mubr.bf16.mxu0 %v2858
        %4194 = vmatmul.mubr.bf16.gmra.mxu0 %v2857
        %v4195 = vpop.f32.mrf.mxu0
        %v4196 = vadd.f32 0.0, %v4195
        %v4197 = vpop.f32.mrf.mxu0
        %v4198 = vpop.f32.mrf.mxu0
        %v4199 = vadd.f32 0.0, %v4198
        %v4200 = vpop.f32.mrf.mxu0
        %4201 = vmatprep.mubr.bf16.mxu0 %v2861
        %4202 = vmatmul.mubr.bf16.gmra.mxu0 %v2860
        %v4203 = vpop.f32.mrf.mxu0
        %v4204 = vadd.f32 0.0, %v4203
        %v4205 = vpop.f32.mrf.mxu0
        %v4206 = vpop.f32.mrf.mxu0
        %v4207 = vadd.f32 0.0, %v4206
        %v4208 = vpop.f32.mrf.mxu0
        %4209 = vmatprep.mubr.bf16.mxu0 %v2864
        %4210 = vmatmul.mubr.bf16.gmra.mxu0 %v2863
        %v4211 = vpop.f32.mrf.mxu0
        %v4212 = vadd.f32 0.0, %v4211
        %v4213 = vpop.f32.mrf.mxu0
        %v4214 = vpop.f32.mrf.mxu0
        %v4215 = vadd.f32 0.0, %v4214
        %v4216 = vpop.f32.mrf.mxu0
        %4217 = vmatprep.mubr.bf16.mxu0 %v2867
        %4218 = vmatmul.mubr.bf16.gmra.mxu0 %v2866
        %v4219 = vpop.f32.mrf.mxu0
        %v4220 = vadd.f32 0.0, %v4219
        %v4221 = vpop.f32.mrf.mxu0
        %v4222 = vpop.f32.mrf.mxu0
        %v4223 = vadd.f32 0.0, %v4222
        %v4224 = vpop.f32.mrf.mxu0
        %4225 = vmatprep.mubr.bf16.mxu0 %v2870
        %4226 = vmatmul.mubr.bf16.gmra.mxu0 %v2869
        %v4227 = vpop.f32.mrf.mxu0
        %v4228 = vadd.f32 0.0, %v4227
        %v4229 = vpop.f32.mrf.mxu0
        %v4230 = vpop.f32.mrf.mxu0
        %v4231 = vadd.f32 0.0, %v4230
        %v4232 = vpop.f32.mrf.mxu0
        %4233 = vmatprep.mubr.bf16.mxu0 %v2873
        %4234 = vmatmul.mubr.bf16.gmra.mxu0 %v2872
        %v4235 = vpop.f32.mrf.mxu0
        %v4236 = vadd.f32 0.0, %v4235
        %v4237 = vpop.f32.mrf.mxu0
        %v4238 = vpop.f32.mrf.mxu0
        %v4239 = vadd.f32 0.0, %v4238
        %v4240 = vpop.f32.mrf.mxu0
        %4241 = vmatprep.mubr.bf16.mxu0 %v2876
        %4242 = vmatmul.mubr.bf16.gmra.mxu0 %v2875
        %v4243 = vpop.f32.mrf.mxu0
        %v4244 = vadd.f32 0.0, %v4243
        %v4245 = vpop.f32.mrf.mxu0
        %v4246 = vpop.f32.mrf.mxu0
        %v4247 = vadd.f32 0.0, %v4246
        %v4248 = vpop.f32.mrf.mxu0
        %4249 = vmatprep.mubr.bf16.mxu0 %v2879
        %4250 = vmatmul.mubr.bf16.gmra.mxu0 %v2878
        %v4251 = vpop.f32.mrf.mxu0
        %v4252 = vadd.f32 0.0, %v4251
        %v4253 = vpop.f32.mrf.mxu0
        %v4254 = vpop.f32.mrf.mxu0
        %v4255 = vadd.f32 0.0, %v4254
        %v4256 = vpop.f32.mrf.mxu0
        %4257 = vmatprep.mubr.bf16.mxu0 %v2882
        %4258 = vmatmul.mubr.bf16.gmra.mxu0 %v2881
        %v4259 = vpop.f32.mrf.mxu0
        %v4260 = vadd.f32 0.0, %v4259
        %v4261 = vpop.f32.mrf.mxu0
        %v4262 = vpop.f32.mrf.mxu0
        %v4263 = vadd.f32 0.0, %v4262
        %v4264 = vpop.f32.mrf.mxu0
        %4265 = vmatprep.mubr.bf16.mxu0 %v2885
        %4266 = vmatmul.mubr.bf16.gmra.mxu0 %v2884
        %v4267 = vpop.f32.mrf.mxu0
        %v4268 = vadd.f32 0.0, %v4267
        %v4269 = vpop.f32.mrf.mxu0
        %v4270 = vpop.f32.mrf.mxu0
        %v4271 = vadd.f32 0.0, %v4270
        %v4272 = vpop.f32.mrf.mxu0
        %4273 = vmatprep.mubr.bf16.mxu0 %v2888
        %4274 = vmatmul.mubr.bf16.gmra.mxu0 %v2887
        %v4275 = vpop.f32.mrf.mxu0
        %v4276 = vadd.f32 0.0, %v4275
        %v4277 = vpop.f32.mrf.mxu0
        %v4278 = vpop.f32.mrf.mxu0
        %v4279 = vadd.f32 0.0, %v4278
        %v4280 = vpop.f32.mrf.mxu0
        %4281 = vmatprep.mubr.bf16.mxu0 %v2891
        %4282 = vmatmul.mubr.bf16.gmra.mxu0 %v2890
        %v4283 = vpop.f32.mrf.mxu0
        %v4284 = vadd.f32 0.0, %v4283
        %v4285 = vpop.f32.mrf.mxu0
        %v4286 = vpop.f32.mrf.mxu0
        %v4287 = vadd.f32 0.0, %v4286
        %v4288 = vpop.f32.mrf.mxu0
        %4289 = vmatprep.mubr.bf16.mxu0 %v2894
        %4290 = vmatmul.mubr.bf16.gmra.mxu0 %v2893
        %v4291 = vpop.f32.mrf.mxu0
        %v4292 = vadd.f32 0.0, %v4291
        %v4293 = vpop.f32.mrf.mxu0
        %v4294 = vpop.f32.mrf.mxu0
        %v4295 = vadd.f32 0.0, %v4294
        %v4296 = vpop.f32.mrf.mxu0
        %4297 = vmatprep.mubr.bf16.mxu0 %v2897
        %4298 = vmatmul.mubr.bf16.gmra.mxu0 %v2896
        %v4299 = vpop.f32.mrf.mxu0
        %v4300 = vadd.f32 0.0, %v4299
        %v4301 = vpop.f32.mrf.mxu0
        %v4302 = vpop.f32.mrf.mxu0
        %v4303 = vadd.f32 0.0, %v4302
        %v4304 = vpop.f32.mrf.mxu0
        %4305 = vmatprep.mubr.bf16.mxu0 %v2965
        %4306 = vmatmul.mubr.bf16.gmra.mxu0 %v2964
        %v4307 = vpop.f32.mrf.mxu0
        %v4308 = vadd.f32 0.0, %v4307
        %v4309 = vpop.f32.mrf.mxu0
        %v4310 = vpop.f32.mrf.mxu0
        %v4311 = vadd.f32 0.0, %v4310
        %v4312 = vpop.f32.mrf.mxu0
        %4313 = vmatprep.mubr.bf16.mxu0 %v3966
        %4314 = vmatmul.mubr.bf16.gmra.mxu0 %v3965
        %v4315 = vpop.f32.mrf.mxu0
        %v4316 = vadd.f32 0.0, %v4315
        %v4317 = vpop.f32.mrf.mxu0
        %v4318 = vpop.f32.mrf.mxu0
        %v4319 = vadd.f32 0.0, %v4318
        %v4320 = vpop.f32.mrf.mxu0
        %4321 = vdwg.mxu0
        %4322 = vmatprep.subr.bf16.mxu0 0
        %4323 = vmatpush1.bf16.msra.mxu0 %v4136
        %4324 = vmatprep.subr.bf16.mxu0 0
        %4325 = vmatpush1.bf16.msra.mxu0 %v4135
        %4326 = vmatprep.subr.bf16.mxu0 0
        %4327 = vmatpush1.bf16.msra.mxu0 %v4134
        %4328 = vmatprep.subr.bf16.mxu0 0
        %4329 = vmatpush1.bf16.msra.mxu0 %v4133
        %4330 = vmatprep.subr.bf16.mxu0 0
        %4331 = vmatpush1.bf16.msra.mxu0 %v4132
        %4332 = vmatprep.subr.bf16.mxu0 0
        %4333 = vmatpush1.bf16.msra.mxu0 %v4131
        %4334 = vmatprep.subr.bf16.mxu0 0
        %4335 = vmatpush1.bf16.msra.mxu0 %v4130
        %4336 = vmatprep.subr.bf16.mxu0 0
        %4337 = vmatpush1.bf16.msra.mxu0 %v4129
        %4338 = vmatprep.subr.bf16.mxu0 0
        %4339 = vmatpush2.bf16.msra.mxu0 0
        %4340 = vmatprep.subr.bf16.mxu0 0
        %4341 = vmatpush2.bf16.msra.mxu0 0
        %4342 = vmatprep.subr.bf16.mxu0 0
        %4343 = vmatpush2.bf16.msra.mxu0 0
        %4344 = vmatprep.subr.bf16.mxu0 0
        %4345 = vmatpush2.bf16.msra.mxu0 0
        %4346 = vmatprep.subr.bf16.mxu0 0
        %4347 = vmatpush2.bf16.msra.mxu0 0
        %4348 = vmatprep.subr.bf16.mxu0 0
        %4349 = vmatpush2.bf16.msra.mxu0 0
        %4350 = vmatprep.subr.bf16.mxu0 0
        %4351 = vmatpush2.bf16.msra.mxu0 0
        %4352 = vmatprep.subr.bf16.mxu0 0
        %4353 = vmatpush2.bf16.msra.mxu0 0
        %4354 = vmatprep.mubr.bf16.mxu0 0
        %4355 = vmatmul.mubr.bf16.gmra.mxu0 %v2859
        %v4356 = vpop.f32.mrf.mxu0
        %v4357 = vadd.f32 %v4196, %v4356
        %v4358 = vpop.f32.mrf.mxu0
        %v4359 = vpop.f32.mrf.mxu0
        %v4360 = vadd.f32 %v4199, %v4359
        %v4361 = vpop.f32.mrf.mxu0
        %4362 = vmatprep.mubr.bf16.mxu0 0
        %4363 = vmatmul.mubr.bf16.gmra.mxu0 %v2862
        %v4364 = vpop.f32.mrf.mxu0
        %v4365 = vadd.f32 %v4204, %v4364
        %v4366 = vpop.f32.mrf.mxu0
        %v4367 = vpop.f32.mrf.mxu0
        %v4368 = vadd.f32 %v4207, %v4367
        %v4369 = vpop.f32.mrf.mxu0
        %4370 = vmatprep.mubr.bf16.mxu0 0
        %4371 = vmatmul.mubr.bf16.gmra.mxu0 %v2865
        %v4372 = vpop.f32.mrf.mxu0
        %v4373 = vadd.f32 %v4212, %v4372
        %v4374 = vpop.f32.mrf.mxu0
        %v4375 = vpop.f32.mrf.mxu0
        %v4376 = vadd.f32 %v4215, %v4375
        %v4377 = vpop.f32.mrf.mxu0
        %4378 = vmatprep.mubr.bf16.mxu0 0
        %4379 = vmatmul.mubr.bf16.gmra.mxu0 %v2868
        %v4380 = vpop.f32.mrf.mxu0
        %v4381 = vadd.f32 %v4220, %v4380
        %v4382 = vpop.f32.mrf.mxu0
        %v4383 = vpop.f32.mrf.mxu0
        %v4384 = vadd.f32 %v4223, %v4383
        %v4385 = vpop.f32.mrf.mxu0
        %4386 = vmatprep.mubr.bf16.mxu0 0
        %4387 = vmatmul.mubr.bf16.gmra.mxu0 %v2871
        %v4388 = vpop.f32.mrf.mxu0
        %v4389 = vadd.f32 %v4228, %v4388
        %v4390 = vpop.f32.mrf.mxu0
        %v4391 = vpop.f32.mrf.mxu0
        %v4392 = vadd.f32 %v4231, %v4391
        %v4393 = vpop.f32.mrf.mxu0
        %4394 = vmatprep.mubr.bf16.mxu0 0
        %4395 = vmatmul.mubr.bf16.gmra.mxu0 %v2874
        %v4396 = vpop.f32.mrf.mxu0
        %v4397 = vadd.f32 %v4236, %v4396
        %v4398 = vpop.f32.mrf.mxu0
        %v4399 = vpop.f32.mrf.mxu0
        %v4400 = vadd.f32 %v4239, %v4399
        %v4401 = vpop.f32.mrf.mxu0
        %4402 = vmatprep.mubr.bf16.mxu0 0
        %4403 = vmatmul.mubr.bf16.gmra.mxu0 %v2877
        %v4404 = vpop.f32.mrf.mxu0
        %v4405 = vadd.f32 %v4244, %v4404
        %v4406 = vpop.f32.mrf.mxu0
        %v4407 = vpop.f32.mrf.mxu0
        %v4408 = vadd.f32 %v4247, %v4407
        %v4409 = vpop.f32.mrf.mxu0
        %4410 = vmatprep.mubr.bf16.mxu0 0
        %4411 = vmatmul.mubr.bf16.gmra.mxu0 %v2880
        %v4412 = vpop.f32.mrf.mxu0
        %v4413 = vadd.f32 %v4252, %v4412
        %v4414 = vpop.f32.mrf.mxu0
        %v4415 = vpop.f32.mrf.mxu0
        %v4416 = vadd.f32 %v4255, %v4415
        %v4417 = vpop.f32.mrf.mxu0
        %4418 = vmatprep.mubr.bf16.mxu0 0
        %4419 = vmatmul.mubr.bf16.gmra.mxu0 %v2883
        %v4420 = vpop.f32.mrf.mxu0
        %v4421 = vadd.f32 %v4260, %v4420
        %v4422 = vpop.f32.mrf.mxu0
        %v4423 = vpop.f32.mrf.mxu0
        %v4424 = vadd.f32 %v4263, %v4423
        %v4425 = vpop.f32.mrf.mxu0
        %4426 = vmatprep.mubr.bf16.mxu0 0
        %4427 = vmatmul.mubr.bf16.gmra.mxu0 %v2886
        %v4428 = vpop.f32.mrf.mxu0
        %v4429 = vadd.f32 %v4268, %v4428
        %v4430 = vpop.f32.mrf.mxu0
        %v4431 = vpop.f32.mrf.mxu0
        %v4432 = vadd.f32 %v4271, %v4431
        %v4433 = vpop.f32.mrf.mxu0
        %4434 = vmatprep.mubr.bf16.mxu0 0
        %4435 = vmatmul.mubr.bf16.gmra.mxu0 %v2889
        %v4436 = vpop.f32.mrf.mxu0
        %v4437 = vadd.f32 %v4276, %v4436
        %v4438 = vpop.f32.mrf.mxu0
        %v4439 = vpop.f32.mrf.mxu0
        %v4440 = vadd.f32 %v4279, %v4439
        %v4441 = vpop.f32.mrf.mxu0
        %4442 = vmatprep.mubr.bf16.mxu0 0
        %4443 = vmatmul.mubr.bf16.gmra.mxu0 %v2892
        %v4444 = vpop.f32.mrf.mxu0
        %v4445 = vadd.f32 %v4284, %v4444
        %v4446 = vpop.f32.mrf.mxu0
        %v4447 = vpop.f32.mrf.mxu0
        %v4448 = vadd.f32 %v4287, %v4447
        %v4449 = vpop.f32.mrf.mxu0
        %4450 = vmatprep.mubr.bf16.mxu0 0
        %4451 = vmatmul.mubr.bf16.gmra.mxu0 %v2895
        %v4452 = vpop.f32.mrf.mxu0
        %v4453 = vadd.f32 %v4292, %v4452
        %v4454 = vpop.f32.mrf.mxu0
        %v4455 = vpop.f32.mrf.mxu0
        %v4456 = vadd.f32 %v4295, %v4455
        %v4457 = vpop.f32.mrf.mxu0
        %4458 = vmatprep.mubr.bf16.mxu0 0
        %4459 = vmatmul.mubr.bf16.gmra.mxu0 %v2898
        %v4460 = vpop.f32.mrf.mxu0
        %v4461 = vadd.f32 %v4300, %v4460
        %v4462 = vpop.f32.mrf.mxu0
        %v4463 = vpop.f32.mrf.mxu0
        %v4464 = vadd.f32 %v4303, %v4463
        %v4465 = vpop.f32.mrf.mxu0
        %4466 = vmatprep.mubr.bf16.mxu0 0
        %4467 = vmatmul.mubr.bf16.gmra.mxu0 %v2966
        %v4468 = vpop.f32.mrf.mxu0
        %v4469 = vadd.f32 %v4308, %v4468
        %v4470 = vpop.f32.mrf.mxu0
        %v4471 = vpop.f32.mrf.mxu0
        %v4472 = vadd.f32 %v4311, %v4471
        %v4473 = vpop.f32.mrf.mxu0
        %4474 = vmatprep.mubr.bf16.mxu0 0
        %4475 = vmatmul.mubr.bf16.gmra.mxu0 %v3967
        %v4476 = vpop.f32.mrf.mxu0
        %v4477 = vadd.f32 %v4316, %v4476
        %v4478 = vpop.f32.mrf.mxu0
        %v4479 = vpop.f32.mrf.mxu0
        %v4480 = vadd.f32 %v4319, %v4479
        %v4481 = vpop.f32.mrf.mxu0
        %4482 = vdwg.mxu0
        %v4483 = vadd.f32 %v3822, %v4357
        %v4484 = vadd.f32 %v3825, %v4360
        %v4485 = vadd.f32 %v3830, %v4365
        %v4486 = vadd.f32 %v3833, %v4368
        %v4487 = vadd.f32 %v3838, %v4373
        %v4488 = vadd.f32 %v3841, %v4376
        %v4489 = vadd.f32 %v3846, %v4381
        %v4490 = vadd.f32 %v3849, %v4384
        %v4491 = vadd.f32 %v3854, %v4389
        %v4492 = vadd.f32 %v3857, %v4392
        %v4493 = vadd.f32 %v3862, %v4397
        %v4494 = vadd.f32 %v3865, %v4400
        %v4495 = vadd.f32 %v3870, %v4405
        %v4496 = vadd.f32 %v3873, %v4408
        %v4497 = vadd.f32 %v3878, %v4413
        %v4498 = vadd.f32 %v3881, %v4416
        %v4499 = vadd.f32 %v3886, %v4421
        %v4500 = vadd.f32 %v3889, %v4424
        %v4501 = vadd.f32 %v3894, %v4429
        %v4502 = vadd.f32 %v3897, %v4432
        %v4503 = vadd.f32 %v3902, %v4437
        %v4504 = vadd.f32 %v3905, %v4440
        %v4505 = vadd.f32 %v3910, %v4445
        %v4506 = vadd.f32 %v3913, %v4448
        %v4507 = vadd.f32 %v3918, %v4453
        %v4508 = vadd.f32 %v3921, %v4456
        %v4509 = vadd.f32 %v3926, %v4461
        %v4510 = vadd.f32 %v3929, %v4464
        %v4511 = vadd.f32 %v3934, %v4469
        %v4512 = vadd.f32 %v3937, %v4472
        %v4513 = vadd.f32 %v3942, %v4477
        %v4514 = vadd.f32 %v3945, %v4480
        %v4515 = vld [vmem:[%s5] sm:$0x1]
        %v4517 = vlaneseq
        %v4518 = vshrl.u32 %v4517, 7
        %v4519 = vsub.s32 0, %v4518
        %v4520 = vrot.slane %v4515, %v4519
        %v4522 = vmul.f32 %v4483, %v4520
        %v4523 = vmul.f32 %v4484, %v4520
        %v4524 = vmul.f32 %v4485, %v4520
        %v4525 = vmul.f32 %v4486, %v4520
        %v4526 = vmul.f32 %v4487, %v4520
        %v4527 = vmul.f32 %v4488, %v4520
        %v4528 = vmul.f32 %v4489, %v4520
        %v4529 = vmul.f32 %v4490, %v4520
        %v4530 = vmul.f32 %v4491, %v4520
        %v4531 = vmul.f32 %v4492, %v4520
        %v4532 = vmul.f32 %v4493, %v4520
        %v4533 = vmul.f32 %v4494, %v4520
        %v4534 = vmul.f32 %v4495, %v4520
        %v4535 = vmul.f32 %v4496, %v4520
        %v4536 = vmul.f32 %v4497, %v4520
        %v4537 = vmul.f32 %v4498, %v4520
        %v4538 = vmul.f32 %v4499, %v4520
        %v4539 = vmul.f32 %v4500, %v4520
        %v4540 = vmul.f32 %v4501, %v4520
        %v4541 = vmul.f32 %v4502, %v4520
        %v4542 = vmul.f32 %v4503, %v4520
        %v4543 = vmul.f32 %v4504, %v4520
        %v4544 = vmul.f32 %v4505, %v4520
        %v4545 = vmul.f32 %v4506, %v4520
        %v4546 = vmul.f32 %v4507, %v4520
        %v4547 = vmul.f32 %v4508, %v4520
        %v4548 = vmul.f32 %v4509, %v4520
        %v4549 = vmul.f32 %v4510, %v4520
        %v4550 = vmul.f32 %v4511, %v4520
        %v4551 = vmul.f32 %v4512, %v4520
        %v4552 = vmul.f32 %v4513, %v4520
        %v4553 = vmul.f32 %v4514, %v4520
        %v4554 = vld [vmem:[%s6] sm:$0x1]
        %v4556 = vlaneseq
        %v4557 = vshrl.u32 %v4556, 7
        %v4558 = vsub.s32 0, %v4557
        %v4559 = vrot.slane %v4554, %v4558
        %v4561 = vadd.f32 %v4522, %v4559
        %v4562 = vadd.f32 %v4523, %v4559
        %v4563 = vadd.f32 %v4524, %v4559
        %v4564 = vadd.f32 %v4525, %v4559
        %v4565 = vadd.f32 %v4526, %v4559
        %v4566 = vadd.f32 %v4527, %v4559
        %v4567 = vadd.f32 %v4528, %v4559
        %v4568 = vadd.f32 %v4529, %v4559
        %v4569 = vadd.f32 %v4530, %v4559
        %v4570 = vadd.f32 %v4531, %v4559
        %v4571 = vadd.f32 %v4532, %v4559
        %v4572 = vadd.f32 %v4533, %v4559
        %v4573 = vadd.f32 %v4534, %v4559
        %v4574 = vadd.f32 %v4535, %v4559
        %v4575 = vadd.f32 %v4536, %v4559
        %v4576 = vadd.f32 %v4537, %v4559
        %v4577 = vadd.f32 %v4538, %v4559
        %v4578 = vadd.f32 %v4539, %v4559
        %v4579 = vadd.f32 %v4540, %v4559
        %v4580 = vadd.f32 %v4541, %v4559
        %v4581 = vadd.f32 %v4542, %v4559
        %v4582 = vadd.f32 %v4543, %v4559
        %v4583 = vadd.f32 %v4544, %v4559
        %v4584 = vadd.f32 %v4545, %v4559
        %v4585 = vadd.f32 %v4546, %v4559
        %v4586 = vadd.f32 %v4547, %v4559
        %v4587 = vadd.f32 %v4548, %v4559
        %v4588 = vadd.f32 %v4549, %v4559
        %v4589 = vadd.f32 %v4550, %v4559
        %v4590 = vadd.f32 %v4551, %v4559
        %v4591 = vadd.f32 %v4552, %v4559
        %v4592 = vadd.f32 %v4553, %v4559
        %s4593 = scalar_lea.vmem %s291, 12
        %v4594 = vld [vmem:[%s4593] sm:$0xf]
        %v4595 = vld [vmem:[%s4593 + $0x4] sm:$0xf]
        %v4596 = vld [vmem:[%s4593 + $0x8] sm:$0x1]
        %v4597 = vld [vmem:[%s4593 + $0xc] sm:$0xf]
        %v4598 = vld [vmem:[%s4593 + $0x10] sm:$0xf]
        %v4599 = vld [vmem:[%s4593 + $0x14] sm:$0x1]
        %v4600 = vld [vmem:[%s4593 + $0x18] sm:$0xf]
        %v4601 = vld [vmem:[%s4593 + $0x1c] sm:$0xf]
        %v4602 = vld [vmem:[%s4593 + $0x20] sm:$0x1]
        %v4603 = vld [vmem:[%s4593 + $0x24] sm:$0xf]
        %v4604 = vld [vmem:[%s4593 + $0x28] sm:$0xf]
        %v4605 = vld [vmem:[%s4593 + $0x2c] sm:$0x1]
        %v4606 = vld [vmem:[%s4593 + $0x30] sm:$0xf]
        %v4607 = vld [vmem:[%s4593 + $0x34] sm:$0xf]
        %v4608 = vld [vmem:[%s4593 + $0x38] sm:$0x1]
        %v4609 = vld [vmem:[%s4593 + $0x3c] sm:$0xf]
        %v4610 = vld [vmem:[%s4593 + $0x40] sm:$0xf]
        %v4611 = vld [vmem:[%s4593 + $0x44] sm:$0x1]
        %v4612 = vld [vmem:[%s4593 + $0x48] sm:$0xf]
        %v4613 = vld [vmem:[%s4593 + $0x4c] sm:$0xf]
        %v4614 = vld [vmem:[%s4593 + $0x50] sm:$0x1]
        %v4615 = vld [vmem:[%s4593 + $0x54] sm:$0xf]
        %v4616 = vld [vmem:[%s4593 + $0x58] sm:$0xf]
        %v4617 = vld [vmem:[%s4593 + $0x5c] sm:$0x1]
        %v4618 = vld [vmem:[%s4593 + $0x60] sm:$0xf]
        %v4619 = vld [vmem:[%s4593 + $0x64] sm:$0xf]
        %v4620 = vld [vmem:[%s4593 + $0x68] sm:$0x1]
        %v4621 = vld [vmem:[%s4593 + $0x6c] sm:$0xf]
        %v4622 = vld [vmem:[%s4593 + $0x70] sm:$0xf]
        %v4623 = vld [vmem:[%s4593 + $0x74] sm:$0x1]
        %v4624 = vld [vmem:[%s4593 + $0x78] sm:$0xf]
        %v4625 = vld [vmem:[%s4593 + $0x7c] sm:$0xf]
        %v4626 = vld [vmem:[%s4593 + $0x80] sm:$0x1]
        %v4627 = vld [vmem:[%s4593 + $0x84] sm:$0xf]
        %v4628 = vld [vmem:[%s4593 + $0x88] sm:$0xf]
        %v4629 = vld [vmem:[%s4593 + $0x8c] sm:$0x1]
        %v4630 = vld [vmem:[%s4593 + $0x90] sm:$0xf]
        %v4631 = vld [vmem:[%s4593 + $0x94] sm:$0xf]
        %v4632 = vld [vmem:[%s4593 + $0x98] sm:$0x1]
        %v4633 = vld [vmem:[%s4593 + $0x9c] sm:$0xf]
        %v4634 = vld [vmem:[%s4593 + $0xa0] sm:$0xf]
        %v4635 = vld [vmem:[%s4593 + $0xa4] sm:$0x1]
        %v4636 = vld [vmem:[%s4593 + $0xa8] sm:$0xf]
        %v4637 = vld [vmem:[%s4593 + $0xac] sm:$0xf]
        %v4638 = vld [vmem:[%s4593 + $0xb0] sm:$0x1]
        %v4639 = vld [vmem:[%s4593 + $0xb4] sm:$0xf]
        %v4640 = vld [vmem:[%s4593 + $0xb8] sm:$0xf]
        %v4641 = vld [vmem:[%s4593 + $0xbc] sm:$0x1]
        %v4642 = vunpack.c.l.bf16 %v4594
        %v4643 = vunpack.c.l.bf16 %v4595
        %v4644 = vunpack.c.l.bf16 %v4596
        %v4645 = vunpack.c.l.bf16 %v4597
        %v4646 = vunpack.c.l.bf16 %v4598
        %v4647 = vunpack.c.l.bf16 %v4599
        %v4648 = vunpack.c.l.bf16 %v4600
        %v4649 = vunpack.c.l.bf16 %v4601
        %v4650 = vunpack.c.l.bf16 %v4602
        %v4651 = vunpack.c.l.bf16 %v4603
        %v4652 = vunpack.c.l.bf16 %v4604
        %v4653 = vunpack.c.l.bf16 %v4605
        %v4654 = vunpack.c.l.bf16 %v4606
        %v4655 = vunpack.c.l.bf16 %v4607
        %v4656 = vunpack.c.l.bf16 %v4608
        %v4657 = vunpack.c.l.bf16 %v4609
        %v4658 = vunpack.c.l.bf16 %v4610
        %v4659 = vunpack.c.l.bf16 %v4611
        %v4660 = vunpack.c.l.bf16 %v4612
        %v4661 = vunpack.c.l.bf16 %v4613
        %v4662 = vunpack.c.l.bf16 %v4614
        %v4663 = vunpack.c.l.bf16 %v4615
        %v4664 = vunpack.c.l.bf16 %v4616
        %v4665 = vunpack.c.l.bf16 %v4617
        %v4666 = vunpack.c.l.bf16 %v4618
        %v4667 = vunpack.c.l.bf16 %v4619
        %v4668 = vunpack.c.l.bf16 %v4620
        %v4669 = vunpack.c.l.bf16 %v4621
        %v4670 = vunpack.c.l.bf16 %v4622
        %v4671 = vunpack.c.l.bf16 %v4623
        %v4672 = vunpack.c.l.bf16 %v4624
        %v4673 = vunpack.c.l.bf16 %v4625
        %v4674 = vunpack.c.l.bf16 %v4626
        %v4675 = vunpack.c.l.bf16 %v4627
        %v4676 = vunpack.c.l.bf16 %v4628
        %v4677 = vunpack.c.l.bf16 %v4629
        %v4678 = vunpack.c.l.bf16 %v4630
        %v4679 = vunpack.c.l.bf16 %v4631
        %v4680 = vunpack.c.l.bf16 %v4632
        %v4681 = vunpack.c.l.bf16 %v4633
        %v4682 = vunpack.c.l.bf16 %v4634
        %v4683 = vunpack.c.l.bf16 %v4635
        %v4684 = vunpack.c.l.bf16 %v4636
        %v4685 = vunpack.c.l.bf16 %v4637
        %v4686 = vunpack.c.l.bf16 %v4638
        %v4687 = vunpack.c.l.bf16 %v4639
        %v4688 = vunpack.c.l.bf16 %v4640
        %v4689 = vunpack.c.l.bf16 %v4641
        %v4738 = vrot.slane %v4642, 1
        %v4739 = vrot.slane %v4643, 1
        %v4740 = vsel %vm492, %v4738, %v4739
        %v4741 = vrot.slane %v4644, 1
        %v4742 = vsel %vm492, %v4739, %v4741
        %v4743 = vrot.slane %v4645, 1
        %v4744 = vrot.slane %v4646, 1
        %v4745 = vsel %vm492, %v4743, %v4744
        %v4746 = vrot.slane %v4647, 1
        %v4747 = vsel %vm492, %v4744, %v4746
        %v4748 = vrot.slane %v4648, 1
        %v4749 = vrot.slane %v4649, 1
        %v4750 = vsel %vm492, %v4748, %v4749
        %v4751 = vrot.slane %v4650, 1
        %v4752 = vsel %vm492, %v4749, %v4751
        %v4753 = vrot.slane %v4651, 1
        %v4754 = vrot.slane %v4652, 1
        %v4755 = vsel %vm492, %v4753, %v4754
        %v4756 = vrot.slane %v4653, 1
        %v4757 = vsel %vm492, %v4754, %v4756
        %v4758 = vrot.slane %v4654, 1
        %v4759 = vrot.slane %v4655, 1
        %v4760 = vsel %vm492, %v4758, %v4759
        %v4761 = vrot.slane %v4656, 1
        %v4762 = vsel %vm492, %v4759, %v4761
        %v4763 = vrot.slane %v4657, 1
        %v4764 = vrot.slane %v4658, 1
        %v4765 = vsel %vm492, %v4763, %v4764
        %v4766 = vrot.slane %v4659, 1
        %v4767 = vsel %vm492, %v4764, %v4766
        %v4768 = vrot.slane %v4660, 1
        %v4769 = vrot.slane %v4661, 1
        %v4770 = vsel %vm492, %v4768, %v4769
        %v4771 = vrot.slane %v4662, 1
        %v4772 = vsel %vm492, %v4769, %v4771
        %v4773 = vrot.slane %v4663, 1
        %v4774 = vrot.slane %v4664, 1
        %v4775 = vsel %vm492, %v4773, %v4774
        %v4776 = vrot.slane %v4665, 1
        %v4777 = vsel %vm492, %v4774, %v4776
        %v4778 = vrot.slane %v4666, 1
        %v4779 = vrot.slane %v4667, 1
        %v4780 = vsel %vm492, %v4778, %v4779
        %v4781 = vrot.slane %v4668, 1
        %v4782 = vsel %vm492, %v4779, %v4781
        %v4783 = vrot.slane %v4669, 1
        %v4784 = vrot.slane %v4670, 1
        %v4785 = vsel %vm492, %v4783, %v4784
        %v4786 = vrot.slane %v4671, 1
        %v4787 = vsel %vm492, %v4784, %v4786
        %v4788 = vrot.slane %v4672, 1
        %v4789 = vrot.slane %v4673, 1
        %v4790 = vsel %vm492, %v4788, %v4789
        %v4791 = vrot.slane %v4674, 1
        %v4792 = vsel %vm492, %v4789, %v4791
        %v4793 = vrot.slane %v4675, 1
        %v4794 = vrot.slane %v4676, 1
        %v4795 = vsel %vm492, %v4793, %v4794
        %v4796 = vrot.slane %v4677, 1
        %v4797 = vsel %vm492, %v4794, %v4796
        %v4798 = vrot.slane %v4678, 1
        %v4799 = vrot.slane %v4679, 1
        %v4800 = vsel %vm492, %v4798, %v4799
        %v4801 = vrot.slane %v4680, 1
        %v4802 = vsel %vm492, %v4799, %v4801
        %v4803 = vrot.slane %v4681, 1
        %v4804 = vrot.slane %v4682, 1
        %v4805 = vsel %vm492, %v4803, %v4804
        %v4806 = vrot.slane %v4683, 1
        %v4807 = vsel %vm492, %v4804, %v4806
        %v4808 = vrot.slane %v4684, 1
        %v4809 = vrot.slane %v4685, 1
        %v4810 = vsel %vm492, %v4808, %v4809
        %v4811 = vrot.slane %v4686, 1
        %v4812 = vsel %vm492, %v4809, %v4811
        %v4813 = vrot.slane %v4687, 1
        %v4814 = vrot.slane %v4688, 1
        %v4815 = vsel %vm492, %v4813, %v4814
        %v4816 = vrot.slane %v4689, 1
        %v4817 = vsel %vm492, %v4814, %v4816
        %v4850 = vadd.f32 %v4561, %v4740
        %v4851 = vadd.f32 %v4562, %v4742
        %v4852 = vadd.f32 %v4563, %v4745
        %v4853 = vadd.f32 %v4564, %v4747
        %v4854 = vadd.f32 %v4565, %v4750
        %v4855 = vadd.f32 %v4566, %v4752
        %v4856 = vadd.f32 %v4567, %v4755
        %v4857 = vadd.f32 %v4568, %v4757
        %v4858 = vadd.f32 %v4569, %v4760
        %v4859 = vadd.f32 %v4570, %v4762
        %v4860 = vadd.f32 %v4571, %v4765
        %v4861 = vadd.f32 %v4572, %v4767
        %v4862 = vadd.f32 %v4573, %v4770
        %v4863 = vadd.f32 %v4574, %v4772
        %v4864 = vadd.f32 %v4575, %v4775
        %v4865 = vadd.f32 %v4576, %v4777
        %v4866 = vadd.f32 %v4577, %v4780
        %v4867 = vadd.f32 %v4578, %v4782
        %v4868 = vadd.f32 %v4579, %v4785
        %v4869 = vadd.f32 %v4580, %v4787
        %v4870 = vadd.f32 %v4581, %v4790
        %v4871 = vadd.f32 %v4582, %v4792
        %v4872 = vadd.f32 %v4583, %v4795
        %v4873 = vadd.f32 %v4584, %v4797
        %v4874 = vadd.f32 %v4585, %v4800
        %v4875 = vadd.f32 %v4586, %v4802
        %v4876 = vadd.f32 %v4587, %v4805
        %v4877 = vadd.f32 %v4588, %v4807
        %v4878 = vadd.f32 %v4589, %v4810
        %v4879 = vadd.f32 %v4590, %v4812
        %v4880 = vadd.f32 %v4591, %v4815
        %v4881 = vadd.f32 %v4592, %v4817
        %v4882 = vmax.f32 %v4850, 0.0
        %v4883 = vmax.f32 %v4851, 0.0
        %v4884 = vmax.f32 %v4852, 0.0
        %v4885 = vmax.f32 %v4853, 0.0
        %v4886 = vmax.f32 %v4854, 0.0
        %v4887 = vmax.f32 %v4855, 0.0
        %v4888 = vmax.f32 %v4856, 0.0
        %v4889 = vmax.f32 %v4857, 0.0
        %v4890 = vmax.f32 %v4858, 0.0
        %v4891 = vmax.f32 %v4859, 0.0
        %v4892 = vmax.f32 %v4860, 0.0
        %v4893 = vmax.f32 %v4861, 0.0
        %v4894 = vmax.f32 %v4862, 0.0
        %v4895 = vmax.f32 %v4863, 0.0
        %v4896 = vmax.f32 %v4864, 0.0
        %v4897 = vmax.f32 %v4865, 0.0
        %v4898 = vmax.f32 %v4866, 0.0
        %v4899 = vmax.f32 %v4867, 0.0
        %v4900 = vmax.f32 %v4868, 0.0
        %v4901 = vmax.f32 %v4869, 0.0
        %v4902 = vmax.f32 %v4870, 0.0
        %v4903 = vmax.f32 %v4871, 0.0
        %v4904 = vmax.f32 %v4872, 0.0
        %v4905 = vmax.f32 %v4873, 0.0
        %v4906 = vmax.f32 %v4874, 0.0
        %v4907 = vmax.f32 %v4875, 0.0
        %v4908 = vmax.f32 %v4876, 0.0
        %v4909 = vmax.f32 %v4877, 0.0
        %v4910 = vmax.f32 %v4878, 0.0
        %v4911 = vmax.f32 %v4879, 0.0
        %v4912 = vmax.f32 %v4880, 0.0
        %v4913 = vmax.f32 %v4881, 0.0
        %4914 = vst [vmem:[%s286] sm:$0xff] %v4882
        %4915 = vst [vmem:[%s286 + $0x8] sm:$0xff] %v4883
        %4916 = vst [vmem:[%s286 + $0x10] sm:$0xff] %v4884
        %4917 = vst [vmem:[%s286 + $0x18] sm:$0xff] %v4885
        %4918 = vst [vmem:[%s286 + $0x20] sm:$0xff] %v4886
        %4919 = vst [vmem:[%s286 + $0x28] sm:$0xff] %v4887
        %4920 = vst [vmem:[%s286 + $0x30] sm:$0xff] %v4888
        %4921 = vst [vmem:[%s286 + $0x38] sm:$0xff] %v4889
        %4922 = vst [vmem:[%s286 + $0x40] sm:$0xff] %v4890
        %4923 = vst [vmem:[%s286 + $0x48] sm:$0xff] %v4891
        %4924 = vst [vmem:[%s286 + $0x50] sm:$0xff] %v4892
        %4925 = vst [vmem:[%s286 + $0x58] sm:$0xff] %v4893
        %4926 = vst [vmem:[%s286 + $0x60] sm:$0xff] %v4894
        %4927 = vst [vmem:[%s286 + $0x68] sm:$0xff] %v4895
        %4928 = vst [vmem:[%s286 + $0x70] sm:$0xff] %v4896
        %4929 = vst [vmem:[%s286 + $0x78] sm:$0xff] %v4897
        %4930 = vst [vmem:[%s286 + $0x80] sm:$0xff] %v4898
        %4931 = vst [vmem:[%s286 + $0x88] sm:$0xff] %v4899
        %4932 = vst [vmem:[%s286 + $0x90] sm:$0xff] %v4900
        %4933 = vst [vmem:[%s286 + $0x98] sm:$0xff] %v4901
        %4934 = vst [vmem:[%s286 + $0xa0] sm:$0xff] %v4902
        %4935 = vst [vmem:[%s286 + $0xa8] sm:$0xff] %v4903
        %4936 = vst [vmem:[%s286 + $0xb0] sm:$0xff] %v4904
        %4937 = vst [vmem:[%s286 + $0xb8] sm:$0xff] %v4905
        %4938 = vst [vmem:[%s286 + $0xc0] sm:$0xff] %v4906
        %4939 = vst [vmem:[%s286 + $0xc8] sm:$0xff] %v4907
        %4940 = vst [vmem:[%s286 + $0xd0] sm:$0xff] %v4908
        %4941 = vst [vmem:[%s286 + $0xd8] sm:$0xff] %v4909
        %4942 = vst [vmem:[%s286 + $0xe0] sm:$0xff] %v4910
        %4943 = vst [vmem:[%s286 + $0xe8] sm:$0xff] %v4911
        %4944 = vst [vmem:[%s286 + $0xf0] sm:$0xff] %v4912
        %4945 = vst [vmem:[%s286 + $0xf8] sm:$0xff] %v4913
        %s4946 = sand.u32 %s182, 1
        %s4947 = scalar_lea.sflag [#allocation5], %s4946
        %s4948 = sand.u32 %s182, 1
        %s4949 = smul.addr %s4948, 256
        %s4950 = scalar_lea.vmem [#allocation6], %s4949
        // Predicated region
        $region53: #{tpu_custom_call.1} parent=47 // pred_check
          %p4951 = pneg %p192
        $region54: #{tpu_custom_call.1} parent=47 // pred_check_branch
          %4953 = sbr.rel (%p4951) target = $region56
        $region55: #{tpu_custom_call.1} parent=47 // pred_region
          %s4955 = ssub.s32 4096, 4096
          %4956 = vsyncadd %s4947, %s4955
          %s4957 = smul.addr %s22, 32
          %s4958 = smul.addr %s4957, 128
          %s4959 = scalar_lea.hbm %s7, %s4958
          %s4960 = sshll.u32 %s4950, 4
          %s4961 = int_to_ptr.vmem [resolvable:$true] %s4960
          %4966 = dma.vmem_to_hbm [thread:$0]  %s4961, 4096, %s4959, %s4947, 128, 128, 8
        $region56: #{tpu_custom_call.1} parent=47 // pred_fallthru
          _
      $region48: #{tpu_custom_call.1} parent=5 // pred_fallthru
        _
      %p4967 = scmp.le.s32.totalorder 2, %s17
      // Predicated region
      $region57: #{tpu_custom_call.1} parent=5 // pred_check
        %p4968 = pneg %p4967
      $region58: #{tpu_custom_call.1} parent=5 // pred_check_branch
        %4970 = sbr.rel (%p4968) target = $region60
      $region59: #{tpu_custom_call.1} parent=5 // pred_region
        %s4971 = ssub.s32 %s17, 2
        // Predicated region
        $region61: #{tpu_custom_call.1} parent=59 // pred_check
          %p4972 = pneg %p198
        $region62: #{tpu_custom_call.1} parent=59 // pred_check_branch
          %4974 = sbr.rel (%p4972) target = $region64
        $region63: #{tpu_custom_call.1} parent=59 // pred_region
          %s4975 = sand.u32 %s183, 1
          %s4976 = scalar_lea.sflag [#allocation5], %s4975
          %s4977 = sand.u32 %s183, 1
          %s4978 = smul.addr %s4977, 256
          %s4979 = scalar_lea.vmem [#allocation6], %s4978
          %4980 = dma.done %s4976, 4096
        $region64: #{tpu_custom_call.1} parent=59 // pred_fallthru
          _
      $region60: #{tpu_custom_call.1} parent=5 // pred_fallthru
        _
    $region6: #{tpu_custom_call.1} parent=1 // loop_footer
      %s21 = sadd.s32 1, %s17
    $region7: #{tpu_custom_call.1} parent=1 // loop_footer_branch
      %16 = sbr.rel target = $region3
    $region8: #{tpu_custom_call.1} parent=1 // loop_exit
      _
    %4981 = vsyncpa [#allocation4], 1
    %s4982 = scalar_lea.sflag [#allocation4], 1
    %4983 = vsyncpa %s4982, 1
    %4984 = vsyncpa [#allocation5], 1
    %s4985 = scalar_lea.sflag [#allocation5], 1
    %4986 = vsyncpa %s4985, 1

</llo_original>
